<compile_context>
chip_gen: v7x
topology: tpu7x:2x2x1
jax: 0.10.0
libtpu: 0.0.40
codegen_flags: <defaults>
</compile_context>

<pallas_src>
import jax
import jax.numpy as jnp
from jax import lax
from jax.experimental import pallas as pl
from jax.experimental.pallas import tpu as pltpu


BATCH_BLOCK = 8  # samples per grid step (one sublane quantum)


# ----------------------------- Pallas kernel ---------------------------------
def _phase_scatter_mats(lin):
    """Static 0/1 matrices that interleave s=2 polyphase outputs via the MXU.

    s_e[m, 2m] = 1, s_o[m, 2m+1] = 1, s_m1[m, 2m-1] = 1 (m >= 1, row 0 empty).
    """
    r = lax.broadcasted_iota(jnp.int32, (lin, 2 * lin), 0)
    c = lax.broadcasted_iota(jnp.int32, (lin, 2 * lin), 1)
    s_e = (c == 2 * r).astype(jnp.float32)
    s_o = (c == 2 * r + 1).astype(jnp.float32)
    s_m1 = (c == 2 * r - 1).astype(jnp.float32)
    return s_e, s_o, s_m1


def _deconv_stage(x, wd_ref, b_ref):
    """One batched DeconvModule on a (Cin*BB, L) tile.

    x      : (Cin*BB, L)              channel-major, batch-minor sublanes; length lanes
    wd_ref : (3, Cout*BB, Cin*BB)     tap-major, block-diagonal Kron(W_tap, I_BB)
    b_ref  : (Cout*BB, 1)             bias repeated per batch
    returns: ((Cin+Cout)*BB, 2L)      == torch.cat([upsample2(x), relu(convT(x))], dim=C)
    """
    f32 = jnp.float32
    lin = x.shape[1]
    s_e, s_o, s_m1 = _phase_scatter_mats(lin)

    # Per-tap channel mixing (stride-2 phase decomposition: no zero taps, no masks).
    h0 = jnp.dot(wd_ref[0], x, preferred_element_type=f32)   # tap j=0
    h1 = jnp.dot(wd_ref[1], x, preferred_element_type=f32)   # tap j=1
    h2 = jnp.dot(wd_ref[2], x, preferred_element_type=f32)   # tap j=2

    # Even outputs t=2m   : tap1 applied to x[m]
    # Odd  outputs t=2m+1 : tap0 applied to x[m+1]  +  tap2 applied to x[m]
    y = (jnp.dot(h1, s_e, preferred_element_type=f32)
         + jnp.dot(h2, s_o, preferred_element_type=f32)
         + jnp.dot(h0, s_m1, preferred_element_type=f32)
         + b_ref[...])
    y = jnp.maximum(y, 0.0)

    # Nearest x2 upsample of x, fused with the channel concat (lane scatter on MXU).
    # Channel-major layout keeps torch's cat([x, y], dim=1) == concat along sublanes.
    x_up = jnp.dot(x, s_e + s_o, preferred_element_type=f32)  # (Cin*BB, 2L)
    return jnp.concatenate([x_up, y], axis=0)                 # ((Cin+Cout)*BB, 2L)


def _curvegen_kernel(geo_ref, we_ref, be_ref, w1k_ref, b1k_ref,
                     wda_ref, bda_ref, wdb_ref, bdb_ref, wdc_ref, bdc_ref,
                     wfk_ref, bf_ref, o_ref):
    f32 = jnp.float32

    # ---- input encoder: Linear(2, 16) + ReLU (tiny; VPU) ---------------------
    g = geo_ref[...]                                  # (BB, 2)
    we = we_ref[...]                                  # (2, 16)
    h = g[:, 0:1] * we[0:1, :] + g[:, 1:2] * we[1:2, :] + be_ref[...]
    h = jnp.maximum(h, 0.0)                           # (BB, 16)

    # ---- Conv1d(1, nf, 1): Kron(w1, I_BB) expands batch->channel-major tile --
    x = jnp.dot(w1k_ref[...], h, preferred_element_type=f32) + b1k_ref[...]   # (nf*BB, 16)

    # ---- three DeconvModules --------------------------------------------------
    x = _deconv_stage(x, wda_ref, bda_ref)            # (2nf*BB, 32)
    x = _deconv_stage(x, wdb_ref, bdb_ref)            # (4nf*BB, 64)
    x = _deconv_stage(x, wdc_ref, bdc_ref)            # (8nf*BB, 128)

    # ---- Conv1d(nf*8, 1, 1) + Sigmoid -----------------------------------------
    z = jnp.dot(wfk_ref[...], x, preferred_element_type=f32) + bf_ref[...]    # (BB, 128)
    o_ref[...] = 1.0 / (1.0 + jnp.exp(-z))


# ------------------------------ wrapper ---------------------------------------
def _const_spec(arr):
    zeros = (0,) * arr.ndim
    return pl.BlockSpec(arr.shape, lambda i, _z=zeros: _z)


def _cost_estimate(n_blocks, bb, nf, l0, arrays, l_out):
    flops = 2 * (nf * bb) * bb * l0                       # Kron 1x1 conv
    cin, length = nf, l0
    for _ in range(3):
        cout = cin
        cinb, coutb = cin * bb, cout * bb
        flops += 3 * 2 * coutb * cinb * length            # tap matmuls (block-diag)
        flops += 3 * 2 * coutb * length * (2 * length)    # polyphase scatter matmuls
        flops += 2 * cinb * length * (2 * length)         # upsample scatter matmul
        cin, length = cin + cout, 2 * length
    flops += 2 * bb * (cin * bb) * length                 # final Kron 1x1 conv
    flops *= n_blocks
    bytes_accessed = (sum(int(a.size) * a.dtype.itemsize for a in arrays)
                      + n_blocks * bb * l_out * 4)
    return pl.CostEstimate(flops=int(flops), transcendentals=int(n_blocks * bb * l_out),
                           bytes_accessed=int(bytes_accessed))


def curvegen_forward(zod, idr, geo_pos, p, *, batch_block=BATCH_BLOCK):
    """Pallas implementation of Curvegen.forward.

    zod/idr are accepted for signature fidelity but are unused by the torch forward.
    Parameters `p` are in PyTorch layouts (see __main__).
    """
    del zod, idr
    f32 = jnp.float32
    n = geo_pos.shape[0]
    l0 = p["we"].shape[0]            # 16 == encoder width == deconvnet input length
    nf = p["w1"].shape[0]
    l_out = l0 * 8                   # three x2 deconv stages
    bb = batch_block
    n_pad = ((n + bb - 1) // bb) * bb

    geo = geo_pos.astype(f32)
    if n_pad != n:
        geo = jnp.pad(geo, ((0, n_pad - n), (0, 0)))

    eye = jnp.eye(bb, dtype=f32)

    we = jnp.transpose(p["we"]).astype(f32)                          # (2, 16)
    be2 = p["be"].reshape(1, l0).astype(f32)
    w1k = jnp.kron(p["w1"].reshape(nf, 1).astype(f32), eye)          # (nf*bb, bb)
    b1k = jnp.repeat(p["b1"].astype(f32), bb).reshape(-1, 1)         # (nf*bb, 1)

    def _dec_params(w, b):
        w_t = jnp.transpose(w, (2, 1, 0)).astype(f32)                # (3, Cout, Cin)
        w_bd = jnp.stack([jnp.kron(w_t[j], eye) for j in range(3)])  # (3, Cout*bb, Cin*bb)
        b_r = jnp.repeat(b.astype(f32), bb).reshape(-1, 1)           # (Cout*bb, 1)
        return w_bd, b_r

    wda_bd, bda_r = _dec_params(p["wda"], p["bda"])
    wdb_bd, bdb_r = _dec_params(p["wdb"], p["bdb"])
    wdc_bd, bdc_r = _dec_params(p["wdc"], p["bdc"])
    wfk = jnp.kron(p["wf"].reshape(1, 8 * nf).astype(f32), eye)      # (bb, 8nf*bb)
    bf2 = p["bf"].reshape(1, 1).astype(f32)

    args = (geo, we, be2, w1k, b1k, wda_bd, bda_r, wdb_bd, bdb_r, wdc_bd, bdc_r, wfk, bf2)
    n_blocks = n_pad // bb

    out = pl.pallas_call(
        _curvegen_kernel,
        out_shape=jax.ShapeDtypeStruct((n_pad, l_out), f32),
        grid=(n_blocks,),
        in_specs=[pl.BlockSpec((bb, 2), lambda i: (i, 0))]         # per-block geo rows
                 + [_const_spec(a) for a in args[1:]],             # weights: VMEM-resident
        out_specs=pl.BlockSpec((bb, l_out), lambda i: (i, 0)),     # (8, 128) unmasked store
        compiler_params=pltpu.CompilerParams(
            dimension_semantics=("parallel",)),
        cost_estimate=_cost_estimate(n_blocks, bb, nf, l0, args, l_out),
    )(*args)
    return out[:n]


# --------------------------- Pure-JAX reference --------------------------------
def _ref_convtranspose1d(x, w, b, k, s, p, op):
    n, cin, lin = x.shape
    cout = w.shape[1]
    l_out = (lin - 1) * s - 2 * p + k + op
    full = jnp.zeros((n, cout, (lin - 1) * s + k + op), jnp.float32)
    for i in range(lin):
        contrib = jnp.einsum('nc,cok->nok', x[:, :, i], w)
        full = full.at[:, :, i * s:i * s + k].add(contrib)
    return full[:, :, p:p + l_out] + b[None, :, None]


def _reference_forward(zod, idr, geo_pos, p):
    del zod, idr
    h = jnp.maximum(geo_pos @ p["we"].T + p["be"][None, :], 0.0)           # (N, 16)
    x = h[:, None, :] * p["w1"][None, :, 0, :] + p["b1"][None, :, None]    # (N, nf, 16)
    for wname, bname in (("wda", "bda"), ("wdb", "bdb"), ("wdc", "bdc")):
        y = jnp.maximum(_ref_convtranspose1d(x, p[wname], p[bname], 3, 2, 1, 1), 0.0)
        lin, l_out = x.shape[2], y.shape[2]
        idx = (jnp.arange(l_out) * lin) // l_out                           # torch nearest
        x = jnp.concatenate([x[:, :, idx], y], axis=1)
    z = jnp.einsum('ncl,c->nl', x, p["wf"][0, :, 0]) + p["bf"][0]
    return jax.nn.sigmoid(z)


# ---------------------------------- main ---------------------------------------
if __name__ == "__main__":
    nf, n = 4, 2
    f32 = jnp.float32
    key = jax.random.PRNGKey(0)
    ks = jax.random.split(key, 12)

    zod = jax.random.normal(ks[0], (n, 8), f32)        # unused by forward
    idr = jax.random.normal(ks[1], (n, 29), f32)       # unused by forward
    geo_pos = jax.random.normal(ks[2], (n, 2), f32)

    params = {
        "we": jax.random.normal(ks[3], (16, 2), f32) * 0.5,          # Linear(2,16).weight
        "be": jnp.full((16,), 0.01, f32),                            # Linear(2,16).bias
        "w1": jax.random.normal(ks[4], (nf, 1, 1), f32) * 0.3,       # Conv1d(1,nf,1).weight
        "b1": jax.random.normal(ks[5], (nf,), f32) * 0.1,
        "wda": jax.random.normal(ks[6], (nf, nf, 3), f32) * 0.2,     # ConvT(nf,nf,3,2,1,1)
        "bda": jax.random.normal(ks[7], (nf,), f32) * 0.05,
        "wdb": jax.random.normal(ks[8], (2 * nf, 2 * nf, 3), f32) * 0.2,
        "bdb": jax.random.normal(ks[9], (2 * nf,), f32) * 0.05,
        "wdc": jax.random.normal(ks[10], (4 * nf, 4 * nf, 3), f32) * 0.15,
        "bdc": jnp.zeros((4 * nf,), f32),
        "wf": jax.random.normal(ks[11], (1, 8 * nf, 1), f32) * 0.2,  # Conv1d(8nf,1,1).weight
        "bf": jnp.full((1,), 0.05, f32),
    }

    out = curvegen_forward(zod, idr, geo_pos, params)
    out = jax.block_until_ready(out)

    ref = _reference_forward(zod, idr, geo_pos, params)
    assert out.shape == (n, 128), out.shape
    err = float(jnp.max(jnp.abs(out - ref)))
    assert jnp.allclose(out, ref, atol=1e-3, rtol=1e-3), err

    print("KERNEL_OK")
</pallas_src>

<mosaic_0001>
module attributes {stable_mosaic.version = 11 : i64} {
  func.func @_curvegen_kernel(%arg0: i32, %arg1: memref<8x2xf32, #tpu.memory_space<vmem>>, %arg2: memref<2x16xf32, #tpu.memory_space<vmem>>, %arg3: memref<1x16xf32, #tpu.memory_space<vmem>>, %arg4: memref<32x8xf32, #tpu.memory_space<vmem>>, %arg5: memref<32x1xf32, #tpu.memory_space<vmem>>, %arg6: memref<3x32x32xf32, #tpu.memory_space<vmem>>, %arg7: memref<32x1xf32, #tpu.memory_space<vmem>>, %arg8: memref<3x64x64xf32, #tpu.memory_space<vmem>>, %arg9: memref<64x1xf32, #tpu.memory_space<vmem>>, %arg10: memref<3x128x128xf32, #tpu.memory_space<vmem>>, %arg11: memref<128x1xf32, #tpu.memory_space<vmem>>, %arg12: memref<8x256xf32, #tpu.memory_space<vmem>>, %arg13: memref<1x1xf32, #tpu.memory_space<vmem>>, %arg14: memref<8x128xf32, #tpu.memory_space<vmem>>) attributes {dimension_semantics = [#tpu.dimension_semantics<parallel>], iteration_bounds = array<i64: 1>, scalar_prefetch = 0 : i64, scratch_operands = 0 : i64, tpu.core_type = #tpu.core_type<tc>, window_params = [{transform_indices = @transform_0, window_bounds = array<i64: 8, 2>}, {pipeline_mode = #tpu.pipeline_mode<synchronous>, transform_indices = @transform_1, window_bounds = array<i64: 2, 16>}, {pipeline_mode = #tpu.pipeline_mode<synchronous>, transform_indices = @transform_2, window_bounds = array<i64: 1, 16>}, {pipeline_mode = #tpu.pipeline_mode<synchronous>, transform_indices = @transform_3, window_bounds = array<i64: 32, 8>}, {pipeline_mode = #tpu.pipeline_mode<synchronous>, transform_indices = @transform_4, window_bounds = array<i64: 32, 1>}, {pipeline_mode = #tpu.pipeline_mode<synchronous>, transform_indices = @transform_5, window_bounds = array<i64: 3, 32, 32>}, {pipeline_mode = #tpu.pipeline_mode<synchronous>, transform_indices = @transform_6, window_bounds = array<i64: 32, 1>}, {pipeline_mode = #tpu.pipeline_mode<synchronous>, transform_indices = @transform_7, window_bounds = array<i64: 3, 64, 64>}, {pipeline_mode = #tpu.pipeline_mode<synchronous>, transform_indices = @transform_8, window_bounds = array<i64: 64, 1>}, {pipeline_mode = #tpu.pipeline_mode<synchronous>, transform_indices = @transform_9, window_bounds = array<i64: 3, 128, 128>}, {pipeline_mode = #tpu.pipeline_mode<synchronous>, transform_indices = @transform_10, window_bounds = array<i64: 128, 1>}, {pipeline_mode = #tpu.pipeline_mode<synchronous>, transform_indices = @transform_11, window_bounds = array<i64: 8, 256>}, {pipeline_mode = #tpu.pipeline_mode<synchronous>, transform_indices = @transform_12, window_bounds = array<i64: 1, 1>}, {transform_indices = @transform_13, window_bounds = array<i64: 8, 128>}]} {
    %c0 = arith.constant 0 : index
    %c0_0 = arith.constant 0 : index
    %0 = vector.load %arg1[%c0, %c0_0] : memref<8x2xf32, #tpu.memory_space<vmem>>, vector<8x2xf32>
    %c0_1 = arith.constant 0 : index
    %c0_2 = arith.constant 0 : index
    %1 = vector.load %arg2[%c0_1, %c0_2] : memref<2x16xf32, #tpu.memory_space<vmem>>, vector<2x16xf32>
    %2 = vector.extract_strided_slice %0 {offsets = [0, 0], sizes = [8, 1], strides = [1, 1]} : vector<8x2xf32> to vector<8x1xf32>
    %3 = vector.extract_strided_slice %1 {offsets = [0, 0], sizes = [1, 16], strides = [1, 1]} : vector<2x16xf32> to vector<1x16xf32>
    %4 = vector.broadcast %2 : vector<8x1xf32> to vector<8x16xf32>
    %5 = vector.broadcast %3 : vector<1x16xf32> to vector<8x16xf32>
    %6 = arith.mulf %4, %5 : vector<8x16xf32>
    %7 = vector.extract_strided_slice %0 {offsets = [0, 1], sizes = [8, 1], strides = [1, 1]} : vector<8x2xf32> to vector<8x1xf32>
    %8 = vector.extract_strided_slice %1 {offsets = [1, 0], sizes = [1, 16], strides = [1, 1]} : vector<2x16xf32> to vector<1x16xf32>
    %9 = vector.broadcast %7 : vector<8x1xf32> to vector<8x16xf32>
    %10 = vector.broadcast %8 : vector<1x16xf32> to vector<8x16xf32>
    %11 = arith.mulf %9, %10 : vector<8x16xf32>
    %12 = arith.addf %6, %11 : vector<8x16xf32>
    %c0_3 = arith.constant 0 : index
    %c0_4 = arith.constant 0 : index
    %13 = vector.load %arg3[%c0_3, %c0_4] : memref<1x16xf32, #tpu.memory_space<vmem>>, vector<1x16xf32>
    %14 = vector.broadcast %13 : vector<1x16xf32> to vector<8x16xf32>
    %15 = arith.addf %12, %14 : vector<8x16xf32>
    %cst = arith.constant 0.000000e+00 : f32
    %16 = vector.broadcast %cst : f32 to vector<8x16xf32>
    %17 = arith.maximumf %15, %16 : vector<8x16xf32>
    %c0_5 = arith.constant 0 : index
    %c0_6 = arith.constant 0 : index
    %18 = vector.load %arg4[%c0_5, %c0_6] : memref<32x8xf32, #tpu.memory_space<vmem>>, vector<32x8xf32>
    %cst_7 = arith.constant dense<0.000000e+00> : vector<32x16xf32>
    %19 = tpu.matmul %18, %17, %cst_7 {dimension_numbers = #tpu.dot_dimension_numbers<[1], [0], [0], [1], [0, 0, 1, 1], [], []>} : vector<32x8xf32>, vector<8x16xf32>, vector<32x16xf32> -> vector<32x16xf32>
    %c0_8 = arith.constant 0 : index
    %c0_9 = arith.constant 0 : index
    %20 = vector.load %arg5[%c0_8, %c0_9] : memref<32x1xf32, #tpu.memory_space<vmem>>, vector<32x1xf32>
    %21 = vector.broadcast %20 : vector<32x1xf32> to vector<32x16xf32>
    %22 = arith.addf %19, %21 : vector<32x16xf32>
    %23 = tpu.iota {dimensions = array<i32: 0>} : vector<16x32xi32>
    %24 = tpu.iota {dimensions = array<i32: 1>} : vector<16x32xi32>
    %c2_i32 = arith.constant 2 : i32
    %25 = vector.broadcast %c2_i32 : i32 to vector<16x32xi32>
    %26 = arith.muli %25, %23 : vector<16x32xi32>
    %27 = arith.cmpi eq, %24, %26 : vector<16x32xi32>
    %28 = arith.extui %27 : vector<16x32xi1> to vector<16x32xi32>
    %29 = arith.sitofp %28 : vector<16x32xi32> to vector<16x32xf32>
    %c2_i32_10 = arith.constant 2 : i32
    %30 = vector.broadcast %c2_i32_10 : i32 to vector<16x32xi32>
    %31 = arith.muli %30, %23 : vector<16x32xi32>
    %c1_i32 = arith.constant 1 : i32
    %32 = vector.broadcast %c1_i32 : i32 to vector<16x32xi32>
    %33 = arith.addi %31, %32 : vector<16x32xi32>
    %34 = arith.cmpi eq, %24, %33 : vector<16x32xi32>
    %35 = arith.extui %34 : vector<16x32xi1> to vector<16x32xi32>
    %36 = arith.sitofp %35 : vector<16x32xi32> to vector<16x32xf32>
    %c2_i32_11 = arith.constant 2 : i32
    %37 = vector.broadcast %c2_i32_11 : i32 to vector<16x32xi32>
    %38 = arith.muli %37, %23 : vector<16x32xi32>
    %c1_i32_12 = arith.constant 1 : i32
    %39 = vector.broadcast %c1_i32_12 : i32 to vector<16x32xi32>
    %40 = arith.subi %38, %39 : vector<16x32xi32>
    %41 = arith.cmpi eq, %24, %40 : vector<16x32xi32>
    %42 = arith.extui %41 : vector<16x32xi1> to vector<16x32xi32>
    %43 = arith.sitofp %42 : vector<16x32xi32> to vector<16x32xf32>
    %c0_13 = arith.constant 0 : index
    %c0_14 = arith.constant 0 : index
    %c0_15 = arith.constant 0 : index
    %44 = vector.load %arg6[%c0_13, %c0_14, %c0_15] : memref<3x32x32xf32, #tpu.memory_space<vmem>>, vector<1x32x32xf32>
    %45 = vector.shape_cast %44 : vector<1x32x32xf32> to vector<32x32xf32>
    %cst_16 = arith.constant dense<0.000000e+00> : vector<32x16xf32>
    %46 = tpu.matmul %45, %22, %cst_16 {dimension_numbers = #tpu.dot_dimension_numbers<[1], [0], [0], [1], [0, 0, 1, 1], [], []>} : vector<32x32xf32>, vector<32x16xf32>, vector<32x16xf32> -> vector<32x16xf32>
    %c1 = arith.constant 1 : index
    %c0_17 = arith.constant 0 : index
    %c0_18 = arith.constant 0 : index
    %47 = vector.load %arg6[%c1, %c0_17, %c0_18] : memref<3x32x32xf32, #tpu.memory_space<vmem>>, vector<1x32x32xf32>
    %48 = vector.shape_cast %47 : vector<1x32x32xf32> to vector<32x32xf32>
    %cst_19 = arith.constant dense<0.000000e+00> : vector<32x16xf32>
    %49 = tpu.matmul %48, %22, %cst_19 {dimension_numbers = #tpu.dot_dimension_numbers<[1], [0], [0], [1], [0, 0, 1, 1], [], []>} : vector<32x32xf32>, vector<32x16xf32>, vector<32x16xf32> -> vector<32x16xf32>
    %c2 = arith.constant 2 : index
    %c0_20 = arith.constant 0 : index
    %c0_21 = arith.constant 0 : index
    %50 = vector.load %arg6[%c2, %c0_20, %c0_21] : memref<3x32x32xf32, #tpu.memory_space<vmem>>, vector<1x32x32xf32>
    %51 = vector.shape_cast %50 : vector<1x32x32xf32> to vector<32x32xf32>
    %cst_22 = arith.constant dense<0.000000e+00> : vector<32x16xf32>
    %52 = tpu.matmul %51, %22, %cst_22 {dimension_numbers = #tpu.dot_dimension_numbers<[1], [0], [0], [1], [0, 0, 1, 1], [], []>} : vector<32x32xf32>, vector<32x16xf32>, vector<32x16xf32> -> vector<32x16xf32>
    %cst_23 = arith.constant dense<0.000000e+00> : vector<32x32xf32>
    %53 = tpu.matmul %49, %29, %cst_23 {dimension_numbers = #tpu.dot_dimension_numbers<[1], [0], [0], [1], [0, 0, 1, 1], [], []>} : vector<32x16xf32>, vector<16x32xf32>, vector<32x32xf32> -> vector<32x32xf32>
    %cst_24 = arith.constant dense<0.000000e+00> : vector<32x32xf32>
    %54 = tpu.matmul %52, %36, %cst_24 {dimension_numbers = #tpu.dot_dimension_numbers<[1], [0], [0], [1], [0, 0, 1, 1], [], []>} : vector<32x16xf32>, vector<16x32xf32>, vector<32x32xf32> -> vector<32x32xf32>
    %55 = arith.addf %53, %54 : vector<32x32xf32>
    %cst_25 = arith.constant dense<0.000000e+00> : vector<32x32xf32>
    %56 = tpu.matmul %46, %43, %cst_25 {dimension_numbers = #tpu.dot_dimension_numbers<[1], [0], [0], [1], [0, 0, 1, 1], [], []>} : vector<32x16xf32>, vector<16x32xf32>, vector<32x32xf32> -> vector<32x32xf32>
    %57 = arith.addf %55, %56 : vector<32x32xf32>
    %c0_26 = arith.constant 0 : index
    %c0_27 = arith.constant 0 : index
    %58 = vector.load %arg7[%c0_26, %c0_27] : memref<32x1xf32, #tpu.memory_space<vmem>>, vector<32x1xf32>
    %59 = vector.broadcast %58 : vector<32x1xf32> to vector<32x32xf32>
    %60 = arith.addf %57, %59 : vector<32x32xf32>
    %cst_28 = arith.constant 0.000000e+00 : f32
    %61 = vector.broadcast %cst_28 : f32 to vector<32x32xf32>
    %62 = arith.maximumf %60, %61 : vector<32x32xf32>
    %63 = arith.addf %29, %36 : vector<16x32xf32>
    %cst_29 = arith.constant dense<0.000000e+00> : vector<32x32xf32>
    %64 = tpu.matmul %22, %63, %cst_29 {dimension_numbers = #tpu.dot_dimension_numbers<[1], [0], [0], [1], [0, 0, 1, 1], [], []>} : vector<32x16xf32>, vector<16x32xf32>, vector<32x32xf32> -> vector<32x32xf32>
    %65 = tpu.concatenate %64, %62 in 0 : vector<32x32xf32>, vector<32x32xf32> -> vector<64x32xf32>
    %66 = tpu.iota {dimensions = array<i32: 0>} : vector<32x64xi32>
    %67 = tpu.iota {dimensions = array<i32: 1>} : vector<32x64xi32>
    %c2_i32_30 = arith.constant 2 : i32
    %68 = vector.broadcast %c2_i32_30 : i32 to vector<32x64xi32>
    %69 = arith.muli %68, %66 : vector<32x64xi32>
    %70 = arith.cmpi eq, %67, %69 : vector<32x64xi32>
    %71 = arith.extui %70 : vector<32x64xi1> to vector<32x64xi32>
    %72 = arith.sitofp %71 : vector<32x64xi32> to vector<32x64xf32>
    %c2_i32_31 = arith.constant 2 : i32
    %73 = vector.broadcast %c2_i32_31 : i32 to vector<32x64xi32>
    %74 = arith.muli %73, %66 : vector<32x64xi32>
    %c1_i32_32 = arith.constant 1 : i32
    %75 = vector.broadcast %c1_i32_32 : i32 to vector<32x64xi32>
    %76 = arith.addi %74, %75 : vector<32x64xi32>
    %77 = arith.cmpi eq, %67, %76 : vector<32x64xi32>
    %78 = arith.extui %77 : vector<32x64xi1> to vector<32x64xi32>
    %79 = arith.sitofp %78 : vector<32x64xi32> to vector<32x64xf32>
    %c2_i32_33 = arith.constant 2 : i32
    %80 = vector.broadcast %c2_i32_33 : i32 to vector<32x64xi32>
    %81 = arith.muli %80, %66 : vector<32x64xi32>
    %c1_i32_34 = arith.constant 1 : i32
    %82 = vector.broadcast %c1_i32_34 : i32 to vector<32x64xi32>
    %83 = arith.subi %81, %82 : vector<32x64xi32>
    %84 = arith.cmpi eq, %67, %83 : vector<32x64xi32>
    %85 = arith.extui %84 : vector<32x64xi1> to vector<32x64xi32>
    %86 = arith.sitofp %85 : vector<32x64xi32> to vector<32x64xf32>
    %c0_35 = arith.constant 0 : index
    %c0_36 = arith.constant 0 : index
    %c0_37 = arith.constant 0 : index
    %87 = vector.load %arg8[%c0_35, %c0_36, %c0_37] : memref<3x64x64xf32, #tpu.memory_space<vmem>>, vector<1x64x64xf32>
    %88 = vector.shape_cast %87 : vector<1x64x64xf32> to vector<64x64xf32>
    %cst_38 = arith.constant dense<0.000000e+00> : vector<64x32xf32>
    %89 = tpu.matmul %88, %65, %cst_38 {dimension_numbers = #tpu.dot_dimension_numbers<[1], [0], [0], [1], [0, 0, 1, 1], [], []>} : vector<64x64xf32>, vector<64x32xf32>, vector<64x32xf32> -> vector<64x32xf32>
    %c1_39 = arith.constant 1 : index
    %c0_40 = arith.constant 0 : index
    %c0_41 = arith.constant 0 : index
    %90 = vector.load %arg8[%c1_39, %c0_40, %c0_41] : memref<3x64x64xf32, #tpu.memory_space<vmem>>, vector<1x64x64xf32>
    %91 = vector.shape_cast %90 : vector<1x64x64xf32> to vector<64x64xf32>
    %cst_42 = arith.constant dense<0.000000e+00> : vector<64x32xf32>
    %92 = tpu.matmul %91, %65, %cst_42 {dimension_numbers = #tpu.dot_dimension_numbers<[1], [0], [0], [1], [0, 0, 1, 1], [], []>} : vector<64x64xf32>, vector<64x32xf32>, vector<64x32xf32> -> vector<64x32xf32>
    %c2_43 = arith.constant 2 : index
    %c0_44 = arith.constant 0 : index
    %c0_45 = arith.constant 0 : index
    %93 = vector.load %arg8[%c2_43, %c0_44, %c0_45] : memref<3x64x64xf32, #tpu.memory_space<vmem>>, vector<1x64x64xf32>
    %94 = vector.shape_cast %93 : vector<1x64x64xf32> to vector<64x64xf32>
    %cst_46 = arith.constant dense<0.000000e+00> : vector<64x32xf32>
    %95 = tpu.matmul %94, %65, %cst_46 {dimension_numbers = #tpu.dot_dimension_numbers<[1], [0], [0], [1], [0, 0, 1, 1], [], []>} : vector<64x64xf32>, vector<64x32xf32>, vector<64x32xf32> -> vector<64x32xf32>
    %cst_47 = arith.constant dense<0.000000e+00> : vector<64x64xf32>
    %96 = tpu.matmul %92, %72, %cst_47 {dimension_numbers = #tpu.dot_dimension_numbers<[1], [0], [0], [1], [0, 0, 1, 1], [], []>} : vector<64x32xf32>, vector<32x64xf32>, vector<64x64xf32> -> vector<64x64xf32>
    %cst_48 = arith.constant dense<0.000000e+00> : vector<64x64xf32>
    %97 = tpu.matmul %95, %79, %cst_48 {dimension_numbers = #tpu.dot_dimension_numbers<[1], [0], [0], [1], [0, 0, 1, 1], [], []>} : vector<64x32xf32>, vector<32x64xf32>, vector<64x64xf32> -> vector<64x64xf32>
    %98 = arith.addf %96, %97 : vector<64x64xf32>
    %cst_49 = arith.constant dense<0.000000e+00> : vector<64x64xf32>
    %99 = tpu.matmul %89, %86, %cst_49 {dimension_numbers = #tpu.dot_dimension_numbers<[1], [0], [0], [1], [0, 0, 1, 1], [], []>} : vector<64x32xf32>, vector<32x64xf32>, vector<64x64xf32> -> vector<64x64xf32>
    %100 = arith.addf %98, %99 : vector<64x64xf32>
    %c0_50 = arith.constant 0 : index
    %c0_51 = arith.constant 0 : index
    %101 = vector.load %arg9[%c0_50, %c0_51] : memref<64x1xf32, #tpu.memory_space<vmem>>, vector<64x1xf32>
    %102 = vector.broadcast %101 : vector<64x1xf32> to vector<64x64xf32>
    %103 = arith.addf %100, %102 : vector<64x64xf32>
    %cst_52 = arith.constant 0.000000e+00 : f32
    %104 = vector.broadcast %cst_52 : f32 to vector<64x64xf32>
    %105 = arith.maximumf %103, %104 : vector<64x64xf32>
    %106 = arith.addf %72, %79 : vector<32x64xf32>
    %cst_53 = arith.constant dense<0.000000e+00> : vector<64x64xf32>
    %107 = tpu.matmul %65, %106, %cst_53 {dimension_numbers = #tpu.dot_dimension_numbers<[1], [0], [0], [1], [0, 0, 1, 1], [], []>} : vector<64x32xf32>, vector<32x64xf32>, vector<64x64xf32> -> vector<64x64xf32>
    %108 = tpu.concatenate %107, %105 in 0 : vector<64x64xf32>, vector<64x64xf32> -> vector<128x64xf32>
    %109 = tpu.iota {dimensions = array<i32: 0>} : vector<64x128xi32>
    %110 = tpu.iota {dimensions = array<i32: 1>} : vector<64x128xi32>
    %c2_i32_54 = arith.constant 2 : i32
    %111 = vector.broadcast %c2_i32_54 : i32 to vector<64x128xi32>
    %112 = arith.muli %111, %109 : vector<64x128xi32>
    %113 = arith.cmpi eq, %110, %112 : vector<64x128xi32>
    %114 = arith.extui %113 : vector<64x128xi1> to vector<64x128xi32>
    %115 = arith.sitofp %114 : vector<64x128xi32> to vector<64x128xf32>
    %c2_i32_55 = arith.constant 2 : i32
    %116 = vector.broadcast %c2_i32_55 : i32 to vector<64x128xi32>
    %117 = arith.muli %116, %109 : vector<64x128xi32>
    %c1_i32_56 = arith.constant 1 : i32
    %118 = vector.broadcast %c1_i32_56 : i32 to vector<64x128xi32>
    %119 = arith.addi %117, %118 : vector<64x128xi32>
    %120 = arith.cmpi eq, %110, %119 : vector<64x128xi32>
    %121 = arith.extui %120 : vector<64x128xi1> to vector<64x128xi32>
    %122 = arith.sitofp %121 : vector<64x128xi32> to vector<64x128xf32>
    %c2_i32_57 = arith.constant 2 : i32
    %123 = vector.broadcast %c2_i32_57 : i32 to vector<64x128xi32>
    %124 = arith.muli %123, %109 : vector<64x128xi32>
    %c1_i32_58 = arith.constant 1 : i32
    %125 = vector.broadcast %c1_i32_58 : i32 to vector<64x128xi32>
    %126 = arith.subi %124, %125 : vector<64x128xi32>
    %127 = arith.cmpi eq, %110, %126 : vector<64x128xi32>
    %128 = arith.extui %127 : vector<64x128xi1> to vector<64x128xi32>
    %129 = arith.sitofp %128 : vector<64x128xi32> to vector<64x128xf32>
    %c0_59 = arith.constant 0 : index
    %c0_60 = arith.constant 0 : index
    %c0_61 = arith.constant 0 : index
    %130 = vector.load %arg10[%c0_59, %c0_60, %c0_61] : memref<3x128x128xf32, #tpu.memory_space<vmem>>, vector<1x128x128xf32>
    %131 = vector.shape_cast %130 : vector<1x128x128xf32> to vector<128x128xf32>
    %cst_62 = arith.constant dense<0.000000e+00> : vector<128x64xf32>
    %132 = tpu.matmul %131, %108, %cst_62 {dimension_numbers = #tpu.dot_dimension_numbers<[1], [0], [0], [1], [0, 0, 1, 1], [], []>} : vector<128x128xf32>, vector<128x64xf32>, vector<128x64xf32> -> vector<128x64xf32>
    %c1_63 = arith.constant 1 : index
    %c0_64 = arith.constant 0 : index
    %c0_65 = arith.constant 0 : index
    %133 = vector.load %arg10[%c1_63, %c0_64, %c0_65] : memref<3x128x128xf32, #tpu.memory_space<vmem>>, vector<1x128x128xf32>
    %134 = vector.shape_cast %133 : vector<1x128x128xf32> to vector<128x128xf32>
    %cst_66 = arith.constant dense<0.000000e+00> : vector<128x64xf32>
    %135 = tpu.matmul %134, %108, %cst_66 {dimension_numbers = #tpu.dot_dimension_numbers<[1], [0], [0], [1], [0, 0, 1, 1], [], []>} : vector<128x128xf32>, vector<128x64xf32>, vector<128x64xf32> -> vector<128x64xf32>
    %c2_67 = arith.constant 2 : index
    %c0_68 = arith.constant 0 : index
    %c0_69 = arith.constant 0 : index
    %136 = vector.load %arg10[%c2_67, %c0_68, %c0_69] : memref<3x128x128xf32, #tpu.memory_space<vmem>>, vector<1x128x128xf32>
    %137 = vector.shape_cast %136 : vector<1x128x128xf32> to vector<128x128xf32>
    %cst_70 = arith.constant dense<0.000000e+00> : vector<128x64xf32>
    %138 = tpu.matmul %137, %108, %cst_70 {dimension_numbers = #tpu.dot_dimension_numbers<[1], [0], [0], [1], [0, 0, 1, 1], [], []>} : vector<128x128xf32>, vector<128x64xf32>, vector<128x64xf32> -> vector<128x64xf32>
    %cst_71 = arith.constant dense<0.000000e+00> : vector<128x128xf32>
    %139 = tpu.matmul %135, %115, %cst_71 {dimension_numbers = #tpu.dot_dimension_numbers<[1], [0], [0], [1], [0, 0, 1, 1], [], []>} : vector<128x64xf32>, vector<64x128xf32>, vector<128x128xf32> -> vector<128x128xf32>
    %cst_72 = arith.constant dense<0.000000e+00> : vector<128x128xf32>
    %140 = tpu.matmul %138, %122, %cst_72 {dimension_numbers = #tpu.dot_dimension_numbers<[1], [0], [0], [1], [0, 0, 1, 1], [], []>} : vector<128x64xf32>, vector<64x128xf32>, vector<128x128xf32> -> vector<128x128xf32>
    %141 = arith.addf %139, %140 : vector<128x128xf32>
    %cst_73 = arith.constant dense<0.000000e+00> : vector<128x128xf32>
    %142 = tpu.matmul %132, %129, %cst_73 {dimension_numbers = #tpu.dot_dimension_numbers<[1], [0], [0], [1], [0, 0, 1, 1], [], []>} : vector<128x64xf32>, vector<64x128xf32>, vector<128x128xf32> -> vector<128x128xf32>
    %143 = arith.addf %141, %142 : vector<128x128xf32>
    %c0_74 = arith.constant 0 : index
    %c0_75 = arith.constant 0 : index
    %144 = vector.load %arg11[%c0_74, %c0_75] : memref<128x1xf32, #tpu.memory_space<vmem>>, vector<128x1xf32>
    %145 = vector.broadcast %144 : vector<128x1xf32> to vector<128x128xf32>
    %146 = arith.addf %143, %145 : vector<128x128xf32>
    %cst_76 = arith.constant 0.000000e+00 : f32
    %147 = vector.broadcast %cst_76 : f32 to vector<128x128xf32>
    %148 = arith.maximumf %146, %147 : vector<128x128xf32>
    %149 = arith.addf %115, %122 : vector<64x128xf32>
    %cst_77 = arith.constant dense<0.000000e+00> : vector<128x128xf32>
    %150 = tpu.matmul %108, %149, %cst_77 {dimension_numbers = #tpu.dot_dimension_numbers<[1], [0], [0], [1], [0, 0, 1, 1], [], []>} : vector<128x64xf32>, vector<64x128xf32>, vector<128x128xf32> -> vector<128x128xf32>
    %151 = tpu.concatenate %150, %148 in 0 : vector<128x128xf32>, vector<128x128xf32> -> vector<256x128xf32>
    %c0_78 = arith.constant 0 : index
    %c0_79 = arith.constant 0 : index
    %152 = vector.load %arg12[%c0_78, %c0_79] : memref<8x256xf32, #tpu.memory_space<vmem>>, vector<8x256xf32>
    %cst_80 = arith.constant dense<0.000000e+00> : vector<8x128xf32>
    %153 = tpu.matmul %152, %151, %cst_80 {dimension_numbers = #tpu.dot_dimension_numbers<[1], [0], [0], [1], [0, 0, 1, 1], [], []>} : vector<8x256xf32>, vector<256x128xf32>, vector<8x128xf32> -> vector<8x128xf32>
    %c0_81 = arith.constant 0 : index
    %c0_82 = arith.constant 0 : index
    %154 = vector.load %arg13[%c0_81, %c0_82] : memref<1x1xf32, #tpu.memory_space<vmem>>, vector<1x1xf32>
    %155 = vector.broadcast %154 : vector<1x1xf32> to vector<8x128xf32>
    %156 = arith.addf %153, %155 : vector<8x128xf32>
    %cst_83 = arith.constant 0.000000e+00 : f32
    %157 = vector.broadcast %cst_83 : f32 to vector<8x128xf32>
    %158 = arith.subf %157, %156 : vector<8x128xf32>
    %159 = math.exp %158 : vector<8x128xf32>
    %cst_84 = arith.constant 1.000000e+00 : f32
    %160 = vector.broadcast %cst_84 : f32 to vector<8x128xf32>
    %161 = arith.addf %160, %159 : vector<8x128xf32>
    %cst_85 = arith.constant 1.000000e+00 : f32
    %162 = vector.broadcast %cst_85 : f32 to vector<8x128xf32>
    %163 = arith.divf %162, %161 : vector<8x128xf32>
    %c0_86 = arith.constant 0 : index
    %c0_87 = arith.constant 0 : index
    %164 = vector.load %arg14[%c0_86, %c0_87] : memref<8x128xf32, #tpu.memory_space<vmem>>, vector<8x128xf32>
    tpu.vector_store %arg14[%c0_86, %c0_87], %163 {strides = array<i32>} : memref<8x128xf32, #tpu.memory_space<vmem>>, vector<8x128xf32>,
    return
  }
  func.func @transform_0(%arg0: i32) -> (i32, i32) {
    %c0_i32 = arith.constant 0 : i32
    %c0_i32_0 = arith.constant 0 : i32
    return %arg0, %c0_i32 : i32, i32
  }
  func.func @transform_1(%arg0: i32) -> (i32, i32) {
    %c0_i32 = arith.constant 0 : i32
    %c0_i32_0 = arith.constant 0 : i32
    %c0_i32_1 = arith.constant 0 : i32
    return %c0_i32, %c0_i32_0 : i32, i32
  }
  func.func @transform_2(%arg0: i32) -> (i32, i32) {
    %c0_i32 = arith.constant 0 : i32
    %c0_i32_0 = arith.constant 0 : i32
    %c0_i32_1 = arith.constant 0 : i32
    return %c0_i32, %c0_i32_0 : i32, i32
  }
  func.func @transform_3(%arg0: i32) -> (i32, i32) {
    %c0_i32 = arith.constant 0 : i32
    %c0_i32_0 = arith.constant 0 : i32
    %c0_i32_1 = arith.constant 0 : i32
    return %c0_i32, %c0_i32_0 : i32, i32
  }
  func.func @transform_4(%arg0: i32) -> (i32, i32) {
    %c0_i32 = arith.constant 0 : i32
    %c0_i32_0 = arith.constant 0 : i32
    %c0_i32_1 = arith.constant 0 : i32
    return %c0_i32, %c0_i32_0 : i32, i32
  }
  func.func @transform_5(%arg0: i32) -> (i32, i32, i32) {
    %c0_i32 = arith.constant 0 : i32
    %c0_i32_0 = arith.constant 0 : i32
    %c0_i32_1 = arith.constant 0 : i32
    %c0_i32_2 = arith.constant 0 : i32
    return %c0_i32, %c0_i32_0, %c0_i32_1 : i32, i32, i32
  }
  func.func @transform_6(%arg0: i32) -> (i32, i32) {
    %c0_i32 = arith.constant 0 : i32
    %c0_i32_0 = arith.constant 0 : i32
    %c0_i32_1 = arith.constant 0 : i32
    return %c0_i32, %c0_i32_0 : i32, i32
  }
  func.func @transform_7(%arg0: i32) -> (i32, i32, i32) {
    %c0_i32 = arith.constant 0 : i32
    %c0_i32_0 = arith.constant 0 : i32
    %c0_i32_1 = arith.constant 0 : i32
    %c0_i32_2 = arith.constant 0 : i32
    return %c0_i32, %c0_i32_0, %c0_i32_1 : i32, i32, i32
  }
  func.func @transform_8(%arg0: i32) -> (i32, i32) {
    %c0_i32 = arith.constant 0 : i32
    %c0_i32_0 = arith.constant 0 : i32
    %c0_i32_1 = arith.constant 0 : i32
    return %c0_i32, %c0_i32_0 : i32, i32
  }
  func.func @transform_9(%arg0: i32) -> (i32, i32, i32) {
    %c0_i32 = arith.constant 0 : i32
    %c0_i32_0 = arith.constant 0 : i32
    %c0_i32_1 = arith.constant 0 : i32
    %c0_i32_2 = arith.constant 0 : i32
    return %c0_i32, %c0_i32_0, %c0_i32_1 : i32, i32, i32
  }
  func.func @transform_10(%arg0: i32) -> (i32, i32) {
    %c0_i32 = arith.constant 0 : i32
    %c0_i32_0 = arith.constant 0 : i32
    %c0_i32_1 = arith.constant 0 : i32
    return %c0_i32, %c0_i32_0 : i32, i32
  }
  func.func @transform_11(%arg0: i32) -> (i32, i32) {
    %c0_i32 = arith.constant 0 : i32
    %c0_i32_0 = arith.constant 0 : i32
    %c0_i32_1 = arith.constant 0 : i32
    return %c0_i32, %c0_i32_0 : i32, i32
  }
  func.func @transform_12(%arg0: i32) -> (i32, i32) {
    %c0_i32 = arith.constant 0 : i32
    %c0_i32_0 = arith.constant 0 : i32
    %c0_i32_1 = arith.constant 0 : i32
    return %c0_i32, %c0_i32_0 : i32, i32
  }
  func.func @transform_13(%arg0: i32) -> (i32, i32) {
    %c0_i32 = arith.constant 0 : i32
    %c0_i32_0 = arith.constant 0 : i32
    return %arg0, %c0_i32 : i32, i32
  }
}

</mosaic_0001>

<llo_original>
// kernel: tpu_custom_call.1
$region0: #{tpu_custom_call.1}
  #allocation0 [shape = 'u32[]', space=smem, size = 0x4, offset = 0x4, fixed_abs, tag = 'smem constant byte address 0x4 - core index']
  #allocation1 [shape = 'u32[144,128]{1,0:T(1,128)}', space=vmem, size = 0x12000, scoped, tag = 'internal scratch']
  #allocation2 [shape = 'f32[1,1]{1,0:T(1,128)S(1)}', space=vmem, size = 0x200, scoped, tag = 'scoped memory for tpu_custom_call.1']
  %s0 = inlined_call_operand.vmem [shape: f32[8,2], index: 0, kind: input, shape index: {}]
  %s1 = inlined_call_operand.vmem [shape: f32[2,16], index: 1, kind: input, shape index: {}]
  %s2 = inlined_call_operand.vmem [shape: f32[1,16], index: 2, kind: input, shape index: {}]
  %s3 = inlined_call_operand.vmem [shape: f32[32,8], index: 3, kind: input, shape index: {}]
  %s4 = inlined_call_operand.vmem [shape: f32[32,1], index: 4, kind: input, shape index: {}]
  %s5 = inlined_call_operand.vmem [shape: f32[3,32,32], index: 5, kind: input, shape index: {}]
  %s6 = inlined_call_operand.vmem [shape: f32[32,1], index: 6, kind: input, shape index: {}]
  %s7 = inlined_call_operand.vmem [shape: f32[3,64,64], index: 7, kind: input, shape index: {}]
  %s8 = inlined_call_operand.vmem [shape: f32[64,1], index: 8, kind: input, shape index: {}]
  %s9 = inlined_call_operand.hbm [shape: f32[3,128,128], index: 9, kind: input, shape index: {}]
  %s10 = inlined_call_operand.vmem [shape: f32[128,1], index: 10, kind: input, shape index: {}]
  %s11 = inlined_call_operand.vmem [shape: f32[8,256], index: 11, kind: input, shape index: {}]
  %s12 = inlined_call_operand.<no memory space> [shape: f32[1,1], index: 12, kind: input, shape index: {}]
  %s13 = inlined_call_operand.hbm [shape: f32[8,128], index: 13, kind: output, shape index: {}]
  %s14 = sld [smem:[#allocation0]]
  $region66: #{tpu_custom_call.1} parent=0
    _
  %s16 = ssub.s32 1, %s14
  %s17 = scalar_select 0, %s16, %s14
  %v18 = vstv %s12
  %19 = vst [vmem:[#allocation2] sm:$0x1] %v18
  $region1: #{tpu_custom_call.1} parent=0
    #allocation3 [shape = 'u8[196608]{0}', space=vmem, size = 0x30000, scoped, tag = 'input window, operand 9, single buffered']
    #allocation4 [shape = 's32[1]{0}', space=sflag, size = 0x4, scoped, tag = 'scoped memory for tpu_custom_call.1']
    #allocation5 [shape = 's32[1]{0}', space=sflag, size = 0x4, scoped, tag = 'scoped memory for tpu_custom_call.1']
    #allocation6 [shape = 'u8[4096]{0}', space=vmem, size = 0x1000, scoped, tag = 'output window, operand 0, single buffered']
    %20 = vsyncpa [#allocation4], 0
    %21 = vsyncpa [#allocation5], 0
    // Predicated region
    $region2: #{tpu_custom_call.1} parent=1 // pred_check
      _
    $region3: #{tpu_custom_call.1} parent=1 // pred_check_branch
      %23 = sbr.rel (0) target = $region5
    $region4: #{tpu_custom_call.1} parent=1 // pred_region
      _
    $region5: #{tpu_custom_call.1} parent=1 // pred_fallthru
      _
    // Predicated region
    $region6: #{tpu_custom_call.1} parent=1 // pred_check
      _
    $region7: #{tpu_custom_call.1} parent=1 // pred_check_branch
      %25 = sbr.rel (0) target = $region9
    $region8: #{tpu_custom_call.1} parent=1 // pred_region
      _
    $region9: #{tpu_custom_call.1} parent=1 // pred_fallthru
      _
    // Predicated region
    $region10: #{tpu_custom_call.1} parent=1 // pred_check
      _
    $region11: #{tpu_custom_call.1} parent=1 // pred_check_branch
      %27 = sbr.rel (0) target = $region13
    $region12: #{tpu_custom_call.1} parent=1 // pred_region
      _
    $region13: #{tpu_custom_call.1} parent=1 // pred_fallthru
      _
    // Predicated region
    $region14: #{tpu_custom_call.1} parent=1 // pred_check
      _
    $region15: #{tpu_custom_call.1} parent=1 // pred_check_branch
      %29 = sbr.rel (0) target = $region17
    $region16: #{tpu_custom_call.1} parent=1 // pred_region
      _
    $region17: #{tpu_custom_call.1} parent=1 // pred_fallthru
      _
    // Predicated region
    $region18: #{tpu_custom_call.1} parent=1 // pred_check
      _
    $region19: #{tpu_custom_call.1} parent=1 // pred_check_branch
      %31 = sbr.rel (0) target = $region21
    $region20: #{tpu_custom_call.1} parent=1 // pred_region
      _
    $region21: #{tpu_custom_call.1} parent=1 // pred_fallthru
      _
    // Predicated region
    $region22: #{tpu_custom_call.1} parent=1 // pred_check
      _
    $region23: #{tpu_custom_call.1} parent=1 // pred_check_branch
      %33 = sbr.rel (0) target = $region25
    $region24: #{tpu_custom_call.1} parent=1 // pred_region
      _
    $region25: #{tpu_custom_call.1} parent=1 // pred_fallthru
      _
    // Predicated region
    $region26: #{tpu_custom_call.1} parent=1 // pred_check
      _
    $region27: #{tpu_custom_call.1} parent=1 // pred_check_branch
      %35 = sbr.rel (0) target = $region29
    $region28: #{tpu_custom_call.1} parent=1 // pred_region
      _
    $region29: #{tpu_custom_call.1} parent=1 // pred_fallthru
      _
    // Predicated region
    $region30: #{tpu_custom_call.1} parent=1 // pred_check
      _
    $region31: #{tpu_custom_call.1} parent=1 // pred_check_branch
      %37 = sbr.rel (0) target = $region33
    $region32: #{tpu_custom_call.1} parent=1 // pred_region
      _
    $region33: #{tpu_custom_call.1} parent=1 // pred_fallthru
      _
    // Predicated region
    $region34: #{tpu_custom_call.1} parent=1 // pred_check
      _
    $region35: #{tpu_custom_call.1} parent=1 // pred_check_branch
      %39 = sbr.rel (0) target = $region37
    $region36: #{tpu_custom_call.1} parent=1 // pred_region
      _
    $region37: #{tpu_custom_call.1} parent=1 // pred_fallthru
      _
    // Predicated region
    $region38: #{tpu_custom_call.1} parent=1 // pred_check
      _
    $region39: #{tpu_custom_call.1} parent=1 // pred_check_branch
      %41 = sbr.rel (0) target = $region41
    $region40: #{tpu_custom_call.1} parent=1 // pred_region
      %s43 = ssub.s32 6144, 6144
      %44 = vsyncadd [#allocation4], %s43
      %s45 = sshll.u32 [#allocation3], 4
      %s46 = int_to_ptr.vmem [resolvable:$true] %s45
      %51 = dma.hbm_to_vmem [thread:$0]  %s9, 6144, %s46, [#allocation4], 128, 128, 8
    $region41: #{tpu_custom_call.1} parent=1 // pred_fallthru
      _
    // Predicated region
    $region42: #{tpu_custom_call.1} parent=1 // pred_check
      _
    $region43: #{tpu_custom_call.1} parent=1 // pred_check_branch
      %53 = sbr.rel (0) target = $region45
    $region44: #{tpu_custom_call.1} parent=1 // pred_region
      _
    $region45: #{tpu_custom_call.1} parent=1 // pred_fallthru
      _
    // Predicated region
    $region46: #{tpu_custom_call.1} parent=1 // pred_check
      _
    $region47: #{tpu_custom_call.1} parent=1 // pred_check_branch
      %55 = sbr.rel (0) target = $region49
    $region48: #{tpu_custom_call.1} parent=1 // pred_region
      _
    $region49: #{tpu_custom_call.1} parent=1 // pred_fallthru
      _
    // Predicated region
    $region50: #{tpu_custom_call.1} parent=1 // pred_check
      _
    $region51: #{tpu_custom_call.1} parent=1 // pred_check_branch
      %57 = sbr.rel (0) target = $region53
    $region52: #{tpu_custom_call.1} parent=1 // pred_region
      _
    $region53: #{tpu_custom_call.1} parent=1 // pred_fallthru
      _
    // Predicated region
    $region54: #{tpu_custom_call.1} parent=1 // pred_check
      _
    $region55: #{tpu_custom_call.1} parent=1 // pred_check_branch
      %59 = sbr.rel (0) target = $region57
    $region56: #{tpu_custom_call.1} parent=1 // pred_region
      %60 = dma.done [#allocation4], 6144
    $region57: #{tpu_custom_call.1} parent=1 // pred_fallthru
      _
    %v61 = vld [vmem:[%s0] sm:$0xff]
    %v62 = vld [vmem:[%s1] sm:$0x3]
    %64 = vset.pattern.permute.xlu0 0
    %65 = vperm.xlu0 %64, %v61
    %v66 = vpop.permute.xlu0 %65
    %v68 = vlaneseq
    %v69 = vshrl.u32 %v68, 7
    %v70 = vsub.s32 0, %v69
    %v71 = vrot.slane %v62, %v70
    %v72 = vmul.f32 %v66, %v71
    %73 = vset.pattern.permute.xlu0 1
    %74 = vperm.xlu0 %73, %v61
    %v75 = vpop.permute.xlu0 %74
    %v77 = vlaneseq
    %v78 = vshrl.u32 %v77, 7
    %v79 = vsub.s32 1, %v78
    %v80 = vrot.slane %v62, %v79
    %v81 = vmul.f32 %v75, %v80
    %v82 = vadd.f32 %v72, %v81
    %v83 = vld [vmem:[%s2] sm:$0x1]
    %v85 = vlaneseq
    %v86 = vshrl.u32 %v85, 7
    %v87 = vsub.s32 0, %v86
    %v88 = vrot.slane %v83, %v87
    %v90 = vadd.f32 %v82, %v88
    %v91 = vmax.f32 %v90, 0.0
    %v92 = vld [vmem:[%s3] sm:$0xff]
    %v93 = vld [vmem:[%s3 + $0x8] sm:$0xff]
    %v94 = vld [vmem:[%s3 + $0x10] sm:$0xff]
    %v95 = vld [vmem:[%s3 + $0x18] sm:$0xff]
    %v96 = vld [vmem:[%s4] sm:$0xff]
    %v97 = vld [vmem:[%s4 + $0x8] sm:$0xff]
    %v98 = vld [vmem:[%s4 + $0x10] sm:$0xff]
    %v99 = vld [vmem:[%s4 + $0x18] sm:$0xff]
    %101 = vset.pattern.permute.xlu0 0
    %102 = vperm.xlu0 %101, %v96
    %v103 = vpop.permute.xlu0 %102
    %106 = vset.pattern.permute.xlu0 0
    %107 = vperm.xlu0 %106, %v97
    %v108 = vpop.permute.xlu0 %107
    %111 = vset.pattern.permute.xlu0 0
    %112 = vperm.xlu0 %111, %v98
    %v113 = vpop.permute.xlu0 %112
    %116 = vset.pattern.permute.xlu0 0
    %117 = vperm.xlu0 %116, %v99
    %v118 = vpop.permute.xlu0 %117
    %vm120 = vcmask 64512
    %v122 = vsel %vm120, %v92, 0
    %v125 = vsel %vm120, %v93, 0
    %v128 = vsel %vm120, %v94, 0
    %v131 = vsel %vm120, %v95, 0
    %133 = vmatprep.subr.mxu0 0.0
    %134 = vmatpush1.msra.mxu0 %v91
    %135 = vmatprep.subr.mxu0 0.0
    %136 = vmatpush1.msra.mxu0 0.0
    %137 = vmatprep.subr.mxu0 0.0
    %138 = vmatpush1.msra.mxu0 0.0
    %139 = vmatprep.subr.mxu0 0.0
    %140 = vmatpush1.msra.mxu0 0.0
    %141 = vmatprep.subr.mxu0 0.0
    %142 = vmatpush1.msra.mxu0 0.0
    %143 = vmatprep.subr.mxu0 0.0
    %144 = vmatpush1.msra.mxu0 0.0
    %145 = vmatprep.subr.mxu0 0.0
    %146 = vmatpush1.msra.mxu0 0.0
    %147 = vmatprep.subr.mxu0 0.0
    %148 = vmatpush1.msra.mxu0 0.0
    %149 = vmatprep.subr.mxu0 0.0
    %150 = vmatpush1.msra.mxu0 0.0
    %151 = vmatprep.subr.mxu0 0.0
    %152 = vmatpush1.msra.mxu0 0.0
    %153 = vmatprep.subr.mxu0 0.0
    %154 = vmatpush1.msra.mxu0 0.0
    %155 = vmatprep.subr.mxu0 0.0
    %156 = vmatpush1.msra.mxu0 0.0
    %157 = vmatprep.subr.mxu0 0.0
    %158 = vmatpush1.msra.mxu0 0.0
    %159 = vmatprep.subr.mxu0 0.0
    %160 = vmatpush1.msra.mxu0 0.0
    %161 = vmatprep.subr.mxu0 0.0
    %162 = vmatpush1.msra.mxu0 0.0
    %163 = vmatprep.subr.mxu0 0.0
    %164 = vmatpush1.msra.mxu0 0.0
    %165 = vmatprep.subr.mxu0 0.0
    %166 = vmatpush1.msra.mxu0 0.0
    %167 = vmatprep.subr.mxu0 0.0
    %168 = vmatpush1.msra.mxu0 0.0
    %169 = vmatprep.subr.mxu0 0.0
    %170 = vmatpush1.msra.mxu0 0.0
    %171 = vmatprep.subr.mxu0 0.0
    %172 = vmatpush1.msra.mxu0 0.0
    %173 = vmatprep.subr.mxu0 0.0
    %174 = vmatpush1.msra.mxu0 0.0
    %175 = vmatprep.subr.mxu0 0.0
    %176 = vmatpush1.msra.mxu0 0.0
    %177 = vmatprep.subr.mxu0 0.0
    %178 = vmatpush1.msra.mxu0 0.0
    %179 = vmatprep.subr.mxu0 0.0
    %180 = vmatpush1.msra.mxu0 0.0
    %181 = vmatprep.subr.mxu0 0.0
    %182 = vmatpush1.msra.mxu0 0.0
    %183 = vmatprep.subr.mxu0 0.0
    %184 = vmatpush1.msra.mxu0 0.0
    %185 = vmatprep.subr.mxu0 0.0
    %186 = vmatpush1.msra.mxu0 0.0
    %187 = vmatprep.subr.mxu0 0.0
    %188 = vmatpush1.msra.mxu0 0.0
    %189 = vmatprep.subr.mxu0 0.0
    %190 = vmatpush1.msra.mxu0 0.0
    %191 = vmatprep.subr.mxu0 0.0
    %192 = vmatpush1.msra.mxu0 0.0
    %193 = vmatprep.subr.mxu0 0.0
    %194 = vmatpush1.msra.mxu0 0.0
    %195 = vmatprep.subr.mxu0 0.0
    %196 = vmatpush1.msra.mxu0 0.0
    %197 = vmatprep.mubr.f32.mxu0 0.0
    %198 = vmatmul.mubr.f32.gmra.mrb[0].mxu0 %v122
    %v199 = vpop.f32.mrb[0].mxu0
    %v200 = vadd.f32 %v103, %v199
    %v201 = vpop.f32.mrb[0].mxu0
    %202 = vmatprep.mubr.f32.mxu0 0.0
    %203 = vmatmul.mubr.f32.gmra.mrb[0].mxu0 %v125
    %v204 = vpop.f32.mrb[0].mxu0
    %v205 = vadd.f32 %v108, %v204
    %v206 = vpop.f32.mrb[0].mxu0
    %207 = vmatprep.mubr.f32.mxu0 0.0
    %208 = vmatmul.mubr.f32.gmra.mrb[0].mxu0 %v128
    %v209 = vpop.f32.mrb[0].mxu0
    %v210 = vadd.f32 %v113, %v209
    %v211 = vpop.f32.mrb[0].mxu0
    %212 = vmatprep.mubr.f32.mxu0 0.0
    %213 = vmatmul.mubr.f32.gmra.mrb[0].mxu0 %v131
    %v214 = vpop.f32.mrb[0].mxu0
    %v215 = vadd.f32 %v118, %v214
    %v216 = vpop.f32.mrb[0].mxu0
    %217 = vdwg.mxu0
    %v218 = vlaneseq
    %v219 = vshrl.u32 %v218, 7
    %v220 = vadd.s32 %v219, 8
    %v221 = vlaneseq
    %v222 = vand.u32 %v221, 127
    %v223 = vmul.u32 %v219, 2
    %v224 = vmul.u32 %v220, 2
    %vm225 = vcmp.eq.s32.totalorder %v222, %v223
    %vm226 = vcmp.eq.s32.totalorder %v222, %v224
    %v227 = vsel %vm225, 1, 0
    %v228 = vsel %vm226, 1, 0
    %v229 = vcvt.s32.f32 %v227
    %v230 = vcvt.s32.f32 %v228
    %v231 = vadd.s32 %v223, 1
    %v232 = vadd.s32 %v224, 1
    %vm233 = vcmp.eq.s32.totalorder %v222, %v231
    %vm234 = vcmp.eq.s32.totalorder %v222, %v232
    %v235 = vsel %vm233, 1, 0
    %v236 = vsel %vm234, 1, 0
    %v237 = vcvt.s32.f32 %v235
    %v238 = vcvt.s32.f32 %v236
    %v239 = vsub.s32 %v223, 1
    %v240 = vsub.s32 %v224, 1
    %vm241 = vcmp.eq.s32.totalorder %v222, %v239
    %vm242 = vcmp.eq.s32.totalorder %v222, %v240
    %v243 = vsel %vm241, 1, 0
    %v244 = vsel %vm242, 1, 0
    %v245 = vcvt.s32.f32 %v243
    %v246 = vcvt.s32.f32 %v244
    %v247 = vld [vmem:[%s5] sm:$0xff]
    %v248 = vld [vmem:[%s5 + $0x8] sm:$0xff]
    %v249 = vld [vmem:[%s5 + $0x10] sm:$0xff]
    %v250 = vld [vmem:[%s5 + $0x18] sm:$0xff]
    %vm251 = vcmask 261120
    %v253 = vsel %vm251, %v247, 0
    %v256 = vsel %vm251, %v248, 0
    %v259 = vsel %vm251, %v249, 0
    %v262 = vsel %vm251, %v250, 0
    %264 = vmatprep.subr.mxu0 0.0
    %265 = vmatpush1.msra.mxu0 %v200
    %266 = vmatprep.subr.mxu0 0.0
    %267 = vmatpush1.msra.mxu0 %v205
    %268 = vmatprep.subr.mxu0 0.0
    %269 = vmatpush1.msra.mxu0 %v210
    %270 = vmatprep.subr.mxu0 0.0
    %271 = vmatpush1.msra.mxu0 %v215
    %272 = vmatprep.subr.mxu0 0.0
    %273 = vmatpush1.msra.mxu0 0.0
    %274 = vmatprep.subr.mxu0 0.0
    %275 = vmatpush1.msra.mxu0 0.0
    %276 = vmatprep.subr.mxu0 0.0
    %277 = vmatpush1.msra.mxu0 0.0
    %278 = vmatprep.subr.mxu0 0.0
    %279 = vmatpush1.msra.mxu0 0.0
    %280 = vmatprep.subr.mxu0 0.0
    %281 = vmatpush1.msra.mxu0 0.0
    %282 = vmatprep.subr.mxu0 0.0
    %283 = vmatpush1.msra.mxu0 0.0
    %284 = vmatprep.subr.mxu0 0.0
    %285 = vmatpush1.msra.mxu0 0.0
    %286 = vmatprep.subr.mxu0 0.0
    %287 = vmatpush1.msra.mxu0 0.0
    %288 = vmatprep.subr.mxu0 0.0
    %289 = vmatpush1.msra.mxu0 0.0
    %290 = vmatprep.subr.mxu0 0.0
    %291 = vmatpush1.msra.mxu0 0.0
    %292 = vmatprep.subr.mxu0 0.0
    %293 = vmatpush1.msra.mxu0 0.0
    %294 = vmatprep.subr.mxu0 0.0
    %295 = vmatpush1.msra.mxu0 0.0
    %296 = vmatprep.subr.mxu0 0.0
    %297 = vmatpush1.msra.mxu0 0.0
    %298 = vmatprep.subr.mxu0 0.0
    %299 = vmatpush1.msra.mxu0 0.0
    %300 = vmatprep.subr.mxu0 0.0
    %301 = vmatpush1.msra.mxu0 0.0
    %302 = vmatprep.subr.mxu0 0.0
    %303 = vmatpush1.msra.mxu0 0.0
    %304 = vmatprep.subr.mxu0 0.0
    %305 = vmatpush1.msra.mxu0 0.0
    %306 = vmatprep.subr.mxu0 0.0
    %307 = vmatpush1.msra.mxu0 0.0
    %308 = vmatprep.subr.mxu0 0.0
    %309 = vmatpush1.msra.mxu0 0.0
    %310 = vmatprep.subr.mxu0 0.0
    %311 = vmatpush1.msra.mxu0 0.0
    %312 = vmatprep.subr.mxu0 0.0
    %313 = vmatpush1.msra.mxu0 0.0
    %314 = vmatprep.subr.mxu0 0.0
    %315 = vmatpush1.msra.mxu0 0.0
    %316 = vmatprep.subr.mxu0 0.0
    %317 = vmatpush1.msra.mxu0 0.0
    %318 = vmatprep.subr.mxu0 0.0
    %319 = vmatpush1.msra.mxu0 0.0
    %320 = vmatprep.subr.mxu0 0.0
    %321 = vmatpush1.msra.mxu0 0.0
    %322 = vmatprep.subr.mxu0 0.0
    %323 = vmatpush1.msra.mxu0 0.0
    %324 = vmatprep.subr.mxu0 0.0
    %325 = vmatpush1.msra.mxu0 0.0
    %326 = vmatprep.subr.mxu0 0.0
    %327 = vmatpush1.msra.mxu0 0.0
    %328 = vmatprep.mubr.f32.mxu0 0.0
    %329 = vmatmul.mubr.f32.gmra.mrb[0].mxu0 %v253
    %v330 = vpop.f32.mrb[0].mxu0
    %v331 = vadd.f32 0.0, %v330
    %v332 = vpop.f32.mrb[0].mxu0
    %333 = vmatprep.mubr.f32.mxu0 0.0
    %334 = vmatmul.mubr.f32.gmra.mrb[0].mxu0 %v256
    %v335 = vpop.f32.mrb[0].mxu0
    %v336 = vadd.f32 0.0, %v335
    %v337 = vpop.f32.mrb[0].mxu0
    %338 = vmatprep.mubr.f32.mxu0 0.0
    %339 = vmatmul.mubr.f32.gmra.mrb[0].mxu0 %v259
    %v340 = vpop.f32.mrb[0].mxu0
    %v341 = vadd.f32 0.0, %v340
    %v342 = vpop.f32.mrb[0].mxu0
    %343 = vmatprep.mubr.f32.mxu0 0.0
    %344 = vmatmul.mubr.f32.gmra.mrb[0].mxu0 %v262
    %v345 = vpop.f32.mrb[0].mxu0
    %v346 = vadd.f32 0.0, %v345
    %v347 = vpop.f32.mrb[0].mxu0
    %348 = vdwg.mxu0
    %s349 = scalar_lea.vmem %s5, 32
    %v350 = vld [vmem:[%s349] sm:$0xff]
    %v351 = vld [vmem:[%s349 + $0x8] sm:$0xff]
    %v352 = vld [vmem:[%s349 + $0x10] sm:$0xff]
    %v353 = vld [vmem:[%s349 + $0x18] sm:$0xff]
    %v355 = vsel %vm251, %v350, 0
    %v358 = vsel %vm251, %v351, 0
    %v361 = vsel %vm251, %v352, 0
    %v364 = vsel %vm251, %v353, 0
    %366 = vmatprep.subr.mxu0 0.0
    %367 = vmatpush1.msra.mxu0 %v200
    %368 = vmatprep.subr.mxu0 0.0
    %369 = vmatpush1.msra.mxu0 %v205
    %370 = vmatprep.subr.mxu0 0.0
    %371 = vmatpush1.msra.mxu0 %v210
    %372 = vmatprep.subr.mxu0 0.0
    %373 = vmatpush1.msra.mxu0 %v215
    %374 = vmatprep.subr.mxu0 0.0
    %375 = vmatpush1.msra.mxu0 0.0
    %376 = vmatprep.subr.mxu0 0.0
    %377 = vmatpush1.msra.mxu0 0.0
    %378 = vmatprep.subr.mxu0 0.0
    %379 = vmatpush1.msra.mxu0 0.0
    %380 = vmatprep.subr.mxu0 0.0
    %381 = vmatpush1.msra.mxu0 0.0
    %382 = vmatprep.subr.mxu0 0.0
    %383 = vmatpush1.msra.mxu0 0.0
    %384 = vmatprep.subr.mxu0 0.0
    %385 = vmatpush1.msra.mxu0 0.0
    %386 = vmatprep.subr.mxu0 0.0
    %387 = vmatpush1.msra.mxu0 0.0
    %388 = vmatprep.subr.mxu0 0.0
    %389 = vmatpush1.msra.mxu0 0.0
    %390 = vmatprep.subr.mxu0 0.0
    %391 = vmatpush1.msra.mxu0 0.0
    %392 = vmatprep.subr.mxu0 0.0
    %393 = vmatpush1.msra.mxu0 0.0
    %394 = vmatprep.subr.mxu0 0.0
    %395 = vmatpush1.msra.mxu0 0.0
    %396 = vmatprep.subr.mxu0 0.0
    %397 = vmatpush1.msra.mxu0 0.0
    %398 = vmatprep.subr.mxu0 0.0
    %399 = vmatpush1.msra.mxu0 0.0
    %400 = vmatprep.subr.mxu0 0.0
    %401 = vmatpush1.msra.mxu0 0.0
    %402 = vmatprep.subr.mxu0 0.0
    %403 = vmatpush1.msra.mxu0 0.0
    %404 = vmatprep.subr.mxu0 0.0
    %405 = vmatpush1.msra.mxu0 0.0
    %406 = vmatprep.subr.mxu0 0.0
    %407 = vmatpush1.msra.mxu0 0.0
    %408 = vmatprep.subr.mxu0 0.0
    %409 = vmatpush1.msra.mxu0 0.0
    %410 = vmatprep.subr.mxu0 0.0
    %411 = vmatpush1.msra.mxu0 0.0
    %412 = vmatprep.subr.mxu0 0.0
    %413 = vmatpush1.msra.mxu0 0.0
    %414 = vmatprep.subr.mxu0 0.0
    %415 = vmatpush1.msra.mxu0 0.0
    %416 = vmatprep.subr.mxu0 0.0
    %417 = vmatpush1.msra.mxu0 0.0
    %418 = vmatprep.subr.mxu0 0.0
    %419 = vmatpush1.msra.mxu0 0.0
    %420 = vmatprep.subr.mxu0 0.0
    %421 = vmatpush1.msra.mxu0 0.0
    %422 = vmatprep.subr.mxu0 0.0
    %423 = vmatpush1.msra.mxu0 0.0
    %424 = vmatprep.subr.mxu0 0.0
    %425 = vmatpush1.msra.mxu0 0.0
    %426 = vmatprep.subr.mxu0 0.0
    %427 = vmatpush1.msra.mxu0 0.0
    %428 = vmatprep.subr.mxu0 0.0
    %429 = vmatpush1.msra.mxu0 0.0
    %430 = vmatprep.mubr.f32.mxu0 0.0
    %431 = vmatmul.mubr.f32.gmra.mrb[0].mxu0 %v355
    %v432 = vpop.f32.mrb[0].mxu0
    %v433 = vadd.f32 0.0, %v432
    %v434 = vpop.f32.mrb[0].mxu0
    %435 = vmatprep.mubr.f32.mxu0 0.0
    %436 = vmatmul.mubr.f32.gmra.mrb[0].mxu0 %v358
    %v437 = vpop.f32.mrb[0].mxu0
    %v438 = vadd.f32 0.0, %v437
    %v439 = vpop.f32.mrb[0].mxu0
    %440 = vmatprep.mubr.f32.mxu0 0.0
    %441 = vmatmul.mubr.f32.gmra.mrb[0].mxu0 %v361
    %v442 = vpop.f32.mrb[0].mxu0
    %v443 = vadd.f32 0.0, %v442
    %v444 = vpop.f32.mrb[0].mxu0
    %445 = vmatprep.mubr.f32.mxu0 0.0
    %446 = vmatmul.mubr.f32.gmra.mrb[0].mxu0 %v364
    %v447 = vpop.f32.mrb[0].mxu0
    %v448 = vadd.f32 0.0, %v447
    %v449 = vpop.f32.mrb[0].mxu0
    %450 = vdwg.mxu0
    %s451 = scalar_lea.vmem %s5, 64
    %v452 = vld [vmem:[%s451] sm:$0xff]
    %v453 = vld [vmem:[%s451 + $0x8] sm:$0xff]
    %v454 = vld [vmem:[%s451 + $0x10] sm:$0xff]
    %v455 = vld [vmem:[%s451 + $0x18] sm:$0xff]
    %v457 = vsel %vm251, %v452, 0
    %v460 = vsel %vm251, %v453, 0
    %v463 = vsel %vm251, %v454, 0
    %v466 = vsel %vm251, %v455, 0
    %468 = vmatprep.subr.mxu0 0.0
    %469 = vmatpush1.msra.mxu0 %v200
    %470 = vmatprep.subr.mxu0 0.0
    %471 = vmatpush1.msra.mxu0 %v205
    %472 = vmatprep.subr.mxu0 0.0
    %473 = vmatpush1.msra.mxu0 %v210
    %474 = vmatprep.subr.mxu0 0.0
    %475 = vmatpush1.msra.mxu0 %v215
    %476 = vmatprep.subr.mxu0 0.0
    %477 = vmatpush1.msra.mxu0 0.0
    %478 = vmatprep.subr.mxu0 0.0
    %479 = vmatpush1.msra.mxu0 0.0
    %480 = vmatprep.subr.mxu0 0.0
    %481 = vmatpush1.msra.mxu0 0.0
    %482 = vmatprep.subr.mxu0 0.0
    %483 = vmatpush1.msra.mxu0 0.0
    %484 = vmatprep.subr.mxu0 0.0
    %485 = vmatpush1.msra.mxu0 0.0
    %486 = vmatprep.subr.mxu0 0.0
    %487 = vmatpush1.msra.mxu0 0.0
    %488 = vmatprep.subr.mxu0 0.0
    %489 = vmatpush1.msra.mxu0 0.0
    %490 = vmatprep.subr.mxu0 0.0
    %491 = vmatpush1.msra.mxu0 0.0
    %492 = vmatprep.subr.mxu0 0.0
    %493 = vmatpush1.msra.mxu0 0.0
    %494 = vmatprep.subr.mxu0 0.0
    %495 = vmatpush1.msra.mxu0 0.0
    %496 = vmatprep.subr.mxu0 0.0
    %497 = vmatpush1.msra.mxu0 0.0
    %498 = vmatprep.subr.mxu0 0.0
    %499 = vmatpush1.msra.mxu0 0.0
    %500 = vmatprep.subr.mxu0 0.0
    %501 = vmatpush1.msra.mxu0 0.0
    %502 = vmatprep.subr.mxu0 0.0
    %503 = vmatpush1.msra.mxu0 0.0
    %504 = vmatprep.subr.mxu0 0.0
    %505 = vmatpush1.msra.mxu0 0.0
    %506 = vmatprep.subr.mxu0 0.0
    %507 = vmatpush1.msra.mxu0 0.0
    %508 = vmatprep.subr.mxu0 0.0
    %509 = vmatpush1.msra.mxu0 0.0
    %510 = vmatprep.subr.mxu0 0.0
    %511 = vmatpush1.msra.mxu0 0.0
    %512 = vmatprep.subr.mxu0 0.0
    %513 = vmatpush1.msra.mxu0 0.0
    %514 = vmatprep.subr.mxu0 0.0
    %515 = vmatpush1.msra.mxu0 0.0
    %516 = vmatprep.subr.mxu0 0.0
    %517 = vmatpush1.msra.mxu0 0.0
    %518 = vmatprep.subr.mxu0 0.0
    %519 = vmatpush1.msra.mxu0 0.0
    %520 = vmatprep.subr.mxu0 0.0
    %521 = vmatpush1.msra.mxu0 0.0
    %522 = vmatprep.subr.mxu0 0.0
    %523 = vmatpush1.msra.mxu0 0.0
    %524 = vmatprep.subr.mxu0 0.0
    %525 = vmatpush1.msra.mxu0 0.0
    %526 = vmatprep.subr.mxu0 0.0
    %527 = vmatpush1.msra.mxu0 0.0
    %528 = vmatprep.subr.mxu0 0.0
    %529 = vmatpush1.msra.mxu0 0.0
    %530 = vmatprep.subr.mxu0 0.0
    %531 = vmatpush1.msra.mxu0 0.0
    %532 = vmatprep.mubr.f32.mxu0 0.0
    %533 = vmatmul.mubr.f32.gmra.mrb[0].mxu0 %v457
    %v534 = vpop.f32.mrb[0].mxu0
    %v535 = vadd.f32 0.0, %v534
    %v536 = vpop.f32.mrb[0].mxu0
    %537 = vmatprep.mubr.f32.mxu0 0.0
    %538 = vmatmul.mubr.f32.gmra.mrb[0].mxu0 %v460
    %v539 = vpop.f32.mrb[0].mxu0
    %v540 = vadd.f32 0.0, %v539
    %v541 = vpop.f32.mrb[0].mxu0
    %542 = vmatprep.mubr.f32.mxu0 0.0
    %543 = vmatmul.mubr.f32.gmra.mrb[0].mxu0 %v463
    %v544 = vpop.f32.mrb[0].mxu0
    %v545 = vadd.f32 0.0, %v544
    %v546 = vpop.f32.mrb[0].mxu0
    %547 = vmatprep.mubr.f32.mxu0 0.0
    %548 = vmatmul.mubr.f32.gmra.mrb[0].mxu0 %v466
    %v549 = vpop.f32.mrb[0].mxu0
    %v550 = vadd.f32 0.0, %v549
    %v551 = vpop.f32.mrb[0].mxu0
    %552 = vdwg.mxu0
    %vm553 = vcmask 130048
    %v555 = vsel %vm553, %v535, 0
    %v558 = vsel %vm553, %v540, 0
    %v561 = vsel %vm553, %v545, 0
    %v564 = vsel %vm553, %v550, 0
    %566 = vmatprep.subr.mxu0 0.0
    %567 = vmatpush1.msra.mxu0 %v237
    %568 = vmatprep.subr.mxu0 0.0
    %569 = vmatpush1.msra.mxu0 %v238
    %570 = vmatprep.subr.mxu0 0.0
    %571 = vmatpush1.msra.mxu0 0.0
    %572 = vmatprep.subr.mxu0 0.0
    %573 = vmatpush1.msra.mxu0 0.0
    %574 = vmatprep.subr.mxu0 0.0
    %575 = vmatpush1.msra.mxu0 0.0
    %576 = vmatprep.subr.mxu0 0.0
    %577 = vmatpush1.msra.mxu0 0.0
    %578 = vmatprep.subr.mxu0 0.0
    %579 = vmatpush1.msra.mxu0 0.0
    %580 = vmatprep.subr.mxu0 0.0
    %581 = vmatpush1.msra.mxu0 0.0
    %582 = vmatprep.subr.mxu0 0.0
    %583 = vmatpush1.msra.mxu0 0.0
    %584 = vmatprep.subr.mxu0 0.0
    %585 = vmatpush1.msra.mxu0 0.0
    %586 = vmatprep.subr.mxu0 0.0
    %587 = vmatpush1.msra.mxu0 0.0
    %588 = vmatprep.subr.mxu0 0.0
    %589 = vmatpush1.msra.mxu0 0.0
    %590 = vmatprep.subr.mxu0 0.0
    %591 = vmatpush1.msra.mxu0 0.0
    %592 = vmatprep.subr.mxu0 0.0
    %593 = vmatpush1.msra.mxu0 0.0
    %594 = vmatprep.subr.mxu0 0.0
    %595 = vmatpush1.msra.mxu0 0.0
    %596 = vmatprep.subr.mxu0 0.0
    %597 = vmatpush1.msra.mxu0 0.0
    %598 = vmatprep.subr.mxu0 0.0
    %599 = vmatpush1.msra.mxu0 0.0
    %600 = vmatprep.subr.mxu0 0.0
    %601 = vmatpush1.msra.mxu0 0.0
    %602 = vmatprep.subr.mxu0 0.0
    %603 = vmatpush1.msra.mxu0 0.0
    %604 = vmatprep.subr.mxu0 0.0
    %605 = vmatpush1.msra.mxu0 0.0
    %606 = vmatprep.subr.mxu0 0.0
    %607 = vmatpush1.msra.mxu0 0.0
    %608 = vmatprep.subr.mxu0 0.0
    %609 = vmatpush1.msra.mxu0 0.0
    %610 = vmatprep.subr.mxu0 0.0
    %611 = vmatpush1.msra.mxu0 0.0
    %612 = vmatprep.subr.mxu0 0.0
    %613 = vmatpush1.msra.mxu0 0.0
    %614 = vmatprep.subr.mxu0 0.0
    %615 = vmatpush1.msra.mxu0 0.0
    %616 = vmatprep.subr.mxu0 0.0
    %617 = vmatpush1.msra.mxu0 0.0
    %618 = vmatprep.subr.mxu0 0.0
    %619 = vmatpush1.msra.mxu0 0.0
    %620 = vmatprep.subr.mxu0 0.0
    %621 = vmatpush1.msra.mxu0 0.0
    %622 = vmatprep.subr.mxu0 0.0
    %623 = vmatpush1.msra.mxu0 0.0
    %624 = vmatprep.subr.mxu0 0.0
    %625 = vmatpush1.msra.mxu0 0.0
    %626 = vmatprep.subr.mxu0 0.0
    %627 = vmatpush1.msra.mxu0 0.0
    %628 = vmatprep.subr.mxu0 0.0
    %629 = vmatpush1.msra.mxu0 0.0
    %630 = vmatprep.mubr.f32.mxu0 0.0
    %631 = vmatmul.mubr.f32.gmra.mrb[0].mxu0 %v555
    %v632 = vpop.f32.mrb[0].mxu0
    %v633 = vadd.f32 0.0, %v632
    %v634 = vpop.f32.mrb[0].mxu0
    %635 = vmatprep.mubr.f32.mxu0 0.0
    %636 = vmatmul.mubr.f32.gmra.mrb[0].mxu0 %v558
    %v637 = vpop.f32.mrb[0].mxu0
    %v638 = vadd.f32 0.0, %v637
    %v639 = vpop.f32.mrb[0].mxu0
    %640 = vmatprep.mubr.f32.mxu0 0.0
    %641 = vmatmul.mubr.f32.gmra.mrb[0].mxu0 %v561
    %v642 = vpop.f32.mrb[0].mxu0
    %v643 = vadd.f32 0.0, %v642
    %v644 = vpop.f32.mrb[0].mxu0
    %645 = vmatprep.mubr.f32.mxu0 0.0
    %646 = vmatmul.mubr.f32.gmra.mrb[0].mxu0 %v564
    %v647 = vpop.f32.mrb[0].mxu0
    %v648 = vadd.f32 0.0, %v647
    %v649 = vpop.f32.mrb[0].mxu0
    %650 = vdwg.mxu0
    %v652 = vsel %vm553, %v433, 0
    %v655 = vsel %vm553, %v438, 0
    %v658 = vsel %vm553, %v443, 0
    %v661 = vsel %vm553, %v448, 0
    %663 = vmatprep.subr.mxu0 0.0
    %664 = vmatpush1.msra.mxu0 %v229
    %665 = vmatprep.subr.mxu0 0.0
    %666 = vmatpush1.msra.mxu0 %v230
    %667 = vmatprep.subr.mxu0 0.0
    %668 = vmatpush1.msra.mxu0 0.0
    %669 = vmatprep.subr.mxu0 0.0
    %670 = vmatpush1.msra.mxu0 0.0
    %671 = vmatprep.subr.mxu0 0.0
    %672 = vmatpush1.msra.mxu0 0.0
    %673 = vmatprep.subr.mxu0 0.0
    %674 = vmatpush1.msra.mxu0 0.0
    %675 = vmatprep.subr.mxu0 0.0
    %676 = vmatpush1.msra.mxu0 0.0
    %677 = vmatprep.subr.mxu0 0.0
    %678 = vmatpush1.msra.mxu0 0.0
    %679 = vmatprep.subr.mxu0 0.0
    %680 = vmatpush1.msra.mxu0 0.0
    %681 = vmatprep.subr.mxu0 0.0
    %682 = vmatpush1.msra.mxu0 0.0
    %683 = vmatprep.subr.mxu0 0.0
    %684 = vmatpush1.msra.mxu0 0.0
    %685 = vmatprep.subr.mxu0 0.0
    %686 = vmatpush1.msra.mxu0 0.0
    %687 = vmatprep.subr.mxu0 0.0
    %688 = vmatpush1.msra.mxu0 0.0
    %689 = vmatprep.subr.mxu0 0.0
    %690 = vmatpush1.msra.mxu0 0.0
    %691 = vmatprep.subr.mxu0 0.0
    %692 = vmatpush1.msra.mxu0 0.0
    %693 = vmatprep.subr.mxu0 0.0
    %694 = vmatpush1.msra.mxu0 0.0
    %695 = vmatprep.subr.mxu0 0.0
    %696 = vmatpush1.msra.mxu0 0.0
    %697 = vmatprep.subr.mxu0 0.0
    %698 = vmatpush1.msra.mxu0 0.0
    %699 = vmatprep.subr.mxu0 0.0
    %700 = vmatpush1.msra.mxu0 0.0
    %701 = vmatprep.subr.mxu0 0.0
    %702 = vmatpush1.msra.mxu0 0.0
    %703 = vmatprep.subr.mxu0 0.0
    %704 = vmatpush1.msra.mxu0 0.0
    %705 = vmatprep.subr.mxu0 0.0
    %706 = vmatpush1.msra.mxu0 0.0
    %707 = vmatprep.subr.mxu0 0.0
    %708 = vmatpush1.msra.mxu0 0.0
    %709 = vmatprep.subr.mxu0 0.0
    %710 = vmatpush1.msra.mxu0 0.0
    %711 = vmatprep.subr.mxu0 0.0
    %712 = vmatpush1.msra.mxu0 0.0
    %713 = vmatprep.subr.mxu0 0.0
    %714 = vmatpush1.msra.mxu0 0.0
    %715 = vmatprep.subr.mxu0 0.0
    %716 = vmatpush1.msra.mxu0 0.0
    %717 = vmatprep.subr.mxu0 0.0
    %718 = vmatpush1.msra.mxu0 0.0
    %719 = vmatprep.subr.mxu0 0.0
    %720 = vmatpush1.msra.mxu0 0.0
    %721 = vmatprep.subr.mxu0 0.0
    %722 = vmatpush1.msra.mxu0 0.0
    %723 = vmatprep.subr.mxu0 0.0
    %724 = vmatpush1.msra.mxu0 0.0
    %725 = vmatprep.subr.mxu0 0.0
    %726 = vmatpush1.msra.mxu0 0.0
    %727 = vmatprep.mubr.f32.mxu0 0.0
    %728 = vmatmul.mubr.f32.gmra.mrb[0].mxu0 %v652
    %v729 = vpop.f32.mrb[0].mxu0
    %v730 = vadd.f32 %v633, %v729
    %v731 = vpop.f32.mrb[0].mxu0
    %732 = vmatprep.mubr.f32.mxu0 0.0
    %733 = vmatmul.mubr.f32.gmra.mrb[0].mxu0 %v655
    %v734 = vpop.f32.mrb[0].mxu0
    %v735 = vadd.f32 %v638, %v734
    %v736 = vpop.f32.mrb[0].mxu0
    %737 = vmatprep.mubr.f32.mxu0 0.0
    %738 = vmatmul.mubr.f32.gmra.mrb[0].mxu0 %v658
    %v739 = vpop.f32.mrb[0].mxu0
    %v740 = vadd.f32 %v643, %v739
    %v741 = vpop.f32.mrb[0].mxu0
    %742 = vmatprep.mubr.f32.mxu0 0.0
    %743 = vmatmul.mubr.f32.gmra.mrb[0].mxu0 %v661
    %v744 = vpop.f32.mrb[0].mxu0
    %v745 = vadd.f32 %v648, %v744
    %v746 = vpop.f32.mrb[0].mxu0
    %747 = vdwg.mxu0
    %v749 = vsel %vm553, %v331, 0
    %v752 = vsel %vm553, %v336, 0
    %v755 = vsel %vm553, %v341, 0
    %v758 = vsel %vm553, %v346, 0
    %760 = vmatprep.subr.mxu0 0.0
    %761 = vmatpush1.msra.mxu0 %v245
    %762 = vmatprep.subr.mxu0 0.0
    %763 = vmatpush1.msra.mxu0 %v246
    %764 = vmatprep.subr.mxu0 0.0
    %765 = vmatpush1.msra.mxu0 0.0
    %766 = vmatprep.subr.mxu0 0.0
    %767 = vmatpush1.msra.mxu0 0.0
    %768 = vmatprep.subr.mxu0 0.0
    %769 = vmatpush1.msra.mxu0 0.0
    %770 = vmatprep.subr.mxu0 0.0
    %771 = vmatpush1.msra.mxu0 0.0
    %772 = vmatprep.subr.mxu0 0.0
    %773 = vmatpush1.msra.mxu0 0.0
    %774 = vmatprep.subr.mxu0 0.0
    %775 = vmatpush1.msra.mxu0 0.0
    %776 = vmatprep.subr.mxu0 0.0
    %777 = vmatpush1.msra.mxu0 0.0
    %778 = vmatprep.subr.mxu0 0.0
    %779 = vmatpush1.msra.mxu0 0.0
    %780 = vmatprep.subr.mxu0 0.0
    %781 = vmatpush1.msra.mxu0 0.0
    %782 = vmatprep.subr.mxu0 0.0
    %783 = vmatpush1.msra.mxu0 0.0
    %784 = vmatprep.subr.mxu0 0.0
    %785 = vmatpush1.msra.mxu0 0.0
    %786 = vmatprep.subr.mxu0 0.0
    %787 = vmatpush1.msra.mxu0 0.0
    %788 = vmatprep.subr.mxu0 0.0
    %789 = vmatpush1.msra.mxu0 0.0
    %790 = vmatprep.subr.mxu0 0.0
    %791 = vmatpush1.msra.mxu0 0.0
    %792 = vmatprep.subr.mxu0 0.0
    %793 = vmatpush1.msra.mxu0 0.0
    %794 = vmatprep.subr.mxu0 0.0
    %795 = vmatpush1.msra.mxu0 0.0
    %796 = vmatprep.subr.mxu0 0.0
    %797 = vmatpush1.msra.mxu0 0.0
    %798 = vmatprep.subr.mxu0 0.0
    %799 = vmatpush1.msra.mxu0 0.0
    %800 = vmatprep.subr.mxu0 0.0
    %801 = vmatpush1.msra.mxu0 0.0
    %802 = vmatprep.subr.mxu0 0.0
    %803 = vmatpush1.msra.mxu0 0.0
    %804 = vmatprep.subr.mxu0 0.0
    %805 = vmatpush1.msra.mxu0 0.0
    %806 = vmatprep.subr.mxu0 0.0
    %807 = vmatpush1.msra.mxu0 0.0
    %808 = vmatprep.subr.mxu0 0.0
    %809 = vmatpush1.msra.mxu0 0.0
    %810 = vmatprep.subr.mxu0 0.0
    %811 = vmatpush1.msra.mxu0 0.0
    %812 = vmatprep.subr.mxu0 0.0
    %813 = vmatpush1.msra.mxu0 0.0
    %814 = vmatprep.subr.mxu0 0.0
    %815 = vmatpush1.msra.mxu0 0.0
    %816 = vmatprep.subr.mxu0 0.0
    %817 = vmatpush1.msra.mxu0 0.0
    %818 = vmatprep.subr.mxu0 0.0
    %819 = vmatpush1.msra.mxu0 0.0
    %820 = vmatprep.subr.mxu0 0.0
    %821 = vmatpush1.msra.mxu0 0.0
    %822 = vmatprep.subr.mxu0 0.0
    %823 = vmatpush1.msra.mxu0 0.0
    %824 = vmatprep.mubr.f32.mxu0 0.0
    %825 = vmatmul.mubr.f32.gmra.mrb[0].mxu0 %v749
    %v826 = vpop.f32.mrb[0].mxu0
    %v827 = vadd.f32 0.0, %v826
    %v828 = vpop.f32.mrb[0].mxu0
    %829 = vmatprep.mubr.f32.mxu0 0.0
    %830 = vmatmul.mubr.f32.gmra.mrb[0].mxu0 %v752
    %v831 = vpop.f32.mrb[0].mxu0
    %v832 = vadd.f32 0.0, %v831
    %v833 = vpop.f32.mrb[0].mxu0
    %834 = vmatprep.mubr.f32.mxu0 0.0
    %835 = vmatmul.mubr.f32.gmra.mrb[0].mxu0 %v755
    %v836 = vpop.f32.mrb[0].mxu0
    %v837 = vadd.f32 0.0, %v836
    %v838 = vpop.f32.mrb[0].mxu0
    %839 = vmatprep.mubr.f32.mxu0 0.0
    %840 = vmatmul.mubr.f32.gmra.mrb[0].mxu0 %v758
    %v841 = vpop.f32.mrb[0].mxu0
    %v842 = vadd.f32 0.0, %v841
    %v843 = vpop.f32.mrb[0].mxu0
    %844 = vdwg.mxu0
    %v845 = vadd.f32 %v730, %v827
    %v846 = vadd.f32 %v735, %v832
    %v847 = vadd.f32 %v740, %v837
    %v848 = vadd.f32 %v745, %v842
    %v849 = vld [vmem:[%s6] sm:$0xff]
    %v850 = vld [vmem:[%s6 + $0x8] sm:$0xff]
    %v851 = vld [vmem:[%s6 + $0x10] sm:$0xff]
    %v852 = vld [vmem:[%s6 + $0x18] sm:$0xff]
    %854 = vset.pattern.permute.xlu0 0
    %855 = vperm.xlu0 %854, %v849
    %v856 = vpop.permute.xlu0 %855
    %859 = vset.pattern.permute.xlu0 0
    %860 = vperm.xlu0 %859, %v850
    %v861 = vpop.permute.xlu0 %860
    %864 = vset.pattern.permute.xlu0 0
    %865 = vperm.xlu0 %864, %v851
    %v866 = vpop.permute.xlu0 %865
    %869 = vset.pattern.permute.xlu0 0
    %870 = vperm.xlu0 %869, %v852
    %v871 = vpop.permute.xlu0 %870
    %v873 = vadd.f32 %v845, %v856
    %v874 = vadd.f32 %v846, %v861
    %v875 = vadd.f32 %v847, %v866
    %v876 = vadd.f32 %v848, %v871
    %v877 = vmax.f32 %v873, 0.0
    %v878 = vmax.f32 %v874, 0.0
    %v879 = vmax.f32 %v875, 0.0
    %v880 = vmax.f32 %v876, 0.0
    %v881 = vadd.f32 %v229, %v237
    %v882 = vadd.f32 %v230, %v238
    %v884 = vsel %vm553, %v200, 0
    %v887 = vsel %vm553, %v205, 0
    %v890 = vsel %vm553, %v210, 0
    %v893 = vsel %vm553, %v215, 0
    %895 = vmatprep.subr.mxu0 0.0
    %896 = vmatpush1.msra.mxu0 %v881
    %897 = vmatprep.subr.mxu0 0.0
    %898 = vmatpush1.msra.mxu0 %v882
    %899 = vmatprep.subr.mxu0 0.0
    %900 = vmatpush1.msra.mxu0 0.0
    %901 = vmatprep.subr.mxu0 0.0
    %902 = vmatpush1.msra.mxu0 0.0
    %903 = vmatprep.subr.mxu0 0.0
    %904 = vmatpush1.msra.mxu0 0.0
    %905 = vmatprep.subr.mxu0 0.0
    %906 = vmatpush1.msra.mxu0 0.0
    %907 = vmatprep.subr.mxu0 0.0
    %908 = vmatpush1.msra.mxu0 0.0
    %909 = vmatprep.subr.mxu0 0.0
    %910 = vmatpush1.msra.mxu0 0.0
    %911 = vmatprep.subr.mxu0 0.0
    %912 = vmatpush1.msra.mxu0 0.0
    %913 = vmatprep.subr.mxu0 0.0
    %914 = vmatpush1.msra.mxu0 0.0
    %915 = vmatprep.subr.mxu0 0.0
    %916 = vmatpush1.msra.mxu0 0.0
    %917 = vmatprep.subr.mxu0 0.0
    %918 = vmatpush1.msra.mxu0 0.0
    %919 = vmatprep.subr.mxu0 0.0
    %920 = vmatpush1.msra.mxu0 0.0
    %921 = vmatprep.subr.mxu0 0.0
    %922 = vmatpush1.msra.mxu0 0.0
    %923 = vmatprep.subr.mxu0 0.0
    %924 = vmatpush1.msra.mxu0 0.0
    %925 = vmatprep.subr.mxu0 0.0
    %926 = vmatpush1.msra.mxu0 0.0
    %927 = vmatprep.subr.mxu0 0.0
    %928 = vmatpush1.msra.mxu0 0.0
    %929 = vmatprep.subr.mxu0 0.0
    %930 = vmatpush1.msra.mxu0 0.0
    %931 = vmatprep.subr.mxu0 0.0
    %932 = vmatpush1.msra.mxu0 0.0
    %933 = vmatprep.subr.mxu0 0.0
    %934 = vmatpush1.msra.mxu0 0.0
    %935 = vmatprep.subr.mxu0 0.0
    %936 = vmatpush1.msra.mxu0 0.0
    %937 = vmatprep.subr.mxu0 0.0
    %938 = vmatpush1.msra.mxu0 0.0
    %939 = vmatprep.subr.mxu0 0.0
    %940 = vmatpush1.msra.mxu0 0.0
    %941 = vmatprep.subr.mxu0 0.0
    %942 = vmatpush1.msra.mxu0 0.0
    %943 = vmatprep.subr.mxu0 0.0
    %944 = vmatpush1.msra.mxu0 0.0
    %945 = vmatprep.subr.mxu0 0.0
    %946 = vmatpush1.msra.mxu0 0.0
    %947 = vmatprep.subr.mxu0 0.0
    %948 = vmatpush1.msra.mxu0 0.0
    %949 = vmatprep.subr.mxu0 0.0
    %950 = vmatpush1.msra.mxu0 0.0
    %951 = vmatprep.subr.mxu0 0.0
    %952 = vmatpush1.msra.mxu0 0.0
    %953 = vmatprep.subr.mxu0 0.0
    %954 = vmatpush1.msra.mxu0 0.0
    %955 = vmatprep.subr.mxu0 0.0
    %956 = vmatpush1.msra.mxu0 0.0
    %957 = vmatprep.subr.mxu0 0.0
    %958 = vmatpush1.msra.mxu0 0.0
    %959 = vmatprep.mubr.f32.mxu0 0.0
    %960 = vmatmul.mubr.f32.gmra.mrb[0].mxu0 %v884
    %v961 = vpop.f32.mrb[0].mxu0
    %v962 = vadd.f32 0.0, %v961
    %v963 = vpop.f32.mrb[0].mxu0
    %964 = vmatprep.mubr.f32.mxu0 0.0
    %965 = vmatmul.mubr.f32.gmra.mrb[0].mxu0 %v887
    %v966 = vpop.f32.mrb[0].mxu0
    %v967 = vadd.f32 0.0, %v966
    %v968 = vpop.f32.mrb[0].mxu0
    %969 = vmatprep.mubr.f32.mxu0 0.0
    %970 = vmatmul.mubr.f32.gmra.mrb[0].mxu0 %v890
    %v971 = vpop.f32.mrb[0].mxu0
    %v972 = vadd.f32 0.0, %v971
    %v973 = vpop.f32.mrb[0].mxu0
    %974 = vmatprep.mubr.f32.mxu0 0.0
    %975 = vmatmul.mubr.f32.gmra.mrb[0].mxu0 %v893
    %v976 = vpop.f32.mrb[0].mxu0
    %v977 = vadd.f32 0.0, %v976
    %v978 = vpop.f32.mrb[0].mxu0
    %979 = vdwg.mxu0
    %v980 = vadd.s32 %v219, 16
    %v981 = vadd.s32 %v219, 24
    %v982 = vmul.u32 %v980, 2
    %v983 = vmul.u32 %v981, 2
    %vm984 = vcmp.eq.s32.totalorder %v222, %v982
    %vm985 = vcmp.eq.s32.totalorder %v222, %v983
    %v986 = vsel %vm984, 1, 0
    %v987 = vsel %vm985, 1, 0
    %v988 = vcvt.s32.f32 %v986
    %v989 = vcvt.s32.f32 %v987
    %v990 = vadd.s32 %v982, 1
    %v991 = vadd.s32 %v983, 1
    %vm992 = vcmp.eq.s32.totalorder %v222, %v990
    %vm993 = vcmp.eq.s32.totalorder %v222, %v991
    %v994 = vsel %vm992, 1, 0
    %v995 = vsel %vm993, 1, 0
    %v996 = vcvt.s32.f32 %v994
    %v997 = vcvt.s32.f32 %v995
    %v998 = vsub.s32 %v982, 1
    %v999 = vsub.s32 %v983, 1
    %vm1000 = vcmp.eq.s32.totalorder %v222, %v998
    %vm1001 = vcmp.eq.s32.totalorder %v222, %v999
    %v1002 = vsel %vm1000, 1, 0
    %v1003 = vsel %vm1001, 1, 0
    %v1004 = vcvt.s32.f32 %v1002
    %v1005 = vcvt.s32.f32 %v1003
    %v1006 = vld [vmem:[%s7] sm:$0xff]
    %v1007 = vld [vmem:[%s7 + $0x8] sm:$0xff]
    %v1008 = vld [vmem:[%s7 + $0x10] sm:$0xff]
    %v1009 = vld [vmem:[%s7 + $0x18] sm:$0xff]
    %v1010 = vld [vmem:[%s7 + $0x20] sm:$0xff]
    %v1011 = vld [vmem:[%s7 + $0x28] sm:$0xff]
    %v1012 = vld [vmem:[%s7 + $0x30] sm:$0xff]
    %v1013 = vld [vmem:[%s7 + $0x38] sm:$0xff]
    %vm1014 = vcmask 523264
    %v1016 = vsel %vm1014, %v1006, 0
    %v1019 = vsel %vm1014, %v1007, 0
    %v1022 = vsel %vm1014, %v1008, 0
    %v1025 = vsel %vm1014, %v1009, 0
    %v1028 = vsel %vm1014, %v1010, 0
    %v1031 = vsel %vm1014, %v1011, 0
    %v1034 = vsel %vm1014, %v1012, 0
    %v1037 = vsel %vm1014, %v1013, 0
    %1039 = vmatprep.subr.mxu0 0.0
    %1040 = vmatpush1.msra.mxu0 %v962
    %1041 = vmatprep.subr.mxu0 0.0
    %1042 = vmatpush1.msra.mxu0 %v967
    %1043 = vmatprep.subr.mxu0 0.0
    %1044 = vmatpush1.msra.mxu0 %v972
    %1045 = vmatprep.subr.mxu0 0.0
    %1046 = vmatpush1.msra.mxu0 %v977
    %1047 = vmatprep.subr.mxu0 0.0
    %1048 = vmatpush1.msra.mxu0 %v877
    %1049 = vmatprep.subr.mxu0 0.0
    %1050 = vmatpush1.msra.mxu0 %v878
    %1051 = vmatprep.subr.mxu0 0.0
    %1052 = vmatpush1.msra.mxu0 %v879
    %1053 = vmatprep.subr.mxu0 0.0
    %1054 = vmatpush1.msra.mxu0 %v880
    %1055 = vmatprep.subr.mxu0 0.0
    %1056 = vmatpush1.msra.mxu0 0.0
    %1057 = vmatprep.subr.mxu0 0.0
    %1058 = vmatpush1.msra.mxu0 0.0
    %1059 = vmatprep.subr.mxu0 0.0
    %1060 = vmatpush1.msra.mxu0 0.0
    %1061 = vmatprep.subr.mxu0 0.0
    %1062 = vmatpush1.msra.mxu0 0.0
    %1063 = vmatprep.subr.mxu0 0.0
    %1064 = vmatpush1.msra.mxu0 0.0
    %1065 = vmatprep.subr.mxu0 0.0
    %1066 = vmatpush1.msra.mxu0 0.0
    %1067 = vmatprep.subr.mxu0 0.0
    %1068 = vmatpush1.msra.mxu0 0.0
    %1069 = vmatprep.subr.mxu0 0.0
    %1070 = vmatpush1.msra.mxu0 0.0
    %1071 = vmatprep.subr.mxu0 0.0
    %1072 = vmatpush1.msra.mxu0 0.0
    %1073 = vmatprep.subr.mxu0 0.0
    %1074 = vmatpush1.msra.mxu0 0.0
    %1075 = vmatprep.subr.mxu0 0.0
    %1076 = vmatpush1.msra.mxu0 0.0
    %1077 = vmatprep.subr.mxu0 0.0
    %1078 = vmatpush1.msra.mxu0 0.0
    %1079 = vmatprep.subr.mxu0 0.0
    %1080 = vmatpush1.msra.mxu0 0.0
    %1081 = vmatprep.subr.mxu0 0.0
    %1082 = vmatpush1.msra.mxu0 0.0
    %1083 = vmatprep.subr.mxu0 0.0
    %1084 = vmatpush1.msra.mxu0 0.0
    %1085 = vmatprep.subr.mxu0 0.0
    %1086 = vmatpush1.msra.mxu0 0.0
    %1087 = vmatprep.subr.mxu0 0.0
    %1088 = vmatpush1.msra.mxu0 0.0
    %1089 = vmatprep.subr.mxu0 0.0
    %1090 = vmatpush1.msra.mxu0 0.0
    %1091 = vmatprep.subr.mxu0 0.0
    %1092 = vmatpush1.msra.mxu0 0.0
    %1093 = vmatprep.subr.mxu0 0.0
    %1094 = vmatpush1.msra.mxu0 0.0
    %1095 = vmatprep.subr.mxu0 0.0
    %1096 = vmatpush1.msra.mxu0 0.0
    %1097 = vmatprep.subr.mxu0 0.0
    %1098 = vmatpush1.msra.mxu0 0.0
    %1099 = vmatprep.subr.mxu0 0.0
    %1100 = vmatpush1.msra.mxu0 0.0
    %1101 = vmatprep.subr.mxu0 0.0
    %1102 = vmatpush1.msra.mxu0 0.0
    %1103 = vmatprep.mubr.f32.mxu0 0.0
    %1104 = vmatmul.mubr.f32.gmra.mrb[0].mxu0 %v1016
    %v1105 = vpop.f32.mrb[0].mxu0
    %v1106 = vadd.f32 0.0, %v1105
    %v1107 = vpop.f32.mrb[0].mxu0
    %1108 = vmatprep.mubr.f32.mxu0 0.0
    %1109 = vmatmul.mubr.f32.gmra.mrb[0].mxu0 %v1019
    %v1110 = vpop.f32.mrb[0].mxu0
    %v1111 = vadd.f32 0.0, %v1110
    %v1112 = vpop.f32.mrb[0].mxu0
    %1113 = vmatprep.mubr.f32.mxu0 0.0
    %1114 = vmatmul.mubr.f32.gmra.mrb[0].mxu0 %v1022
    %v1115 = vpop.f32.mrb[0].mxu0
    %v1116 = vadd.f32 0.0, %v1115
    %v1117 = vpop.f32.mrb[0].mxu0
    %1118 = vmatprep.mubr.f32.mxu0 0.0
    %1119 = vmatmul.mubr.f32.gmra.mrb[0].mxu0 %v1025
    %v1120 = vpop.f32.mrb[0].mxu0
    %v1121 = vadd.f32 0.0, %v1120
    %v1122 = vpop.f32.mrb[0].mxu0
    %1123 = vmatprep.mubr.f32.mxu0 0.0
    %1124 = vmatmul.mubr.f32.gmra.mrb[0].mxu0 %v1028
    %v1125 = vpop.f32.mrb[0].mxu0
    %v1126 = vadd.f32 0.0, %v1125
    %v1127 = vpop.f32.mrb[0].mxu0
    %1128 = vmatprep.mubr.f32.mxu0 0.0
    %1129 = vmatmul.mubr.f32.gmra.mrb[0].mxu0 %v1031
    %v1130 = vpop.f32.mrb[0].mxu0
    %v1131 = vadd.f32 0.0, %v1130
    %v1132 = vpop.f32.mrb[0].mxu0
    %1133 = vmatprep.mubr.f32.mxu0 0.0
    %1134 = vmatmul.mubr.f32.gmra.mrb[0].mxu0 %v1034
    %v1135 = vpop.f32.mrb[0].mxu0
    %v1136 = vadd.f32 0.0, %v1135
    %v1137 = vpop.f32.mrb[0].mxu0
    %1138 = vmatprep.mubr.f32.mxu0 0.0
    %1139 = vmatmul.mubr.f32.gmra.mrb[0].mxu0 %v1037
    %v1140 = vpop.f32.mrb[0].mxu0
    %v1141 = vadd.f32 0.0, %v1140
    %v1142 = vpop.f32.mrb[0].mxu0
    %1143 = vdwg.mxu0
    %s1144 = scalar_lea.vmem %s7, 64
    %v1145 = vld [vmem:[%s1144] sm:$0xff]
    %v1146 = vld [vmem:[%s1144 + $0x8] sm:$0xff]
    %v1147 = vld [vmem:[%s1144 + $0x10] sm:$0xff]
    %v1148 = vld [vmem:[%s1144 + $0x18] sm:$0xff]
    %v1149 = vld [vmem:[%s1144 + $0x20] sm:$0xff]
    %v1150 = vld [vmem:[%s1144 + $0x28] sm:$0xff]
    %v1151 = vld [vmem:[%s1144 + $0x30] sm:$0xff]
    %v1152 = vld [vmem:[%s1144 + $0x38] sm:$0xff]
    %v1154 = vsel %vm1014, %v1145, 0
    %v1157 = vsel %vm1014, %v1146, 0
    %v1160 = vsel %vm1014, %v1147, 0
    %v1163 = vsel %vm1014, %v1148, 0
    %v1166 = vsel %vm1014, %v1149, 0
    %v1169 = vsel %vm1014, %v1150, 0
    %v1172 = vsel %vm1014, %v1151, 0
    %v1175 = vsel %vm1014, %v1152, 0
    %1177 = vmatprep.subr.mxu0 0.0
    %1178 = vmatpush1.msra.mxu0 %v962
    %1179 = vmatprep.subr.mxu0 0.0
    %1180 = vmatpush1.msra.mxu0 %v967
    %1181 = vmatprep.subr.mxu0 0.0
    %1182 = vmatpush1.msra.mxu0 %v972
    %1183 = vmatprep.subr.mxu0 0.0
    %1184 = vmatpush1.msra.mxu0 %v977
    %1185 = vmatprep.subr.mxu0 0.0
    %1186 = vmatpush1.msra.mxu0 %v877
    %1187 = vmatprep.subr.mxu0 0.0
    %1188 = vmatpush1.msra.mxu0 %v878
    %1189 = vmatprep.subr.mxu0 0.0
    %1190 = vmatpush1.msra.mxu0 %v879
    %1191 = vmatprep.subr.mxu0 0.0
    %1192 = vmatpush1.msra.mxu0 %v880
    %1193 = vmatprep.subr.mxu0 0.0
    %1194 = vmatpush1.msra.mxu0 0.0
    %1195 = vmatprep.subr.mxu0 0.0
    %1196 = vmatpush1.msra.mxu0 0.0
    %1197 = vmatprep.subr.mxu0 0.0
    %1198 = vmatpush1.msra.mxu0 0.0
    %1199 = vmatprep.subr.mxu0 0.0
    %1200 = vmatpush1.msra.mxu0 0.0
    %1201 = vmatprep.subr.mxu0 0.0
    %1202 = vmatpush1.msra.mxu0 0.0
    %1203 = vmatprep.subr.mxu0 0.0
    %1204 = vmatpush1.msra.mxu0 0.0
    %1205 = vmatprep.subr.mxu0 0.0
    %1206 = vmatpush1.msra.mxu0 0.0
    %1207 = vmatprep.subr.mxu0 0.0
    %1208 = vmatpush1.msra.mxu0 0.0
    %1209 = vmatprep.subr.mxu0 0.0
    %1210 = vmatpush1.msra.mxu0 0.0
    %1211 = vmatprep.subr.mxu0 0.0
    %1212 = vmatpush1.msra.mxu0 0.0
    %1213 = vmatprep.subr.mxu0 0.0
    %1214 = vmatpush1.msra.mxu0 0.0
    %1215 = vmatprep.subr.mxu0 0.0
    %1216 = vmatpush1.msra.mxu0 0.0
    %1217 = vmatprep.subr.mxu0 0.0
    %1218 = vmatpush1.msra.mxu0 0.0
    %1219 = vmatprep.subr.mxu0 0.0
    %1220 = vmatpush1.msra.mxu0 0.0
    %1221 = vmatprep.subr.mxu0 0.0
    %1222 = vmatpush1.msra.mxu0 0.0
    %1223 = vmatprep.subr.mxu0 0.0
    %1224 = vmatpush1.msra.mxu0 0.0
    %1225 = vmatprep.subr.mxu0 0.0
    %1226 = vmatpush1.msra.mxu0 0.0
    %1227 = vmatprep.subr.mxu0 0.0
    %1228 = vmatpush1.msra.mxu0 0.0
    %1229 = vmatprep.subr.mxu0 0.0
    %1230 = vmatpush1.msra.mxu0 0.0
    %1231 = vmatprep.subr.mxu0 0.0
    %1232 = vmatpush1.msra.mxu0 0.0
    %1233 = vmatprep.subr.mxu0 0.0
    %1234 = vmatpush1.msra.mxu0 0.0
    %1235 = vmatprep.subr.mxu0 0.0
    %1236 = vmatpush1.msra.mxu0 0.0
    %1237 = vmatprep.subr.mxu0 0.0
    %1238 = vmatpush1.msra.mxu0 0.0
    %1239 = vmatprep.subr.mxu0 0.0
    %1240 = vmatpush1.msra.mxu0 0.0
    %1241 = vmatprep.mubr.f32.mxu0 0.0
    %1242 = vmatmul.mubr.f32.gmra.mrb[0].mxu0 %v1154
    %v1243 = vpop.f32.mrb[0].mxu0
    %v1244 = vadd.f32 0.0, %v1243
    %v1245 = vpop.f32.mrb[0].mxu0
    %1246 = vmatprep.mubr.f32.mxu0 0.0
    %1247 = vmatmul.mubr.f32.gmra.mrb[0].mxu0 %v1157
    %v1248 = vpop.f32.mrb[0].mxu0
    %v1249 = vadd.f32 0.0, %v1248
    %v1250 = vpop.f32.mrb[0].mxu0
    %1251 = vmatprep.mubr.f32.mxu0 0.0
    %1252 = vmatmul.mubr.f32.gmra.mrb[0].mxu0 %v1160
    %v1253 = vpop.f32.mrb[0].mxu0
    %v1254 = vadd.f32 0.0, %v1253
    %v1255 = vpop.f32.mrb[0].mxu0
    %1256 = vmatprep.mubr.f32.mxu0 0.0
    %1257 = vmatmul.mubr.f32.gmra.mrb[0].mxu0 %v1163
    %v1258 = vpop.f32.mrb[0].mxu0
    %v1259 = vadd.f32 0.0, %v1258
    %v1260 = vpop.f32.mrb[0].mxu0
    %1261 = vmatprep.mubr.f32.mxu0 0.0
    %1262 = vmatmul.mubr.f32.gmra.mrb[0].mxu0 %v1166
    %v1263 = vpop.f32.mrb[0].mxu0
    %v1264 = vadd.f32 0.0, %v1263
    %v1265 = vpop.f32.mrb[0].mxu0
    %1266 = vmatprep.mubr.f32.mxu0 0.0
    %1267 = vmatmul.mubr.f32.gmra.mrb[0].mxu0 %v1169
    %v1268 = vpop.f32.mrb[0].mxu0
    %v1269 = vadd.f32 0.0, %v1268
    %v1270 = vpop.f32.mrb[0].mxu0
    %1271 = vmatprep.mubr.f32.mxu0 0.0
    %1272 = vmatmul.mubr.f32.gmra.mrb[0].mxu0 %v1172
    %v1273 = vpop.f32.mrb[0].mxu0
    %v1274 = vadd.f32 0.0, %v1273
    %v1275 = vpop.f32.mrb[0].mxu0
    %1276 = vmatprep.mubr.f32.mxu0 0.0
    %1277 = vmatmul.mubr.f32.gmra.mrb[0].mxu0 %v1175
    %v1278 = vpop.f32.mrb[0].mxu0
    %v1279 = vadd.f32 0.0, %v1278
    %v1280 = vpop.f32.mrb[0].mxu0
    %1281 = vdwg.mxu0
    %s1282 = scalar_lea.vmem %s7, 128
    %v1283 = vld [vmem:[%s1282] sm:$0xff]
    %v1284 = vld [vmem:[%s1282 + $0x8] sm:$0xff]
    %v1285 = vld [vmem:[%s1282 + $0x10] sm:$0xff]
    %v1286 = vld [vmem:[%s1282 + $0x18] sm:$0xff]
    %v1287 = vld [vmem:[%s1282 + $0x20] sm:$0xff]
    %v1288 = vld [vmem:[%s1282 + $0x28] sm:$0xff]
    %v1289 = vld [vmem:[%s1282 + $0x30] sm:$0xff]
    %v1290 = vld [vmem:[%s1282 + $0x38] sm:$0xff]
    %v1292 = vsel %vm1014, %v1283, 0
    %v1295 = vsel %vm1014, %v1284, 0
    %v1298 = vsel %vm1014, %v1285, 0
    %v1301 = vsel %vm1014, %v1286, 0
    %v1304 = vsel %vm1014, %v1287, 0
    %v1307 = vsel %vm1014, %v1288, 0
    %v1310 = vsel %vm1014, %v1289, 0
    %v1313 = vsel %vm1014, %v1290, 0
    %1315 = vmatprep.subr.mxu0 0.0
    %1316 = vmatpush1.msra.mxu0 %v962
    %1317 = vmatprep.subr.mxu0 0.0
    %1318 = vmatpush1.msra.mxu0 %v967
    %1319 = vmatprep.subr.mxu0 0.0
    %1320 = vmatpush1.msra.mxu0 %v972
    %1321 = vmatprep.subr.mxu0 0.0
    %1322 = vmatpush1.msra.mxu0 %v977
    %1323 = vmatprep.subr.mxu0 0.0
    %1324 = vmatpush1.msra.mxu0 %v877
    %1325 = vmatprep.subr.mxu0 0.0
    %1326 = vmatpush1.msra.mxu0 %v878
    %1327 = vmatprep.subr.mxu0 0.0
    %1328 = vmatpush1.msra.mxu0 %v879
    %1329 = vmatprep.subr.mxu0 0.0
    %1330 = vmatpush1.msra.mxu0 %v880
    %1331 = vmatprep.subr.mxu0 0.0
    %1332 = vmatpush1.msra.mxu0 0.0
    %1333 = vmatprep.subr.mxu0 0.0
    %1334 = vmatpush1.msra.mxu0 0.0
    %1335 = vmatprep.subr.mxu0 0.0
    %1336 = vmatpush1.msra.mxu0 0.0
    %1337 = vmatprep.subr.mxu0 0.0
    %1338 = vmatpush1.msra.mxu0 0.0
    %1339 = vmatprep.subr.mxu0 0.0
    %1340 = vmatpush1.msra.mxu0 0.0
    %1341 = vmatprep.subr.mxu0 0.0
    %1342 = vmatpush1.msra.mxu0 0.0
    %1343 = vmatprep.subr.mxu0 0.0
    %1344 = vmatpush1.msra.mxu0 0.0
    %1345 = vmatprep.subr.mxu0 0.0
    %1346 = vmatpush1.msra.mxu0 0.0
    %1347 = vmatprep.subr.mxu0 0.0
    %1348 = vmatpush1.msra.mxu0 0.0
    %1349 = vmatprep.subr.mxu0 0.0
    %1350 = vmatpush1.msra.mxu0 0.0
    %1351 = vmatprep.subr.mxu0 0.0
    %1352 = vmatpush1.msra.mxu0 0.0
    %1353 = vmatprep.subr.mxu0 0.0
    %1354 = vmatpush1.msra.mxu0 0.0
    %1355 = vmatprep.subr.mxu0 0.0
    %1356 = vmatpush1.msra.mxu0 0.0
    %1357 = vmatprep.subr.mxu0 0.0
    %1358 = vmatpush1.msra.mxu0 0.0
    %1359 = vmatprep.subr.mxu0 0.0
    %1360 = vmatpush1.msra.mxu0 0.0
    %1361 = vmatprep.subr.mxu0 0.0
    %1362 = vmatpush1.msra.mxu0 0.0
    %1363 = vmatprep.subr.mxu0 0.0
    %1364 = vmatpush1.msra.mxu0 0.0
    %1365 = vmatprep.subr.mxu0 0.0
    %1366 = vmatpush1.msra.mxu0 0.0
    %1367 = vmatprep.subr.mxu0 0.0
    %1368 = vmatpush1.msra.mxu0 0.0
    %1369 = vmatprep.subr.mxu0 0.0
    %1370 = vmatpush1.msra.mxu0 0.0
    %1371 = vmatprep.subr.mxu0 0.0
    %1372 = vmatpush1.msra.mxu0 0.0
    %1373 = vmatprep.subr.mxu0 0.0
    %1374 = vmatpush1.msra.mxu0 0.0
    %1375 = vmatprep.subr.mxu0 0.0
    %1376 = vmatpush1.msra.mxu0 0.0
    %1377 = vmatprep.subr.mxu0 0.0
    %1378 = vmatpush1.msra.mxu0 0.0
    %1379 = vmatprep.mubr.f32.mxu0 0.0
    %1380 = vmatmul.mubr.f32.gmra.mrb[0].mxu0 %v1292
    %v1381 = vpop.f32.mrb[0].mxu0
    %v1382 = vadd.f32 0.0, %v1381
    %v1383 = vpop.f32.mrb[0].mxu0
    %1384 = vmatprep.mubr.f32.mxu0 0.0
    %1385 = vmatmul.mubr.f32.gmra.mrb[0].mxu0 %v1295
    %v1386 = vpop.f32.mrb[0].mxu0
    %v1387 = vadd.f32 0.0, %v1386
    %v1388 = vpop.f32.mrb[0].mxu0
    %1389 = vmatprep.mubr.f32.mxu0 0.0
    %1390 = vmatmul.mubr.f32.gmra.mrb[0].mxu0 %v1298
    %v1391 = vpop.f32.mrb[0].mxu0
    %v1392 = vadd.f32 0.0, %v1391
    %v1393 = vpop.f32.mrb[0].mxu0
    %1394 = vmatprep.mubr.f32.mxu0 0.0
    %1395 = vmatmul.mubr.f32.gmra.mrb[0].mxu0 %v1301
    %v1396 = vpop.f32.mrb[0].mxu0
    %v1397 = vadd.f32 0.0, %v1396
    %v1398 = vpop.f32.mrb[0].mxu0
    %1399 = vmatprep.mubr.f32.mxu0 0.0
    %1400 = vmatmul.mubr.f32.gmra.mrb[0].mxu0 %v1304
    %v1401 = vpop.f32.mrb[0].mxu0
    %v1402 = vadd.f32 0.0, %v1401
    %v1403 = vpop.f32.mrb[0].mxu0
    %1404 = vmatprep.mubr.f32.mxu0 0.0
    %1405 = vmatmul.mubr.f32.gmra.mrb[0].mxu0 %v1307
    %v1406 = vpop.f32.mrb[0].mxu0
    %v1407 = vadd.f32 0.0, %v1406
    %v1408 = vpop.f32.mrb[0].mxu0
    %1409 = vmatprep.mubr.f32.mxu0 0.0
    %1410 = vmatmul.mubr.f32.gmra.mrb[0].mxu0 %v1310
    %v1411 = vpop.f32.mrb[0].mxu0
    %v1412 = vadd.f32 0.0, %v1411
    %v1413 = vpop.f32.mrb[0].mxu0
    %1414 = vmatprep.mubr.f32.mxu0 0.0
    %1415 = vmatmul.mubr.f32.gmra.mrb[0].mxu0 %v1313
    %v1416 = vpop.f32.mrb[0].mxu0
    %v1417 = vadd.f32 0.0, %v1416
    %v1418 = vpop.f32.mrb[0].mxu0
    %1419 = vdwg.mxu0
    %v1421 = vsel %vm251, %v1382, 0
    %v1424 = vsel %vm251, %v1387, 0
    %v1427 = vsel %vm251, %v1392, 0
    %v1430 = vsel %vm251, %v1397, 0
    %v1433 = vsel %vm251, %v1402, 0
    %v1436 = vsel %vm251, %v1407, 0
    %v1439 = vsel %vm251, %v1412, 0
    %v1442 = vsel %vm251, %v1417, 0
    %1444 = vmatprep.subr.mxu0 0.0
    %1445 = vmatpush1.msra.mxu0 %v237
    %1446 = vmatprep.subr.mxu0 0.0
    %1447 = vmatpush1.msra.mxu0 %v238
    %1448 = vmatprep.subr.mxu0 0.0
    %1449 = vmatpush1.msra.mxu0 %v996
    %1450 = vmatprep.subr.mxu0 0.0
    %1451 = vmatpush1.msra.mxu0 %v997
    %1452 = vmatprep.subr.mxu0 0.0
    %1453 = vmatpush1.msra.mxu0 0.0
    %1454 = vmatprep.subr.mxu0 0.0
    %1455 = vmatpush1.msra.mxu0 0.0
    %1456 = vmatprep.subr.mxu0 0.0
    %1457 = vmatpush1.msra.mxu0 0.0
    %1458 = vmatprep.subr.mxu0 0.0
    %1459 = vmatpush1.msra.mxu0 0.0
    %1460 = vmatprep.subr.mxu0 0.0
    %1461 = vmatpush1.msra.mxu0 0.0
    %1462 = vmatprep.subr.mxu0 0.0
    %1463 = vmatpush1.msra.mxu0 0.0
    %1464 = vmatprep.subr.mxu0 0.0
    %1465 = vmatpush1.msra.mxu0 0.0
    %1466 = vmatprep.subr.mxu0 0.0
    %1467 = vmatpush1.msra.mxu0 0.0
    %1468 = vmatprep.subr.mxu0 0.0
    %1469 = vmatpush1.msra.mxu0 0.0
    %1470 = vmatprep.subr.mxu0 0.0
    %1471 = vmatpush1.msra.mxu0 0.0
    %1472 = vmatprep.subr.mxu0 0.0
    %1473 = vmatpush1.msra.mxu0 0.0
    %1474 = vmatprep.subr.mxu0 0.0
    %1475 = vmatpush1.msra.mxu0 0.0
    %1476 = vmatprep.subr.mxu0 0.0
    %1477 = vmatpush1.msra.mxu0 0.0
    %1478 = vmatprep.subr.mxu0 0.0
    %1479 = vmatpush1.msra.mxu0 0.0
    %1480 = vmatprep.subr.mxu0 0.0
    %1481 = vmatpush1.msra.mxu0 0.0
    %1482 = vmatprep.subr.mxu0 0.0
    %1483 = vmatpush1.msra.mxu0 0.0
    %1484 = vmatprep.subr.mxu0 0.0
    %1485 = vmatpush1.msra.mxu0 0.0
    %1486 = vmatprep.subr.mxu0 0.0
    %1487 = vmatpush1.msra.mxu0 0.0
    %1488 = vmatprep.subr.mxu0 0.0
    %1489 = vmatpush1.msra.mxu0 0.0
    %1490 = vmatprep.subr.mxu0 0.0
    %1491 = vmatpush1.msra.mxu0 0.0
    %1492 = vmatprep.subr.mxu0 0.0
    %1493 = vmatpush1.msra.mxu0 0.0
    %1494 = vmatprep.subr.mxu0 0.0
    %1495 = vmatpush1.msra.mxu0 0.0
    %1496 = vmatprep.subr.mxu0 0.0
    %1497 = vmatpush1.msra.mxu0 0.0
    %1498 = vmatprep.subr.mxu0 0.0
    %1499 = vmatpush1.msra.mxu0 0.0
    %1500 = vmatprep.subr.mxu0 0.0
    %1501 = vmatpush1.msra.mxu0 0.0
    %1502 = vmatprep.subr.mxu0 0.0
    %1503 = vmatpush1.msra.mxu0 0.0
    %1504 = vmatprep.subr.mxu0 0.0
    %1505 = vmatpush1.msra.mxu0 0.0
    %1506 = vmatprep.subr.mxu0 0.0
    %1507 = vmatpush1.msra.mxu0 0.0
    %1508 = vmatprep.mubr.f32.mxu0 0.0
    %1509 = vmatmul.mubr.f32.gmra.mrb[0].mxu0 %v1421
    %v1510 = vpop.f32.mrb[0].mxu0
    %v1511 = vadd.f32 0.0, %v1510
    %v1512 = vpop.f32.mrb[0].mxu0
    %1513 = vmatprep.mubr.f32.mxu0 0.0
    %1514 = vmatmul.mubr.f32.gmra.mrb[0].mxu0 %v1424
    %v1515 = vpop.f32.mrb[0].mxu0
    %v1516 = vadd.f32 0.0, %v1515
    %v1517 = vpop.f32.mrb[0].mxu0
    %1518 = vmatprep.mubr.f32.mxu0 0.0
    %1519 = vmatmul.mubr.f32.gmra.mrb[0].mxu0 %v1427
    %v1520 = vpop.f32.mrb[0].mxu0
    %v1521 = vadd.f32 0.0, %v1520
    %v1522 = vpop.f32.mrb[0].mxu0
    %1523 = vmatprep.mubr.f32.mxu0 0.0
    %1524 = vmatmul.mubr.f32.gmra.mrb[0].mxu0 %v1430
    %v1525 = vpop.f32.mrb[0].mxu0
    %v1526 = vadd.f32 0.0, %v1525
    %v1527 = vpop.f32.mrb[0].mxu0
    %1528 = vmatprep.mubr.f32.mxu0 0.0
    %1529 = vmatmul.mubr.f32.gmra.mrb[0].mxu0 %v1433
    %v1530 = vpop.f32.mrb[0].mxu0
    %v1531 = vadd.f32 0.0, %v1530
    %v1532 = vpop.f32.mrb[0].mxu0
    %1533 = vmatprep.mubr.f32.mxu0 0.0
    %1534 = vmatmul.mubr.f32.gmra.mrb[0].mxu0 %v1436
    %v1535 = vpop.f32.mrb[0].mxu0
    %v1536 = vadd.f32 0.0, %v1535
    %v1537 = vpop.f32.mrb[0].mxu0
    %1538 = vmatprep.mubr.f32.mxu0 0.0
    %1539 = vmatmul.mubr.f32.gmra.mrb[0].mxu0 %v1439
    %v1540 = vpop.f32.mrb[0].mxu0
    %v1541 = vadd.f32 0.0, %v1540
    %v1542 = vpop.f32.mrb[0].mxu0
    %1543 = vmatprep.mubr.f32.mxu0 0.0
    %1544 = vmatmul.mubr.f32.gmra.mrb[0].mxu0 %v1442
    %v1545 = vpop.f32.mrb[0].mxu0
    %v1546 = vadd.f32 0.0, %v1545
    %v1547 = vpop.f32.mrb[0].mxu0
    %1548 = vdwg.mxu0
    %v1550 = vsel %vm251, %v1244, 0
    %v1553 = vsel %vm251, %v1249, 0
    %v1556 = vsel %vm251, %v1254, 0
    %v1559 = vsel %vm251, %v1259, 0
    %v1562 = vsel %vm251, %v1264, 0
    %v1565 = vsel %vm251, %v1269, 0
    %v1568 = vsel %vm251, %v1274, 0
    %v1571 = vsel %vm251, %v1279, 0
    %1573 = vmatprep.subr.mxu0 0.0
    %1574 = vmatpush1.msra.mxu0 %v229
    %1575 = vmatprep.subr.mxu0 0.0
    %1576 = vmatpush1.msra.mxu0 %v230
    %1577 = vmatprep.subr.mxu0 0.0
    %1578 = vmatpush1.msra.mxu0 %v988
    %1579 = vmatprep.subr.mxu0 0.0
    %1580 = vmatpush1.msra.mxu0 %v989
    %1581 = vmatprep.subr.mxu0 0.0
    %1582 = vmatpush1.msra.mxu0 0.0
    %1583 = vmatprep.subr.mxu0 0.0
    %1584 = vmatpush1.msra.mxu0 0.0
    %1585 = vmatprep.subr.mxu0 0.0
    %1586 = vmatpush1.msra.mxu0 0.0
    %1587 = vmatprep.subr.mxu0 0.0
    %1588 = vmatpush1.msra.mxu0 0.0
    %1589 = vmatprep.subr.mxu0 0.0
    %1590 = vmatpush1.msra.mxu0 0.0
    %1591 = vmatprep.subr.mxu0 0.0
    %1592 = vmatpush1.msra.mxu0 0.0
    %1593 = vmatprep.subr.mxu0 0.0
    %1594 = vmatpush1.msra.mxu0 0.0
    %1595 = vmatprep.subr.mxu0 0.0
    %1596 = vmatpush1.msra.mxu0 0.0
    %1597 = vmatprep.subr.mxu0 0.0
    %1598 = vmatpush1.msra.mxu0 0.0
    %1599 = vmatprep.subr.mxu0 0.0
    %1600 = vmatpush1.msra.mxu0 0.0
    %1601 = vmatprep.subr.mxu0 0.0
    %1602 = vmatpush1.msra.mxu0 0.0
    %1603 = vmatprep.subr.mxu0 0.0
    %1604 = vmatpush1.msra.mxu0 0.0
    %1605 = vmatprep.subr.mxu0 0.0
    %1606 = vmatpush1.msra.mxu0 0.0
    %1607 = vmatprep.subr.mxu0 0.0
    %1608 = vmatpush1.msra.mxu0 0.0
    %1609 = vmatprep.subr.mxu0 0.0
    %1610 = vmatpush1.msra.mxu0 0.0
    %1611 = vmatprep.subr.mxu0 0.0
    %1612 = vmatpush1.msra.mxu0 0.0
    %1613 = vmatprep.subr.mxu0 0.0
    %1614 = vmatpush1.msra.mxu0 0.0
    %1615 = vmatprep.subr.mxu0 0.0
    %1616 = vmatpush1.msra.mxu0 0.0
    %1617 = vmatprep.subr.mxu0 0.0
    %1618 = vmatpush1.msra.mxu0 0.0
    %1619 = vmatprep.subr.mxu0 0.0
    %1620 = vmatpush1.msra.mxu0 0.0
    %1621 = vmatprep.subr.mxu0 0.0
    %1622 = vmatpush1.msra.mxu0 0.0
    %1623 = vmatprep.subr.mxu0 0.0
    %1624 = vmatpush1.msra.mxu0 0.0
    %1625 = vmatprep.subr.mxu0 0.0
    %1626 = vmatpush1.msra.mxu0 0.0
    %1627 = vmatprep.subr.mxu0 0.0
    %1628 = vmatpush1.msra.mxu0 0.0
    %1629 = vmatprep.subr.mxu0 0.0
    %1630 = vmatpush1.msra.mxu0 0.0
    %1631 = vmatprep.subr.mxu0 0.0
    %1632 = vmatpush1.msra.mxu0 0.0
    %1633 = vmatprep.subr.mxu0 0.0
    %1634 = vmatpush1.msra.mxu0 0.0
    %1635 = vmatprep.subr.mxu0 0.0
    %1636 = vmatpush1.msra.mxu0 0.0
    %1637 = vmatprep.mubr.f32.mxu0 0.0
    %1638 = vmatmul.mubr.f32.gmra.mrb[0].mxu0 %v1550
    %v1639 = vpop.f32.mrb[0].mxu0
    %v1640 = vadd.f32 %v1511, %v1639
    %v1641 = vpop.f32.mrb[0].mxu0
    %1642 = vmatprep.mubr.f32.mxu0 0.0
    %1643 = vmatmul.mubr.f32.gmra.mrb[0].mxu0 %v1553
    %v1644 = vpop.f32.mrb[0].mxu0
    %v1645 = vadd.f32 %v1516, %v1644
    %v1646 = vpop.f32.mrb[0].mxu0
    %1647 = vmatprep.mubr.f32.mxu0 0.0
    %1648 = vmatmul.mubr.f32.gmra.mrb[0].mxu0 %v1556
    %v1649 = vpop.f32.mrb[0].mxu0
    %v1650 = vadd.f32 %v1521, %v1649
    %v1651 = vpop.f32.mrb[0].mxu0
    %1652 = vmatprep.mubr.f32.mxu0 0.0
    %1653 = vmatmul.mubr.f32.gmra.mrb[0].mxu0 %v1559
    %v1654 = vpop.f32.mrb[0].mxu0
    %v1655 = vadd.f32 %v1526, %v1654
    %v1656 = vpop.f32.mrb[0].mxu0
    %1657 = vmatprep.mubr.f32.mxu0 0.0
    %1658 = vmatmul.mubr.f32.gmra.mrb[0].mxu0 %v1562
    %v1659 = vpop.f32.mrb[0].mxu0
    %v1660 = vadd.f32 %v1531, %v1659
    %v1661 = vpop.f32.mrb[0].mxu0
    %1662 = vmatprep.mubr.f32.mxu0 0.0
    %1663 = vmatmul.mubr.f32.gmra.mrb[0].mxu0 %v1565
    %v1664 = vpop.f32.mrb[0].mxu0
    %v1665 = vadd.f32 %v1536, %v1664
    %v1666 = vpop.f32.mrb[0].mxu0
    %1667 = vmatprep.mubr.f32.mxu0 0.0
    %1668 = vmatmul.mubr.f32.gmra.mrb[0].mxu0 %v1568
    %v1669 = vpop.f32.mrb[0].mxu0
    %v1670 = vadd.f32 %v1541, %v1669
    %v1671 = vpop.f32.mrb[0].mxu0
    %1672 = vmatprep.mubr.f32.mxu0 0.0
    %1673 = vmatmul.mubr.f32.gmra.mrb[0].mxu0 %v1571
    %v1674 = vpop.f32.mrb[0].mxu0
    %v1675 = vadd.f32 %v1546, %v1674
    %v1676 = vpop.f32.mrb[0].mxu0
    %1677 = vdwg.mxu0
    %v1679 = vsel %vm251, %v1106, 0
    %v1682 = vsel %vm251, %v1111, 0
    %v1685 = vsel %vm251, %v1116, 0
    %v1688 = vsel %vm251, %v1121, 0
    %v1691 = vsel %vm251, %v1126, 0
    %v1694 = vsel %vm251, %v1131, 0
    %v1697 = vsel %vm251, %v1136, 0
    %v1700 = vsel %vm251, %v1141, 0
    %1702 = vmatprep.subr.mxu0 0.0
    %1703 = vmatpush1.msra.mxu0 %v245
    %1704 = vmatprep.subr.mxu0 0.0
    %1705 = vmatpush1.msra.mxu0 %v246
    %1706 = vmatprep.subr.mxu0 0.0
    %1707 = vmatpush1.msra.mxu0 %v1004
    %1708 = vmatprep.subr.mxu0 0.0
    %1709 = vmatpush1.msra.mxu0 %v1005
    %1710 = vmatprep.subr.mxu0 0.0
    %1711 = vmatpush1.msra.mxu0 0.0
    %1712 = vmatprep.subr.mxu0 0.0
    %1713 = vmatpush1.msra.mxu0 0.0
    %1714 = vmatprep.subr.mxu0 0.0
    %1715 = vmatpush1.msra.mxu0 0.0
    %1716 = vmatprep.subr.mxu0 0.0
    %1717 = vmatpush1.msra.mxu0 0.0
    %1718 = vmatprep.subr.mxu0 0.0
    %1719 = vmatpush1.msra.mxu0 0.0
    %1720 = vmatprep.subr.mxu0 0.0
    %1721 = vmatpush1.msra.mxu0 0.0
    %1722 = vmatprep.subr.mxu0 0.0
    %1723 = vmatpush1.msra.mxu0 0.0
    %1724 = vmatprep.subr.mxu0 0.0
    %1725 = vmatpush1.msra.mxu0 0.0
    %1726 = vmatprep.subr.mxu0 0.0
    %1727 = vmatpush1.msra.mxu0 0.0
    %1728 = vmatprep.subr.mxu0 0.0
    %1729 = vmatpush1.msra.mxu0 0.0
    %1730 = vmatprep.subr.mxu0 0.0
    %1731 = vmatpush1.msra.mxu0 0.0
    %1732 = vmatprep.subr.mxu0 0.0
    %1733 = vmatpush1.msra.mxu0 0.0
    %1734 = vmatprep.subr.mxu0 0.0
    %1735 = vmatpush1.msra.mxu0 0.0
    %1736 = vmatprep.subr.mxu0 0.0
    %1737 = vmatpush1.msra.mxu0 0.0
    %1738 = vmatprep.subr.mxu0 0.0
    %1739 = vmatpush1.msra.mxu0 0.0
    %1740 = vmatprep.subr.mxu0 0.0
    %1741 = vmatpush1.msra.mxu0 0.0
    %1742 = vmatprep.subr.mxu0 0.0
    %1743 = vmatpush1.msra.mxu0 0.0
    %1744 = vmatprep.subr.mxu0 0.0
    %1745 = vmatpush1.msra.mxu0 0.0
    %1746 = vmatprep.subr.mxu0 0.0
    %1747 = vmatpush1.msra.mxu0 0.0
    %1748 = vmatprep.subr.mxu0 0.0
    %1749 = vmatpush1.msra.mxu0 0.0
    %1750 = vmatprep.subr.mxu0 0.0
    %1751 = vmatpush1.msra.mxu0 0.0
    %1752 = vmatprep.subr.mxu0 0.0
    %1753 = vmatpush1.msra.mxu0 0.0
    %1754 = vmatprep.subr.mxu0 0.0
    %1755 = vmatpush1.msra.mxu0 0.0
    %1756 = vmatprep.subr.mxu0 0.0
    %1757 = vmatpush1.msra.mxu0 0.0
    %1758 = vmatprep.subr.mxu0 0.0
    %1759 = vmatpush1.msra.mxu0 0.0
    %1760 = vmatprep.subr.mxu0 0.0
    %1761 = vmatpush1.msra.mxu0 0.0
    %1762 = vmatprep.subr.mxu0 0.0
    %1763 = vmatpush1.msra.mxu0 0.0
    %1764 = vmatprep.subr.mxu0 0.0
    %1765 = vmatpush1.msra.mxu0 0.0
    %1766 = vmatprep.mubr.f32.mxu0 0.0
    %1767 = vmatmul.mubr.f32.gmra.mrb[0].mxu0 %v1679
    %v1768 = vpop.f32.mrb[0].mxu0
    %v1769 = vadd.f32 0.0, %v1768
    %v1770 = vpop.f32.mrb[0].mxu0
    %1771 = vmatprep.mubr.f32.mxu0 0.0
    %1772 = vmatmul.mubr.f32.gmra.mrb[0].mxu0 %v1682
    %v1773 = vpop.f32.mrb[0].mxu0
    %v1774 = vadd.f32 0.0, %v1773
    %v1775 = vpop.f32.mrb[0].mxu0
    %1776 = vmatprep.mubr.f32.mxu0 0.0
    %1777 = vmatmul.mubr.f32.gmra.mrb[0].mxu0 %v1685
    %v1778 = vpop.f32.mrb[0].mxu0
    %v1779 = vadd.f32 0.0, %v1778
    %v1780 = vpop.f32.mrb[0].mxu0
    %1781 = vmatprep.mubr.f32.mxu0 0.0
    %1782 = vmatmul.mubr.f32.gmra.mrb[0].mxu0 %v1688
    %v1783 = vpop.f32.mrb[0].mxu0
    %v1784 = vadd.f32 0.0, %v1783
    %v1785 = vpop.f32.mrb[0].mxu0
    %1786 = vmatprep.mubr.f32.mxu0 0.0
    %1787 = vmatmul.mubr.f32.gmra.mrb[0].mxu0 %v1691
    %v1788 = vpop.f32.mrb[0].mxu0
    %v1789 = vadd.f32 0.0, %v1788
    %v1790 = vpop.f32.mrb[0].mxu0
    %1791 = vmatprep.mubr.f32.mxu0 0.0
    %1792 = vmatmul.mubr.f32.gmra.mrb[0].mxu0 %v1694
    %v1793 = vpop.f32.mrb[0].mxu0
    %v1794 = vadd.f32 0.0, %v1793
    %v1795 = vpop.f32.mrb[0].mxu0
    %1796 = vmatprep.mubr.f32.mxu0 0.0
    %1797 = vmatmul.mubr.f32.gmra.mrb[0].mxu0 %v1697
    %v1798 = vpop.f32.mrb[0].mxu0
    %v1799 = vadd.f32 0.0, %v1798
    %v1800 = vpop.f32.mrb[0].mxu0
    %1801 = vmatprep.mubr.f32.mxu0 0.0
    %1802 = vmatmul.mubr.f32.gmra.mrb[0].mxu0 %v1700
    %v1803 = vpop.f32.mrb[0].mxu0
    %v1804 = vadd.f32 0.0, %v1803
    %v1805 = vpop.f32.mrb[0].mxu0
    %1806 = vdwg.mxu0
    %v1807 = vadd.f32 %v1640, %v1769
    %v1808 = vadd.f32 %v1645, %v1774
    %v1809 = vadd.f32 %v1650, %v1779
    %v1810 = vadd.f32 %v1655, %v1784
    %v1811 = vadd.f32 %v1660, %v1789
    %v1812 = vadd.f32 %v1665, %v1794
    %v1813 = vadd.f32 %v1670, %v1799
    %v1814 = vadd.f32 %v1675, %v1804
    %v1815 = vld [vmem:[%s8] sm:$0xff]
    %v1816 = vld [vmem:[%s8 + $0x8] sm:$0xff]
    %v1817 = vld [vmem:[%s8 + $0x10] sm:$0xff]
    %v1818 = vld [vmem:[%s8 + $0x18] sm:$0xff]
    %v1819 = vld [vmem:[%s8 + $0x20] sm:$0xff]
    %v1820 = vld [vmem:[%s8 + $0x28] sm:$0xff]
    %v1821 = vld [vmem:[%s8 + $0x30] sm:$0xff]
    %v1822 = vld [vmem:[%s8 + $0x38] sm:$0xff]
    %1824 = vset.pattern.permute.xlu0 0
    %1825 = vperm.xlu0 %1824, %v1815
    %v1826 = vpop.permute.xlu0 %1825
    %1829 = vset.pattern.permute.xlu0 0
    %1830 = vperm.xlu0 %1829, %v1816
    %v1831 = vpop.permute.xlu0 %1830
    %1834 = vset.pattern.permute.xlu0 0
    %1835 = vperm.xlu0 %1834, %v1817
    %v1836 = vpop.permute.xlu0 %1835
    %1839 = vset.pattern.permute.xlu0 0
    %1840 = vperm.xlu0 %1839, %v1818
    %v1841 = vpop.permute.xlu0 %1840
    %1844 = vset.pattern.permute.xlu0 0
    %1845 = vperm.xlu0 %1844, %v1819
    %v1846 = vpop.permute.xlu0 %1845
    %1849 = vset.pattern.permute.xlu0 0
    %1850 = vperm.xlu0 %1849, %v1820
    %v1851 = vpop.permute.xlu0 %1850
    %1854 = vset.pattern.permute.xlu0 0
    %1855 = vperm.xlu0 %1854, %v1821
    %v1856 = vpop.permute.xlu0 %1855
    %1859 = vset.pattern.permute.xlu0 0
    %1860 = vperm.xlu0 %1859, %v1822
    %v1861 = vpop.permute.xlu0 %1860
    %v1863 = vadd.f32 %v1807, %v1826
    %v1864 = vadd.f32 %v1808, %v1831
    %v1865 = vadd.f32 %v1809, %v1836
    %v1866 = vadd.f32 %v1810, %v1841
    %v1867 = vadd.f32 %v1811, %v1846
    %v1868 = vadd.f32 %v1812, %v1851
    %v1869 = vadd.f32 %v1813, %v1856
    %v1870 = vadd.f32 %v1814, %v1861
    %v1871 = vmax.f32 %v1863, 0.0
    %v1872 = vmax.f32 %v1864, 0.0
    %v1873 = vmax.f32 %v1865, 0.0
    %v1874 = vmax.f32 %v1866, 0.0
    %v1875 = vmax.f32 %v1867, 0.0
    %v1876 = vmax.f32 %v1868, 0.0
    %v1877 = vmax.f32 %v1869, 0.0
    %v1878 = vmax.f32 %v1870, 0.0
    %v1879 = vadd.f32 %v988, %v996
    %v1880 = vadd.f32 %v989, %v997
    %v1882 = vsel %vm251, %v962, 0
    %v1885 = vsel %vm251, %v967, 0
    %v1888 = vsel %vm251, %v972, 0
    %v1891 = vsel %vm251, %v977, 0
    %v1894 = vsel %vm251, %v877, 0
    %v1897 = vsel %vm251, %v878, 0
    %v1900 = vsel %vm251, %v879, 0
    %v1903 = vsel %vm251, %v880, 0
    %1905 = vmatprep.subr.mxu0 0.0
    %1906 = vmatpush1.msra.mxu0 %v881
    %1907 = vmatprep.subr.mxu0 0.0
    %1908 = vmatpush1.msra.mxu0 %v882
    %1909 = vmatprep.subr.mxu0 0.0
    %1910 = vmatpush1.msra.mxu0 %v1879
    %1911 = vmatprep.subr.mxu0 0.0
    %1912 = vmatpush1.msra.mxu0 %v1880
    %1913 = vmatprep.subr.mxu0 0.0
    %1914 = vmatpush1.msra.mxu0 0.0
    %1915 = vmatprep.subr.mxu0 0.0
    %1916 = vmatpush1.msra.mxu0 0.0
    %1917 = vmatprep.subr.mxu0 0.0
    %1918 = vmatpush1.msra.mxu0 0.0
    %1919 = vmatprep.subr.mxu0 0.0
    %1920 = vmatpush1.msra.mxu0 0.0
    %1921 = vmatprep.subr.mxu0 0.0
    %1922 = vmatpush1.msra.mxu0 0.0
    %1923 = vmatprep.subr.mxu0 0.0
    %1924 = vmatpush1.msra.mxu0 0.0
    %1925 = vmatprep.subr.mxu0 0.0
    %1926 = vmatpush1.msra.mxu0 0.0
    %1927 = vmatprep.subr.mxu0 0.0
    %1928 = vmatpush1.msra.mxu0 0.0
    %1929 = vmatprep.subr.mxu0 0.0
    %1930 = vmatpush1.msra.mxu0 0.0
    %1931 = vmatprep.subr.mxu0 0.0
    %1932 = vmatpush1.msra.mxu0 0.0
    %1933 = vmatprep.subr.mxu0 0.0
    %1934 = vmatpush1.msra.mxu0 0.0
    %1935 = vmatprep.subr.mxu0 0.0
    %1936 = vmatpush1.msra.mxu0 0.0
    %1937 = vmatprep.subr.mxu0 0.0
    %1938 = vmatpush1.msra.mxu0 0.0
    %1939 = vmatprep.subr.mxu0 0.0
    %1940 = vmatpush1.msra.mxu0 0.0
    %1941 = vmatprep.subr.mxu0 0.0
    %1942 = vmatpush1.msra.mxu0 0.0
    %1943 = vmatprep.subr.mxu0 0.0
    %1944 = vmatpush1.msra.mxu0 0.0
    %1945 = vmatprep.subr.mxu0 0.0
    %1946 = vmatpush1.msra.mxu0 0.0
    %1947 = vmatprep.subr.mxu0 0.0
    %1948 = vmatpush1.msra.mxu0 0.0
    %1949 = vmatprep.subr.mxu0 0.0
    %1950 = vmatpush1.msra.mxu0 0.0
    %1951 = vmatprep.subr.mxu0 0.0
    %1952 = vmatpush1.msra.mxu0 0.0
    %1953 = vmatprep.subr.mxu0 0.0
    %1954 = vmatpush1.msra.mxu0 0.0
    %1955 = vmatprep.subr.mxu0 0.0
    %1956 = vmatpush1.msra.mxu0 0.0
    %1957 = vmatprep.subr.mxu0 0.0
    %1958 = vmatpush1.msra.mxu0 0.0
    %1959 = vmatprep.subr.mxu0 0.0
    %1960 = vmatpush1.msra.mxu0 0.0
    %1961 = vmatprep.subr.mxu0 0.0
    %1962 = vmatpush1.msra.mxu0 0.0
    %1963 = vmatprep.subr.mxu0 0.0
    %1964 = vmatpush1.msra.mxu0 0.0
    %1965 = vmatprep.subr.mxu0 0.0
    %1966 = vmatpush1.msra.mxu0 0.0
    %1967 = vmatprep.subr.mxu0 0.0
    %1968 = vmatpush1.msra.mxu0 0.0
    %1969 = vmatprep.mubr.f32.mxu0 0.0
    %1970 = vmatmul.mubr.f32.gmra.mrb[0].mxu0 %v1882
    %v1971 = vpop.f32.mrb[0].mxu0
    %v1972 = vadd.f32 0.0, %v1971
    %v1973 = vpop.f32.mrb[0].mxu0
    %1974 = vmatprep.mubr.f32.mxu0 0.0
    %1975 = vmatmul.mubr.f32.gmra.mrb[0].mxu0 %v1885
    %v1976 = vpop.f32.mrb[0].mxu0
    %v1977 = vadd.f32 0.0, %v1976
    %v1978 = vpop.f32.mrb[0].mxu0
    %1979 = vmatprep.mubr.f32.mxu0 0.0
    %1980 = vmatmul.mubr.f32.gmra.mrb[0].mxu0 %v1888
    %v1981 = vpop.f32.mrb[0].mxu0
    %v1982 = vadd.f32 0.0, %v1981
    %v1983 = vpop.f32.mrb[0].mxu0
    %1984 = vmatprep.mubr.f32.mxu0 0.0
    %1985 = vmatmul.mubr.f32.gmra.mrb[0].mxu0 %v1891
    %v1986 = vpop.f32.mrb[0].mxu0
    %v1987 = vadd.f32 0.0, %v1986
    %v1988 = vpop.f32.mrb[0].mxu0
    %1989 = vmatprep.mubr.f32.mxu0 0.0
    %1990 = vmatmul.mubr.f32.gmra.mrb[0].mxu0 %v1894
    %v1991 = vpop.f32.mrb[0].mxu0
    %v1992 = vadd.f32 0.0, %v1991
    %v1993 = vpop.f32.mrb[0].mxu0
    %1994 = vmatprep.mubr.f32.mxu0 0.0
    %1995 = vmatmul.mubr.f32.gmra.mrb[0].mxu0 %v1897
    %v1996 = vpop.f32.mrb[0].mxu0
    %v1997 = vadd.f32 0.0, %v1996
    %v1998 = vpop.f32.mrb[0].mxu0
    %1999 = vmatprep.mubr.f32.mxu0 0.0
    %2000 = vmatmul.mubr.f32.gmra.mrb[0].mxu0 %v1900
    %v2001 = vpop.f32.mrb[0].mxu0
    %v2002 = vadd.f32 0.0, %v2001
    %v2003 = vpop.f32.mrb[0].mxu0
    %2004 = vmatprep.mubr.f32.mxu0 0.0
    %2005 = vmatmul.mubr.f32.gmra.mrb[0].mxu0 %v1903
    %v2006 = vpop.f32.mrb[0].mxu0
    %v2007 = vadd.f32 0.0, %v2006
    %v2008 = vpop.f32.mrb[0].mxu0
    %2009 = vdwg.mxu0
    %v2010 = vadd.s32 %v219, 32
    %v2011 = vadd.s32 %v219, 40
    %v2012 = vadd.s32 %v219, 48
    %v2013 = vadd.s32 %v219, 56
    %v2014 = vmul.u32 %v2010, 2
    %v2015 = vmul.u32 %v2011, 2
    %v2016 = vmul.u32 %v2012, 2
    %v2017 = vmul.u32 %v2013, 2
    %vm2018 = vcmp.eq.s32.totalorder %v222, %v2014
    %vm2019 = vcmp.eq.s32.totalorder %v222, %v2015
    %vm2020 = vcmp.eq.s32.totalorder %v222, %v2016
    %vm2021 = vcmp.eq.s32.totalorder %v222, %v2017
    %v2022 = vsel %vm2018, 1, 0
    %v2023 = vsel %vm2019, 1, 0
    %v2024 = vsel %vm2020, 1, 0
    %v2025 = vsel %vm2021, 1, 0
    %v2026 = vcvt.s32.f32 %v2022
    %v2027 = vcvt.s32.f32 %v2023
    %v2028 = vcvt.s32.f32 %v2024
    %v2029 = vcvt.s32.f32 %v2025
    %v2030 = vadd.s32 %v2014, 1
    %v2031 = vadd.s32 %v2015, 1
    %v2032 = vadd.s32 %v2016, 1
    %v2033 = vadd.s32 %v2017, 1
    %vm2034 = vcmp.eq.s32.totalorder %v222, %v2030
    %vm2035 = vcmp.eq.s32.totalorder %v222, %v2031
    %vm2036 = vcmp.eq.s32.totalorder %v222, %v2032
    %vm2037 = vcmp.eq.s32.totalorder %v222, %v2033
    %v2038 = vsel %vm2034, 1, 0
    %v2039 = vsel %vm2035, 1, 0
    %v2040 = vsel %vm2036, 1, 0
    %v2041 = vsel %vm2037, 1, 0
    %v2042 = vcvt.s32.f32 %v2038
    %v2043 = vcvt.s32.f32 %v2039
    %v2044 = vcvt.s32.f32 %v2040
    %v2045 = vcvt.s32.f32 %v2041
    %v2046 = vsub.s32 %v2014, 1
    %v2047 = vsub.s32 %v2015, 1
    %v2048 = vsub.s32 %v2016, 1
    %v2049 = vsub.s32 %v2017, 1
    %vm2050 = vcmp.eq.s32.totalorder %v222, %v2046
    %vm2051 = vcmp.eq.s32.totalorder %v222, %v2047
    %vm2052 = vcmp.eq.s32.totalorder %v222, %v2048
    %vm2053 = vcmp.eq.s32.totalorder %v222, %v2049
    %v2054 = vsel %vm2050, 1, 0
    %v2055 = vsel %vm2051, 1, 0
    %v2056 = vsel %vm2052, 1, 0
    %v2057 = vsel %vm2053, 1, 0
    %v2058 = vcvt.s32.f32 %v2054
    %v2059 = vcvt.s32.f32 %v2055
    %v2060 = vcvt.s32.f32 %v2056
    %v2061 = vcvt.s32.f32 %v2057
    %v2062 = vld [vmem:[#allocation3] sm:$0xff]
    %v2063 = vld [vmem:[#allocation3 + $0x8] sm:$0xff]
    %v2064 = vld [vmem:[#allocation3 + $0x10] sm:$0xff]
    %v2065 = vld [vmem:[#allocation3 + $0x18] sm:$0xff]
    %v2066 = vld [vmem:[#allocation3 + $0x20] sm:$0xff]
    %v2067 = vld [vmem:[#allocation3 + $0x28] sm:$0xff]
    %v2068 = vld [vmem:[#allocation3 + $0x30] sm:$0xff]
    %v2069 = vld [vmem:[#allocation3 + $0x38] sm:$0xff]
    %v2070 = vld [vmem:[#allocation3 + $0x40] sm:$0xff]
    %v2071 = vld [vmem:[#allocation3 + $0x48] sm:$0xff]
    %v2072 = vld [vmem:[#allocation3 + $0x50] sm:$0xff]
    %v2073 = vld [vmem:[#allocation3 + $0x58] sm:$0xff]
    %v2074 = vld [vmem:[#allocation3 + $0x60] sm:$0xff]
    %v2075 = vld [vmem:[#allocation3 + $0x68] sm:$0xff]
    %v2076 = vld [vmem:[#allocation3 + $0x70] sm:$0xff]
    %v2077 = vld [vmem:[#allocation3 + $0x78] sm:$0xff]
    %2078 = vmatprep.subr.mxu0 0.0
    %2079 = vmatpush1.msra.mxu0 %v1972
    %2080 = vmatprep.subr.mxu0 0.0
    %2081 = vmatpush1.msra.mxu0 %v1977
    %2082 = vmatprep.subr.mxu0 0.0
    %2083 = vmatpush1.msra.mxu0 %v1982
    %2084 = vmatprep.subr.mxu0 0.0
    %2085 = vmatpush1.msra.mxu0 %v1987
    %2086 = vmatprep.subr.mxu0 0.0
    %2087 = vmatpush1.msra.mxu0 %v1992
    %2088 = vmatprep.subr.mxu0 0.0
    %2089 = vmatpush1.msra.mxu0 %v1997
    %2090 = vmatprep.subr.mxu0 0.0
    %2091 = vmatpush1.msra.mxu0 %v2002
    %2092 = vmatprep.subr.mxu0 0.0
    %2093 = vmatpush1.msra.mxu0 %v2007
    %2094 = vmatprep.subr.mxu0 0.0
    %2095 = vmatpush1.msra.mxu0 %v1871
    %2096 = vmatprep.subr.mxu0 0.0
    %2097 = vmatpush1.msra.mxu0 %v1872
    %2098 = vmatprep.subr.mxu0 0.0
    %2099 = vmatpush1.msra.mxu0 %v1873
    %2100 = vmatprep.subr.mxu0 0.0
    %2101 = vmatpush1.msra.mxu0 %v1874
    %2102 = vmatprep.subr.mxu0 0.0
    %2103 = vmatpush1.msra.mxu0 %v1875
    %2104 = vmatprep.subr.mxu0 0.0
    %2105 = vmatpush1.msra.mxu0 %v1876
    %2106 = vmatprep.subr.mxu0 0.0
    %2107 = vmatpush1.msra.mxu0 %v1877
    %2108 = vmatprep.subr.mxu0 0.0
    %2109 = vmatpush1.msra.mxu0 %v1878
    %2110 = vmatprep.subr.mxu0 0.0
    %2111 = vmatpush1.msra.mxu0 0.0
    %2112 = vmatprep.subr.mxu0 0.0
    %2113 = vmatpush1.msra.mxu0 0.0
    %2114 = vmatprep.subr.mxu0 0.0
    %2115 = vmatpush1.msra.mxu0 0.0
    %2116 = vmatprep.subr.mxu0 0.0
    %2117 = vmatpush1.msra.mxu0 0.0
    %2118 = vmatprep.subr.mxu0 0.0
    %2119 = vmatpush1.msra.mxu0 0.0
    %2120 = vmatprep.subr.mxu0 0.0
    %2121 = vmatpush1.msra.mxu0 0.0
    %2122 = vmatprep.subr.mxu0 0.0
    %2123 = vmatpush1.msra.mxu0 0.0
    %2124 = vmatprep.subr.mxu0 0.0
    %2125 = vmatpush1.msra.mxu0 0.0
    %2126 = vmatprep.subr.mxu0 0.0
    %2127 = vmatpush1.msra.mxu0 0.0
    %2128 = vmatprep.subr.mxu0 0.0
    %2129 = vmatpush1.msra.mxu0 0.0
    %2130 = vmatprep.subr.mxu0 0.0
    %2131 = vmatpush1.msra.mxu0 0.0
    %2132 = vmatprep.subr.mxu0 0.0
    %2133 = vmatpush1.msra.mxu0 0.0
    %2134 = vmatprep.subr.mxu0 0.0
    %2135 = vmatpush1.msra.mxu0 0.0
    %2136 = vmatprep.subr.mxu0 0.0
    %2137 = vmatpush1.msra.mxu0 0.0
    %2138 = vmatprep.subr.mxu0 0.0
    %2139 = vmatpush1.msra.mxu0 0.0
    %2140 = vmatprep.subr.mxu0 0.0
    %2141 = vmatpush1.msra.mxu0 0.0
    %2142 = vmatprep.mubr.f32.mxu0 0.0
    %2143 = vmatmul.mubr.f32.gmra.mrb[0].mxu0 %v2062
    %v2144 = vpop.f32.mrb[0].mxu0
    %v2145 = vadd.f32 0.0, %v2144
    %v2146 = vpop.f32.mrb[0].mxu0
    %2147 = vmatprep.mubr.f32.mxu0 0.0
    %2148 = vmatmul.mubr.f32.gmra.mrb[0].mxu0 %v2063
    %v2149 = vpop.f32.mrb[0].mxu0
    %v2150 = vadd.f32 0.0, %v2149
    %v2151 = vpop.f32.mrb[0].mxu0
    %2152 = vmatprep.mubr.f32.mxu0 0.0
    %2153 = vmatmul.mubr.f32.gmra.mrb[0].mxu0 %v2064
    %v2154 = vpop.f32.mrb[0].mxu0
    %v2155 = vadd.f32 0.0, %v2154
    %v2156 = vpop.f32.mrb[0].mxu0
    %2157 = vmatprep.mubr.f32.mxu0 0.0
    %2158 = vmatmul.mubr.f32.gmra.mrb[0].mxu0 %v2065
    %v2159 = vpop.f32.mrb[0].mxu0
    %v2160 = vadd.f32 0.0, %v2159
    %v2161 = vpop.f32.mrb[0].mxu0
    %2162 = vmatprep.mubr.f32.mxu0 0.0
    %2163 = vmatmul.mubr.f32.gmra.mrb[0].mxu0 %v2066
    %v2164 = vpop.f32.mrb[0].mxu0
    %v2165 = vadd.f32 0.0, %v2164
    %v2166 = vpop.f32.mrb[0].mxu0
    %2167 = vmatprep.mubr.f32.mxu0 0.0
    %2168 = vmatmul.mubr.f32.gmra.mrb[0].mxu0 %v2067
    %v2169 = vpop.f32.mrb[0].mxu0
    %v2170 = vadd.f32 0.0, %v2169
    %v2171 = vpop.f32.mrb[0].mxu0
    %2172 = vmatprep.mubr.f32.mxu0 0.0
    %2173 = vmatmul.mubr.f32.gmra.mrb[0].mxu0 %v2068
    %v2174 = vpop.f32.mrb[0].mxu0
    %v2175 = vadd.f32 0.0, %v2174
    %v2176 = vpop.f32.mrb[0].mxu0
    %2177 = vmatprep.mubr.f32.mxu0 0.0
    %2178 = vmatmul.mubr.f32.gmra.mrb[0].mxu0 %v2069
    %v2179 = vpop.f32.mrb[0].mxu0
    %v2180 = vadd.f32 0.0, %v2179
    %v2181 = vpop.f32.mrb[0].mxu0
    %2182 = vmatprep.mubr.f32.mxu0 0.0
    %2183 = vmatmul.mubr.f32.gmra.mrb[0].mxu0 %v2070
    %v2184 = vpop.f32.mrb[0].mxu0
    %v2185 = vadd.f32 0.0, %v2184
    %v2186 = vpop.f32.mrb[0].mxu0
    %2187 = vmatprep.mubr.f32.mxu0 0.0
    %2188 = vmatmul.mubr.f32.gmra.mrb[0].mxu0 %v2071
    %v2189 = vpop.f32.mrb[0].mxu0
    %v2190 = vadd.f32 0.0, %v2189
    %v2191 = vpop.f32.mrb[0].mxu0
    %2192 = vmatprep.mubr.f32.mxu0 0.0
    %2193 = vmatmul.mubr.f32.gmra.mrb[0].mxu0 %v2072
    %v2194 = vpop.f32.mrb[0].mxu0
    %v2195 = vadd.f32 0.0, %v2194
    %v2196 = vpop.f32.mrb[0].mxu0
    %2197 = vmatprep.mubr.f32.mxu0 0.0
    %2198 = vmatmul.mubr.f32.gmra.mrb[0].mxu0 %v2073
    %v2199 = vpop.f32.mrb[0].mxu0
    %v2200 = vadd.f32 0.0, %v2199
    %v2201 = vpop.f32.mrb[0].mxu0
    %2202 = vmatprep.mubr.f32.mxu0 0.0
    %2203 = vmatmul.mubr.f32.gmra.mrb[0].mxu0 %v2074
    %v2204 = vpop.f32.mrb[0].mxu0
    %v2205 = vadd.f32 0.0, %v2204
    %v2206 = vpop.f32.mrb[0].mxu0
    %2207 = vmatprep.mubr.f32.mxu0 0.0
    %2208 = vmatmul.mubr.f32.gmra.mrb[0].mxu0 %v2075
    %v2209 = vpop.f32.mrb[0].mxu0
    %v2210 = vadd.f32 0.0, %v2209
    %v2211 = vpop.f32.mrb[0].mxu0
    %2212 = vmatprep.mubr.f32.mxu0 0.0
    %2213 = vmatmul.mubr.f32.gmra.mrb[0].mxu0 %v2076
    %v2214 = vpop.f32.mrb[0].mxu0
    %v2215 = vadd.f32 0.0, %v2214
    %v2216 = vpop.f32.mrb[0].mxu0
    %2217 = vmatprep.mubr.f32.mxu0 0.0
    %2218 = vmatmul.mubr.f32.gmra.mrb[0].mxu0 %v2077
    %v2219 = vpop.f32.mrb[0].mxu0
    %v2220 = vadd.f32 0.0, %v2219
    %v2221 = vpop.f32.mrb[0].mxu0
    %2222 = vdwg.mxu0
    %s2223 = scalar_lea.vmem [#allocation3], 128
    %v2224 = vld [vmem:[%s2223] sm:$0xff]
    %v2225 = vld [vmem:[%s2223 + $0x8] sm:$0xff]
    %v2226 = vld [vmem:[%s2223 + $0x10] sm:$0xff]
    %v2227 = vld [vmem:[%s2223 + $0x18] sm:$0xff]
    %v2228 = vld [vmem:[%s2223 + $0x20] sm:$0xff]
    %v2229 = vld [vmem:[%s2223 + $0x28] sm:$0xff]
    %v2230 = vld [vmem:[%s2223 + $0x30] sm:$0xff]
    %v2231 = vld [vmem:[%s2223 + $0x38] sm:$0xff]
    %v2232 = vld [vmem:[%s2223 + $0x40] sm:$0xff]
    %v2233 = vld [vmem:[%s2223 + $0x48] sm:$0xff]
    %v2234 = vld [vmem:[%s2223 + $0x50] sm:$0xff]
    %v2235 = vld [vmem:[%s2223 + $0x58] sm:$0xff]
    %v2236 = vld [vmem:[%s2223 + $0x60] sm:$0xff]
    %v2237 = vld [vmem:[%s2223 + $0x68] sm:$0xff]
    %v2238 = vld [vmem:[%s2223 + $0x70] sm:$0xff]
    %v2239 = vld [vmem:[%s2223 + $0x78] sm:$0xff]
    %2240 = vmatprep.subr.mxu0 0.0
    %2241 = vmatpush1.msra.mxu0 %v1972
    %2242 = vmatprep.subr.mxu0 0.0
    %2243 = vmatpush1.msra.mxu0 %v1977
    %2244 = vmatprep.subr.mxu0 0.0
    %2245 = vmatpush1.msra.mxu0 %v1982
    %2246 = vmatprep.subr.mxu0 0.0
    %2247 = vmatpush1.msra.mxu0 %v1987
    %2248 = vmatprep.subr.mxu0 0.0
    %2249 = vmatpush1.msra.mxu0 %v1992
    %2250 = vmatprep.subr.mxu0 0.0
    %2251 = vmatpush1.msra.mxu0 %v1997
    %2252 = vmatprep.subr.mxu0 0.0
    %2253 = vmatpush1.msra.mxu0 %v2002
    %2254 = vmatprep.subr.mxu0 0.0
    %2255 = vmatpush1.msra.mxu0 %v2007
    %2256 = vmatprep.subr.mxu0 0.0
    %2257 = vmatpush1.msra.mxu0 %v1871
    %2258 = vmatprep.subr.mxu0 0.0
    %2259 = vmatpush1.msra.mxu0 %v1872
    %2260 = vmatprep.subr.mxu0 0.0
    %2261 = vmatpush1.msra.mxu0 %v1873
    %2262 = vmatprep.subr.mxu0 0.0
    %2263 = vmatpush1.msra.mxu0 %v1874
    %2264 = vmatprep.subr.mxu0 0.0
    %2265 = vmatpush1.msra.mxu0 %v1875
    %2266 = vmatprep.subr.mxu0 0.0
    %2267 = vmatpush1.msra.mxu0 %v1876
    %2268 = vmatprep.subr.mxu0 0.0
    %2269 = vmatpush1.msra.mxu0 %v1877
    %2270 = vmatprep.subr.mxu0 0.0
    %2271 = vmatpush1.msra.mxu0 %v1878
    %2272 = vmatprep.subr.mxu0 0.0
    %2273 = vmatpush1.msra.mxu0 0.0
    %2274 = vmatprep.subr.mxu0 0.0
    %2275 = vmatpush1.msra.mxu0 0.0
    %2276 = vmatprep.subr.mxu0 0.0
    %2277 = vmatpush1.msra.mxu0 0.0
    %2278 = vmatprep.subr.mxu0 0.0
    %2279 = vmatpush1.msra.mxu0 0.0
    %2280 = vmatprep.subr.mxu0 0.0
    %2281 = vmatpush1.msra.mxu0 0.0
    %2282 = vmatprep.subr.mxu0 0.0
    %2283 = vmatpush1.msra.mxu0 0.0
    %2284 = vmatprep.subr.mxu0 0.0
    %2285 = vmatpush1.msra.mxu0 0.0
    %2286 = vmatprep.subr.mxu0 0.0
    %2287 = vmatpush1.msra.mxu0 0.0
    %2288 = vmatprep.subr.mxu0 0.0
    %2289 = vmatpush1.msra.mxu0 0.0
    %2290 = vmatprep.subr.mxu0 0.0
    %2291 = vmatpush1.msra.mxu0 0.0
    %2292 = vmatprep.subr.mxu0 0.0
    %2293 = vmatpush1.msra.mxu0 0.0
    %2294 = vmatprep.subr.mxu0 0.0
    %2295 = vmatpush1.msra.mxu0 0.0
    %2296 = vmatprep.subr.mxu0 0.0
    %2297 = vmatpush1.msra.mxu0 0.0
    %2298 = vmatprep.subr.mxu0 0.0
    %2299 = vmatpush1.msra.mxu0 0.0
    %2300 = vmatprep.subr.mxu0 0.0
    %2301 = vmatpush1.msra.mxu0 0.0
    %2302 = vmatprep.subr.mxu0 0.0
    %2303 = vmatpush1.msra.mxu0 0.0
    %2304 = vmatprep.mubr.f32.mxu0 0.0
    %2305 = vmatmul.mubr.f32.gmra.mrb[0].mxu0 %v2224
    %v2306 = vpop.f32.mrb[0].mxu0
    %v2307 = vadd.f32 0.0, %v2306
    %v2308 = vpop.f32.mrb[0].mxu0
    %2309 = vmatprep.mubr.f32.mxu0 0.0
    %2310 = vmatmul.mubr.f32.gmra.mrb[0].mxu0 %v2225
    %v2311 = vpop.f32.mrb[0].mxu0
    %v2312 = vadd.f32 0.0, %v2311
    %v2313 = vpop.f32.mrb[0].mxu0
    %2314 = vmatprep.mubr.f32.mxu0 0.0
    %2315 = vmatmul.mubr.f32.gmra.mrb[0].mxu0 %v2226
    %v2316 = vpop.f32.mrb[0].mxu0
    %v2317 = vadd.f32 0.0, %v2316
    %v2318 = vpop.f32.mrb[0].mxu0
    %2319 = vmatprep.mubr.f32.mxu0 0.0
    %2320 = vmatmul.mubr.f32.gmra.mrb[0].mxu0 %v2227
    %v2321 = vpop.f32.mrb[0].mxu0
    %v2322 = vadd.f32 0.0, %v2321
    %v2323 = vpop.f32.mrb[0].mxu0
    %2324 = vmatprep.mubr.f32.mxu0 0.0
    %2325 = vmatmul.mubr.f32.gmra.mrb[0].mxu0 %v2228
    %v2326 = vpop.f32.mrb[0].mxu0
    %v2327 = vadd.f32 0.0, %v2326
    %v2328 = vpop.f32.mrb[0].mxu0
    %2329 = vmatprep.mubr.f32.mxu0 0.0
    %2330 = vmatmul.mubr.f32.gmra.mrb[0].mxu0 %v2229
    %v2331 = vpop.f32.mrb[0].mxu0
    %v2332 = vadd.f32 0.0, %v2331
    %v2333 = vpop.f32.mrb[0].mxu0
    %2334 = vmatprep.mubr.f32.mxu0 0.0
    %2335 = vmatmul.mubr.f32.gmra.mrb[0].mxu0 %v2230
    %v2336 = vpop.f32.mrb[0].mxu0
    %v2337 = vadd.f32 0.0, %v2336
    %v2338 = vpop.f32.mrb[0].mxu0
    %2339 = vmatprep.mubr.f32.mxu0 0.0
    %2340 = vmatmul.mubr.f32.gmra.mrb[0].mxu0 %v2231
    %v2341 = vpop.f32.mrb[0].mxu0
    %v2342 = vadd.f32 0.0, %v2341
    %v2343 = vpop.f32.mrb[0].mxu0
    %2344 = vmatprep.mubr.f32.mxu0 0.0
    %2345 = vmatmul.mubr.f32.gmra.mrb[0].mxu0 %v2232
    %v2346 = vpop.f32.mrb[0].mxu0
    %v2347 = vadd.f32 0.0, %v2346
    %v2348 = vpop.f32.mrb[0].mxu0
    %2349 = vmatprep.mubr.f32.mxu0 0.0
    %2350 = vmatmul.mubr.f32.gmra.mrb[0].mxu0 %v2233
    %v2351 = vpop.f32.mrb[0].mxu0
    %v2352 = vadd.f32 0.0, %v2351
    %v2353 = vpop.f32.mrb[0].mxu0
    %2354 = vmatprep.mubr.f32.mxu0 0.0
    %2355 = vmatmul.mubr.f32.gmra.mrb[0].mxu0 %v2234
    %v2356 = vpop.f32.mrb[0].mxu0
    %v2357 = vadd.f32 0.0, %v2356
    %v2358 = vpop.f32.mrb[0].mxu0
    %2359 = vmatprep.mubr.f32.mxu0 0.0
    %2360 = vmatmul.mubr.f32.gmra.mrb[0].mxu0 %v2235
    %v2361 = vpop.f32.mrb[0].mxu0
    %v2362 = vadd.f32 0.0, %v2361
    %v2363 = vpop.f32.mrb[0].mxu0
    %2364 = vmatprep.mubr.f32.mxu0 0.0
    %2365 = vmatmul.mubr.f32.gmra.mrb[0].mxu0 %v2236
    %v2366 = vpop.f32.mrb[0].mxu0
    %v2367 = vadd.f32 0.0, %v2366
    %v2368 = vpop.f32.mrb[0].mxu0
    %2369 = vmatprep.mubr.f32.mxu0 0.0
    %2370 = vmatmul.mubr.f32.gmra.mrb[0].mxu0 %v2237
    %v2371 = vpop.f32.mrb[0].mxu0
    %v2372 = vadd.f32 0.0, %v2371
    %v2373 = vpop.f32.mrb[0].mxu0
    %2374 = vmatprep.mubr.f32.mxu0 0.0
    %2375 = vmatmul.mubr.f32.gmra.mrb[0].mxu0 %v2238
    %v2376 = vpop.f32.mrb[0].mxu0
    %v2377 = vadd.f32 0.0, %v2376
    %v2378 = vpop.f32.mrb[0].mxu0
    %2379 = vmatprep.mubr.f32.mxu0 0.0
    %2380 = vmatmul.mubr.f32.gmra.mrb[0].mxu0 %v2239
    %v2381 = vpop.f32.mrb[0].mxu0
    %v2382 = vadd.f32 0.0, %v2381
    %v2383 = vpop.f32.mrb[0].mxu0
    %2384 = vdwg.mxu0
    %s2385 = scalar_lea.vmem [#allocation3], 256
    %v2386 = vld [vmem:[%s2385] sm:$0xff]
    %v2387 = vld [vmem:[%s2385 + $0x8] sm:$0xff]
    %v2388 = vld [vmem:[%s2385 + $0x10] sm:$0xff]
    %v2389 = vld [vmem:[%s2385 + $0x18] sm:$0xff]
    %v2390 = vld [vmem:[%s2385 + $0x20] sm:$0xff]
    %v2391 = vld [vmem:[%s2385 + $0x28] sm:$0xff]
    %v2392 = vld [vmem:[%s2385 + $0x30] sm:$0xff]
    %v2393 = vld [vmem:[%s2385 + $0x38] sm:$0xff]
    %v2394 = vld [vmem:[%s2385 + $0x40] sm:$0xff]
    %v2395 = vld [vmem:[%s2385 + $0x48] sm:$0xff]
    %v2396 = vld [vmem:[%s2385 + $0x50] sm:$0xff]
    %v2397 = vld [vmem:[%s2385 + $0x58] sm:$0xff]
    %v2398 = vld [vmem:[%s2385 + $0x60] sm:$0xff]
    %v2399 = vld [vmem:[%s2385 + $0x68] sm:$0xff]
    %v2400 = vld [vmem:[%s2385 + $0x70] sm:$0xff]
    %v2401 = vld [vmem:[%s2385 + $0x78] sm:$0xff]
    %2402 = vmatprep.subr.mxu0 0.0
    %2403 = vmatpush1.msra.mxu0 %v1972
    %2404 = vmatprep.subr.mxu0 0.0
    %2405 = vmatpush1.msra.mxu0 %v1977
    %2406 = vmatprep.subr.mxu0 0.0
    %2407 = vmatpush1.msra.mxu0 %v1982
    %2408 = vmatprep.subr.mxu0 0.0
    %2409 = vmatpush1.msra.mxu0 %v1987
    %2410 = vmatprep.subr.mxu0 0.0
    %2411 = vmatpush1.msra.mxu0 %v1992
    %2412 = vmatprep.subr.mxu0 0.0
    %2413 = vmatpush1.msra.mxu0 %v1997
    %2414 = vmatprep.subr.mxu0 0.0
    %2415 = vmatpush1.msra.mxu0 %v2002
    %2416 = vmatprep.subr.mxu0 0.0
    %2417 = vmatpush1.msra.mxu0 %v2007
    %2418 = vmatprep.subr.mxu0 0.0
    %2419 = vmatpush1.msra.mxu0 %v1871
    %2420 = vmatprep.subr.mxu0 0.0
    %2421 = vmatpush1.msra.mxu0 %v1872
    %2422 = vmatprep.subr.mxu0 0.0
    %2423 = vmatpush1.msra.mxu0 %v1873
    %2424 = vmatprep.subr.mxu0 0.0
    %2425 = vmatpush1.msra.mxu0 %v1874
    %2426 = vmatprep.subr.mxu0 0.0
    %2427 = vmatpush1.msra.mxu0 %v1875
    %2428 = vmatprep.subr.mxu0 0.0
    %2429 = vmatpush1.msra.mxu0 %v1876
    %2430 = vmatprep.subr.mxu0 0.0
    %2431 = vmatpush1.msra.mxu0 %v1877
    %2432 = vmatprep.subr.mxu0 0.0
    %2433 = vmatpush1.msra.mxu0 %v1878
    %2434 = vmatprep.subr.mxu0 0.0
    %2435 = vmatpush1.msra.mxu0 0.0
    %2436 = vmatprep.subr.mxu0 0.0
    %2437 = vmatpush1.msra.mxu0 0.0
    %2438 = vmatprep.subr.mxu0 0.0
    %2439 = vmatpush1.msra.mxu0 0.0
    %2440 = vmatprep.subr.mxu0 0.0
    %2441 = vmatpush1.msra.mxu0 0.0
    %2442 = vmatprep.subr.mxu0 0.0
    %2443 = vmatpush1.msra.mxu0 0.0
    %2444 = vmatprep.subr.mxu0 0.0
    %2445 = vmatpush1.msra.mxu0 0.0
    %2446 = vmatprep.subr.mxu0 0.0
    %2447 = vmatpush1.msra.mxu0 0.0
    %2448 = vmatprep.subr.mxu0 0.0
    %2449 = vmatpush1.msra.mxu0 0.0
    %2450 = vmatprep.subr.mxu0 0.0
    %2451 = vmatpush1.msra.mxu0 0.0
    %2452 = vmatprep.subr.mxu0 0.0
    %2453 = vmatpush1.msra.mxu0 0.0
    %2454 = vmatprep.subr.mxu0 0.0
    %2455 = vmatpush1.msra.mxu0 0.0
    %2456 = vmatprep.subr.mxu0 0.0
    %2457 = vmatpush1.msra.mxu0 0.0
    %2458 = vmatprep.subr.mxu0 0.0
    %2459 = vmatpush1.msra.mxu0 0.0
    %2460 = vmatprep.subr.mxu0 0.0
    %2461 = vmatpush1.msra.mxu0 0.0
    %2462 = vmatprep.subr.mxu0 0.0
    %2463 = vmatpush1.msra.mxu0 0.0
    %2464 = vmatprep.subr.mxu0 0.0
    %2465 = vmatpush1.msra.mxu0 0.0
    %2466 = vmatprep.mubr.f32.mxu0 0.0
    %2467 = vmatmul.mubr.f32.gmra.mrb[0].mxu0 %v2386
    %v2468 = vpop.f32.mrb[0].mxu0
    %v2469 = vadd.f32 0.0, %v2468
    %v2470 = vpop.f32.mrb[0].mxu0
    %2471 = vmatprep.mubr.f32.mxu0 0.0
    %2472 = vmatmul.mubr.f32.gmra.mrb[0].mxu0 %v2387
    %v2473 = vpop.f32.mrb[0].mxu0
    %v2474 = vadd.f32 0.0, %v2473
    %v2475 = vpop.f32.mrb[0].mxu0
    %2476 = vmatprep.mubr.f32.mxu0 0.0
    %2477 = vmatmul.mubr.f32.gmra.mrb[0].mxu0 %v2388
    %v2478 = vpop.f32.mrb[0].mxu0
    %v2479 = vadd.f32 0.0, %v2478
    %v2480 = vpop.f32.mrb[0].mxu0
    %2481 = vmatprep.mubr.f32.mxu0 0.0
    %2482 = vmatmul.mubr.f32.gmra.mrb[0].mxu0 %v2389
    %v2483 = vpop.f32.mrb[0].mxu0
    %v2484 = vadd.f32 0.0, %v2483
    %v2485 = vpop.f32.mrb[0].mxu0
    %2486 = vmatprep.mubr.f32.mxu0 0.0
    %2487 = vmatmul.mubr.f32.gmra.mrb[0].mxu0 %v2390
    %v2488 = vpop.f32.mrb[0].mxu0
    %v2489 = vadd.f32 0.0, %v2488
    %v2490 = vpop.f32.mrb[0].mxu0
    %2491 = vmatprep.mubr.f32.mxu0 0.0
    %2492 = vmatmul.mubr.f32.gmra.mrb[0].mxu0 %v2391
    %v2493 = vpop.f32.mrb[0].mxu0
    %v2494 = vadd.f32 0.0, %v2493
    %v2495 = vpop.f32.mrb[0].mxu0
    %2496 = vmatprep.mubr.f32.mxu0 0.0
    %2497 = vmatmul.mubr.f32.gmra.mrb[0].mxu0 %v2392
    %v2498 = vpop.f32.mrb[0].mxu0
    %v2499 = vadd.f32 0.0, %v2498
    %v2500 = vpop.f32.mrb[0].mxu0
    %2501 = vmatprep.mubr.f32.mxu0 0.0
    %2502 = vmatmul.mubr.f32.gmra.mrb[0].mxu0 %v2393
    %v2503 = vpop.f32.mrb[0].mxu0
    %v2504 = vadd.f32 0.0, %v2503
    %v2505 = vpop.f32.mrb[0].mxu0
    %2506 = vmatprep.mubr.f32.mxu0 0.0
    %2507 = vmatmul.mubr.f32.gmra.mrb[0].mxu0 %v2394
    %v2508 = vpop.f32.mrb[0].mxu0
    %v2509 = vadd.f32 0.0, %v2508
    %v2510 = vpop.f32.mrb[0].mxu0
    %2511 = vmatprep.mubr.f32.mxu0 0.0
    %2512 = vmatmul.mubr.f32.gmra.mrb[0].mxu0 %v2395
    %v2513 = vpop.f32.mrb[0].mxu0
    %v2514 = vadd.f32 0.0, %v2513
    %v2515 = vpop.f32.mrb[0].mxu0
    %2516 = vmatprep.mubr.f32.mxu0 0.0
    %2517 = vmatmul.mubr.f32.gmra.mrb[0].mxu0 %v2396
    %v2518 = vpop.f32.mrb[0].mxu0
    %v2519 = vadd.f32 0.0, %v2518
    %v2520 = vpop.f32.mrb[0].mxu0
    %2521 = vmatprep.mubr.f32.mxu0 0.0
    %2522 = vmatmul.mubr.f32.gmra.mrb[0].mxu0 %v2397
    %v2523 = vpop.f32.mrb[0].mxu0
    %v2524 = vadd.f32 0.0, %v2523
    %v2525 = vpop.f32.mrb[0].mxu0
    %2526 = vmatprep.mubr.f32.mxu0 0.0
    %2527 = vmatmul.mubr.f32.gmra.mrb[0].mxu0 %v2398
    %v2528 = vpop.f32.mrb[0].mxu0
    %v2529 = vadd.f32 0.0, %v2528
    %v2530 = vpop.f32.mrb[0].mxu0
    %2531 = vmatprep.mubr.f32.mxu0 0.0
    %2532 = vmatmul.mubr.f32.gmra.mrb[0].mxu0 %v2399
    %v2533 = vpop.f32.mrb[0].mxu0
    %v2534 = vadd.f32 0.0, %v2533
    %v2535 = vpop.f32.mrb[0].mxu0
    %2536 = vmatprep.mubr.f32.mxu0 0.0
    %2537 = vmatmul.mubr.f32.gmra.mrb[0].mxu0 %v2400
    %v2538 = vpop.f32.mrb[0].mxu0
    %v2539 = vadd.f32 0.0, %v2538
    %v2540 = vpop.f32.mrb[0].mxu0
    %2541 = vmatprep.mubr.f32.mxu0 0.0
    %2542 = vmatmul.mubr.f32.gmra.mrb[0].mxu0 %v2401
    %v2543 = vpop.f32.mrb[0].mxu0
    %v2544 = vadd.f32 0.0, %v2543
    %v2545 = vpop.f32.mrb[0].mxu0
    %2546 = vdwg.mxu0
    %v2548 = vsel %vm1014, %v2469, 0
    %v2551 = vsel %vm1014, %v2474, 0
    %v2554 = vsel %vm1014, %v2479, 0
    %v2557 = vsel %vm1014, %v2484, 0
    %v2560 = vsel %vm1014, %v2489, 0
    %v2563 = vsel %vm1014, %v2494, 0
    %v2566 = vsel %vm1014, %v2499, 0
    %v2569 = vsel %vm1014, %v2504, 0
    %v2572 = vsel %vm1014, %v2509, 0
    %v2575 = vsel %vm1014, %v2514, 0
    %v2578 = vsel %vm1014, %v2519, 0
    %v2581 = vsel %vm1014, %v2524, 0
    %v2584 = vsel %vm1014, %v2529, 0
    %v2587 = vsel %vm1014, %v2534, 0
    %v2590 = vsel %vm1014, %v2539, 0
    %v2593 = vsel %vm1014, %v2544, 0
    %2595 = vmatprep.subr.mxu0 0.0
    %2596 = vmatpush1.msra.mxu0 %v237
    %2597 = vmatprep.subr.mxu0 0.0
    %2598 = vmatpush1.msra.mxu0 %v238
    %2599 = vmatprep.subr.mxu0 0.0
    %2600 = vmatpush1.msra.mxu0 %v996
    %2601 = vmatprep.subr.mxu0 0.0
    %2602 = vmatpush1.msra.mxu0 %v997
    %2603 = vmatprep.subr.mxu0 0.0
    %2604 = vmatpush1.msra.mxu0 %v2042
    %2605 = vmatprep.subr.mxu0 0.0
    %2606 = vmatpush1.msra.mxu0 %v2043
    %2607 = vmatprep.subr.mxu0 0.0
    %2608 = vmatpush1.msra.mxu0 %v2044
    %2609 = vmatprep.subr.mxu0 0.0
    %2610 = vmatpush1.msra.mxu0 %v2045
    %2611 = vmatprep.subr.mxu0 0.0
    %2612 = vmatpush1.msra.mxu0 0.0
    %2613 = vmatprep.subr.mxu0 0.0
    %2614 = vmatpush1.msra.mxu0 0.0
    %2615 = vmatprep.subr.mxu0 0.0
    %2616 = vmatpush1.msra.mxu0 0.0
    %2617 = vmatprep.subr.mxu0 0.0
    %2618 = vmatpush1.msra.mxu0 0.0
    %2619 = vmatprep.subr.mxu0 0.0
    %2620 = vmatpush1.msra.mxu0 0.0
    %2621 = vmatprep.subr.mxu0 0.0
    %2622 = vmatpush1.msra.mxu0 0.0
    %2623 = vmatprep.subr.mxu0 0.0
    %2624 = vmatpush1.msra.mxu0 0.0
    %2625 = vmatprep.subr.mxu0 0.0
    %2626 = vmatpush1.msra.mxu0 0.0
    %2627 = vmatprep.subr.mxu0 0.0
    %2628 = vmatpush1.msra.mxu0 0.0
    %2629 = vmatprep.subr.mxu0 0.0
    %2630 = vmatpush1.msra.mxu0 0.0
    %2631 = vmatprep.subr.mxu0 0.0
    %2632 = vmatpush1.msra.mxu0 0.0
    %2633 = vmatprep.subr.mxu0 0.0
    %2634 = vmatpush1.msra.mxu0 0.0
    %2635 = vmatprep.subr.mxu0 0.0
    %2636 = vmatpush1.msra.mxu0 0.0
    %2637 = vmatprep.subr.mxu0 0.0
    %2638 = vmatpush1.msra.mxu0 0.0
    %2639 = vmatprep.subr.mxu0 0.0
    %2640 = vmatpush1.msra.mxu0 0.0
    %2641 = vmatprep.subr.mxu0 0.0
    %2642 = vmatpush1.msra.mxu0 0.0
    %2643 = vmatprep.subr.mxu0 0.0
    %2644 = vmatpush1.msra.mxu0 0.0
    %2645 = vmatprep.subr.mxu0 0.0
    %2646 = vmatpush1.msra.mxu0 0.0
    %2647 = vmatprep.subr.mxu0 0.0
    %2648 = vmatpush1.msra.mxu0 0.0
    %2649 = vmatprep.subr.mxu0 0.0
    %2650 = vmatpush1.msra.mxu0 0.0
    %2651 = vmatprep.subr.mxu0 0.0
    %2652 = vmatpush1.msra.mxu0 0.0
    %2653 = vmatprep.subr.mxu0 0.0
    %2654 = vmatpush1.msra.mxu0 0.0
    %2655 = vmatprep.subr.mxu0 0.0
    %2656 = vmatpush1.msra.mxu0 0.0
    %2657 = vmatprep.subr.mxu0 0.0
    %2658 = vmatpush1.msra.mxu0 0.0
    %2659 = vmatprep.mubr.f32.mxu0 0.0
    %2660 = vmatmul.mubr.f32.gmra.mrb[0].mxu0 %v2548
    %v2661 = vpop.f32.mrb[0].mxu0
    %v2662 = vadd.f32 0.0, %v2661
    %v2663 = vpop.f32.mrb[0].mxu0
    %2664 = vmatprep.mubr.f32.mxu0 0.0
    %2665 = vmatmul.mubr.f32.gmra.mrb[0].mxu0 %v2551
    %v2666 = vpop.f32.mrb[0].mxu0
    %v2667 = vadd.f32 0.0, %v2666
    %v2668 = vpop.f32.mrb[0].mxu0
    %2669 = vmatprep.mubr.f32.mxu0 0.0
    %2670 = vmatmul.mubr.f32.gmra.mrb[0].mxu0 %v2554
    %v2671 = vpop.f32.mrb[0].mxu0
    %v2672 = vadd.f32 0.0, %v2671
    %v2673 = vpop.f32.mrb[0].mxu0
    %2674 = vmatprep.mubr.f32.mxu0 0.0
    %2675 = vmatmul.mubr.f32.gmra.mrb[0].mxu0 %v2557
    %v2676 = vpop.f32.mrb[0].mxu0
    %v2677 = vadd.f32 0.0, %v2676
    %v2678 = vpop.f32.mrb[0].mxu0
    %2679 = vmatprep.mubr.f32.mxu0 0.0
    %2680 = vmatmul.mubr.f32.gmra.mrb[0].mxu0 %v2560
    %v2681 = vpop.f32.mrb[0].mxu0
    %v2682 = vadd.f32 0.0, %v2681
    %v2683 = vpop.f32.mrb[0].mxu0
    %2684 = vmatprep.mubr.f32.mxu0 0.0
    %2685 = vmatmul.mubr.f32.gmra.mrb[0].mxu0 %v2563
    %v2686 = vpop.f32.mrb[0].mxu0
    %v2687 = vadd.f32 0.0, %v2686
    %v2688 = vpop.f32.mrb[0].mxu0
    %2689 = vmatprep.mubr.f32.mxu0 0.0
    %2690 = vmatmul.mubr.f32.gmra.mrb[0].mxu0 %v2566
    %v2691 = vpop.f32.mrb[0].mxu0
    %v2692 = vadd.f32 0.0, %v2691
    %v2693 = vpop.f32.mrb[0].mxu0
    %2694 = vmatprep.mubr.f32.mxu0 0.0
    %2695 = vmatmul.mubr.f32.gmra.mrb[0].mxu0 %v2569
    %v2696 = vpop.f32.mrb[0].mxu0
    %v2697 = vadd.f32 0.0, %v2696
    %v2698 = vpop.f32.mrb[0].mxu0
    %2699 = vmatprep.mubr.f32.mxu0 0.0
    %2700 = vmatmul.mubr.f32.gmra.mrb[0].mxu0 %v2572
    %v2701 = vpop.f32.mrb[0].mxu0
    %v2702 = vadd.f32 0.0, %v2701
    %v2703 = vpop.f32.mrb[0].mxu0
    %2704 = vmatprep.mubr.f32.mxu0 0.0
    %2705 = vmatmul.mubr.f32.gmra.mrb[0].mxu0 %v2575
    %v2706 = vpop.f32.mrb[0].mxu0
    %v2707 = vadd.f32 0.0, %v2706
    %v2708 = vpop.f32.mrb[0].mxu0
    %2709 = vmatprep.mubr.f32.mxu0 0.0
    %2710 = vmatmul.mubr.f32.gmra.mrb[0].mxu0 %v2578
    %v2711 = vpop.f32.mrb[0].mxu0
    %v2712 = vadd.f32 0.0, %v2711
    %v2713 = vpop.f32.mrb[0].mxu0
    %2714 = vmatprep.mubr.f32.mxu0 0.0
    %2715 = vmatmul.mubr.f32.gmra.mrb[0].mxu0 %v2581
    %v2716 = vpop.f32.mrb[0].mxu0
    %v2717 = vadd.f32 0.0, %v2716
    %v2718 = vpop.f32.mrb[0].mxu0
    %2719 = vmatprep.mubr.f32.mxu0 0.0
    %2720 = vmatmul.mubr.f32.gmra.mrb[0].mxu0 %v2584
    %v2721 = vpop.f32.mrb[0].mxu0
    %v2722 = vadd.f32 0.0, %v2721
    %v2723 = vpop.f32.mrb[0].mxu0
    %2724 = vmatprep.mubr.f32.mxu0 0.0
    %2725 = vmatmul.mubr.f32.gmra.mrb[0].mxu0 %v2587
    %v2726 = vpop.f32.mrb[0].mxu0
    %v2727 = vadd.f32 0.0, %v2726
    %v2728 = vpop.f32.mrb[0].mxu0
    %2729 = vmatprep.mubr.f32.mxu0 0.0
    %2730 = vmatmul.mubr.f32.gmra.mrb[0].mxu0 %v2590
    %v2731 = vpop.f32.mrb[0].mxu0
    %v2732 = vadd.f32 0.0, %v2731
    %v2733 = vpop.f32.mrb[0].mxu0
    %2734 = vmatprep.mubr.f32.mxu0 0.0
    %2735 = vmatmul.mubr.f32.gmra.mrb[0].mxu0 %v2593
    %v2736 = vpop.f32.mrb[0].mxu0
    %v2737 = vadd.f32 0.0, %v2736
    %v2738 = vpop.f32.mrb[0].mxu0
    %2739 = vdwg.mxu0
    %v2741 = vsel %vm1014, %v2307, 0
    %v2744 = vsel %vm1014, %v2312, 0
    %v2747 = vsel %vm1014, %v2317, 0
    %v2750 = vsel %vm1014, %v2322, 0
    %v2753 = vsel %vm1014, %v2327, 0
    %v2756 = vsel %vm1014, %v2332, 0
    %v2759 = vsel %vm1014, %v2337, 0
    %v2762 = vsel %vm1014, %v2342, 0
    %v2765 = vsel %vm1014, %v2347, 0
    %v2768 = vsel %vm1014, %v2352, 0
    %v2771 = vsel %vm1014, %v2357, 0
    %v2774 = vsel %vm1014, %v2362, 0
    %v2777 = vsel %vm1014, %v2367, 0
    %v2780 = vsel %vm1014, %v2372, 0
    %v2783 = vsel %vm1014, %v2377, 0
    %v2786 = vsel %vm1014, %v2382, 0
    %2788 = vmatprep.subr.mxu0 0.0
    %2789 = vmatpush1.msra.mxu0 %v229
    %2790 = vmatprep.subr.mxu0 0.0
    %2791 = vmatpush1.msra.mxu0 %v230
    %2792 = vmatprep.subr.mxu0 0.0
    %2793 = vmatpush1.msra.mxu0 %v988
    %2794 = vmatprep.subr.mxu0 0.0
    %2795 = vmatpush1.msra.mxu0 %v989
    %2796 = vmatprep.subr.mxu0 0.0
    %2797 = vmatpush1.msra.mxu0 %v2026
    %2798 = vmatprep.subr.mxu0 0.0
    %2799 = vmatpush1.msra.mxu0 %v2027
    %2800 = vmatprep.subr.mxu0 0.0
    %2801 = vmatpush1.msra.mxu0 %v2028
    %2802 = vmatprep.subr.mxu0 0.0
    %2803 = vmatpush1.msra.mxu0 %v2029
    %2804 = vmatprep.subr.mxu0 0.0
    %2805 = vmatpush1.msra.mxu0 0.0
    %2806 = vmatprep.subr.mxu0 0.0
    %2807 = vmatpush1.msra.mxu0 0.0
    %2808 = vmatprep.subr.mxu0 0.0
    %2809 = vmatpush1.msra.mxu0 0.0
    %2810 = vmatprep.subr.mxu0 0.0
    %2811 = vmatpush1.msra.mxu0 0.0
    %2812 = vmatprep.subr.mxu0 0.0
    %2813 = vmatpush1.msra.mxu0 0.0
    %2814 = vmatprep.subr.mxu0 0.0
    %2815 = vmatpush1.msra.mxu0 0.0
    %2816 = vmatprep.subr.mxu0 0.0
    %2817 = vmatpush1.msra.mxu0 0.0
    %2818 = vmatprep.subr.mxu0 0.0
    %2819 = vmatpush1.msra.mxu0 0.0
    %2820 = vmatprep.subr.mxu0 0.0
    %2821 = vmatpush1.msra.mxu0 0.0
    %2822 = vmatprep.subr.mxu0 0.0
    %2823 = vmatpush1.msra.mxu0 0.0
    %2824 = vmatprep.subr.mxu0 0.0
    %2825 = vmatpush1.msra.mxu0 0.0
    %2826 = vmatprep.subr.mxu0 0.0
    %2827 = vmatpush1.msra.mxu0 0.0
    %2828 = vmatprep.subr.mxu0 0.0
    %2829 = vmatpush1.msra.mxu0 0.0
    %2830 = vmatprep.subr.mxu0 0.0
    %2831 = vmatpush1.msra.mxu0 0.0
    %2832 = vmatprep.subr.mxu0 0.0
    %2833 = vmatpush1.msra.mxu0 0.0
    %2834 = vmatprep.subr.mxu0 0.0
    %2835 = vmatpush1.msra.mxu0 0.0
    %2836 = vmatprep.subr.mxu0 0.0
    %2837 = vmatpush1.msra.mxu0 0.0
    %2838 = vmatprep.subr.mxu0 0.0
    %2839 = vmatpush1.msra.mxu0 0.0
    %2840 = vmatprep.subr.mxu0 0.0
    %2841 = vmatpush1.msra.mxu0 0.0
    %2842 = vmatprep.subr.mxu0 0.0
    %2843 = vmatpush1.msra.mxu0 0.0
    %2844 = vmatprep.subr.mxu0 0.0
    %2845 = vmatpush1.msra.mxu0 0.0
    %2846 = vmatprep.subr.mxu0 0.0
    %2847 = vmatpush1.msra.mxu0 0.0
    %2848 = vmatprep.subr.mxu0 0.0
    %2849 = vmatpush1.msra.mxu0 0.0
    %2850 = vmatprep.subr.mxu0 0.0
    %2851 = vmatpush1.msra.mxu0 0.0
    %2852 = vmatprep.mubr.f32.mxu0 0.0
    %2853 = vmatmul.mubr.f32.gmra.mrb[0].mxu0 %v2741
    %v2854 = vpop.f32.mrb[0].mxu0
    %v2855 = vadd.f32 %v2662, %v2854
    %v2856 = vpop.f32.mrb[0].mxu0
    %2857 = vmatprep.mubr.f32.mxu0 0.0
    %2858 = vmatmul.mubr.f32.gmra.mrb[0].mxu0 %v2744
    %v2859 = vpop.f32.mrb[0].mxu0
    %v2860 = vadd.f32 %v2667, %v2859
    %v2861 = vpop.f32.mrb[0].mxu0
    %2862 = vmatprep.mubr.f32.mxu0 0.0
    %2863 = vmatmul.mubr.f32.gmra.mrb[0].mxu0 %v2747
    %v2864 = vpop.f32.mrb[0].mxu0
    %v2865 = vadd.f32 %v2672, %v2864
    %v2866 = vpop.f32.mrb[0].mxu0
    %2867 = vmatprep.mubr.f32.mxu0 0.0
    %2868 = vmatmul.mubr.f32.gmra.mrb[0].mxu0 %v2750
    %v2869 = vpop.f32.mrb[0].mxu0
    %v2870 = vadd.f32 %v2677, %v2869
    %v2871 = vpop.f32.mrb[0].mxu0
    %2872 = vmatprep.mubr.f32.mxu0 0.0
    %2873 = vmatmul.mubr.f32.gmra.mrb[0].mxu0 %v2753
    %v2874 = vpop.f32.mrb[0].mxu0
    %v2875 = vadd.f32 %v2682, %v2874
    %v2876 = vpop.f32.mrb[0].mxu0
    %2877 = vmatprep.mubr.f32.mxu0 0.0
    %2878 = vmatmul.mubr.f32.gmra.mrb[0].mxu0 %v2756
    %v2879 = vpop.f32.mrb[0].mxu0
    %v2880 = vadd.f32 %v2687, %v2879
    %v2881 = vpop.f32.mrb[0].mxu0
    %2882 = vmatprep.mubr.f32.mxu0 0.0
    %2883 = vmatmul.mubr.f32.gmra.mrb[0].mxu0 %v2759
    %v2884 = vpop.f32.mrb[0].mxu0
    %v2885 = vadd.f32 %v2692, %v2884
    %v2886 = vpop.f32.mrb[0].mxu0
    %2887 = vmatprep.mubr.f32.mxu0 0.0
    %2888 = vmatmul.mubr.f32.gmra.mrb[0].mxu0 %v2762
    %v2889 = vpop.f32.mrb[0].mxu0
    %v2890 = vadd.f32 %v2697, %v2889
    %v2891 = vpop.f32.mrb[0].mxu0
    %2892 = vmatprep.mubr.f32.mxu0 0.0
    %2893 = vmatmul.mubr.f32.gmra.mrb[0].mxu0 %v2765
    %v2894 = vpop.f32.mrb[0].mxu0
    %v2895 = vadd.f32 %v2702, %v2894
    %v2896 = vpop.f32.mrb[0].mxu0
    %2897 = vmatprep.mubr.f32.mxu0 0.0
    %2898 = vmatmul.mubr.f32.gmra.mrb[0].mxu0 %v2768
    %v2899 = vpop.f32.mrb[0].mxu0
    %v2900 = vadd.f32 %v2707, %v2899
    %v2901 = vpop.f32.mrb[0].mxu0
    %2902 = vmatprep.mubr.f32.mxu0 0.0
    %2903 = vmatmul.mubr.f32.gmra.mrb[0].mxu0 %v2771
    %v2904 = vpop.f32.mrb[0].mxu0
    %v2905 = vadd.f32 %v2712, %v2904
    %v2906 = vpop.f32.mrb[0].mxu0
    %2907 = vmatprep.mubr.f32.mxu0 0.0
    %2908 = vmatmul.mubr.f32.gmra.mrb[0].mxu0 %v2774
    %v2909 = vpop.f32.mrb[0].mxu0
    %v2910 = vadd.f32 %v2717, %v2909
    %v2911 = vpop.f32.mrb[0].mxu0
    %2912 = vmatprep.mubr.f32.mxu0 0.0
    %2913 = vmatmul.mubr.f32.gmra.mrb[0].mxu0 %v2777
    %v2914 = vpop.f32.mrb[0].mxu0
    %v2915 = vadd.f32 %v2722, %v2914
    %v2916 = vpop.f32.mrb[0].mxu0
    %2917 = vmatprep.mubr.f32.mxu0 0.0
    %2918 = vmatmul.mubr.f32.gmra.mrb[0].mxu0 %v2780
    %v2919 = vpop.f32.mrb[0].mxu0
    %v2920 = vadd.f32 %v2727, %v2919
    %v2921 = vpop.f32.mrb[0].mxu0
    %2922 = vmatprep.mubr.f32.mxu0 0.0
    %2923 = vmatmul.mubr.f32.gmra.mrb[0].mxu0 %v2783
    %v2924 = vpop.f32.mrb[0].mxu0
    %v2925 = vadd.f32 %v2732, %v2924
    %v2926 = vpop.f32.mrb[0].mxu0
    %2927 = vmatprep.mubr.f32.mxu0 0.0
    %2928 = vmatmul.mubr.f32.gmra.mrb[0].mxu0 %v2786
    %v2929 = vpop.f32.mrb[0].mxu0
    %v2930 = vadd.f32 %v2737, %v2929
    %v2931 = vpop.f32.mrb[0].mxu0
    %2932 = vdwg.mxu0
    %v2934 = vsel %vm1014, %v2145, 0
    %v2937 = vsel %vm1014, %v2150, 0
    %v2940 = vsel %vm1014, %v2155, 0
    %v2943 = vsel %vm1014, %v2160, 0
    %v2946 = vsel %vm1014, %v2165, 0
    %v2949 = vsel %vm1014, %v2170, 0
    %v2952 = vsel %vm1014, %v2175, 0
    %v2955 = vsel %vm1014, %v2180, 0
    %v2958 = vsel %vm1014, %v2185, 0
    %v2961 = vsel %vm1014, %v2190, 0
    %v2964 = vsel %vm1014, %v2195, 0
    %v2967 = vsel %vm1014, %v2200, 0
    %v2970 = vsel %vm1014, %v2205, 0
    %v2973 = vsel %vm1014, %v2210, 0
    %v2976 = vsel %vm1014, %v2215, 0
    %v2979 = vsel %vm1014, %v2220, 0
    %2981 = vmatprep.subr.mxu0 0.0
    %2982 = vmatpush1.msra.mxu0 %v245
    %2983 = vmatprep.subr.mxu0 0.0
    %2984 = vmatpush1.msra.mxu0 %v246
    %2985 = vmatprep.subr.mxu0 0.0
    %2986 = vmatpush1.msra.mxu0 %v1004
    %2987 = vmatprep.subr.mxu0 0.0
    %2988 = vmatpush1.msra.mxu0 %v1005
    %2989 = vmatprep.subr.mxu0 0.0
    %2990 = vmatpush1.msra.mxu0 %v2058
    %2991 = vmatprep.subr.mxu0 0.0
    %2992 = vmatpush1.msra.mxu0 %v2059
    %2993 = vmatprep.subr.mxu0 0.0
    %2994 = vmatpush1.msra.mxu0 %v2060
    %2995 = vmatprep.subr.mxu0 0.0
    %2996 = vmatpush1.msra.mxu0 %v2061
    %2997 = vmatprep.subr.mxu0 0.0
    %2998 = vmatpush1.msra.mxu0 0.0
    %2999 = vmatprep.subr.mxu0 0.0
    %3000 = vmatpush1.msra.mxu0 0.0
    %3001 = vmatprep.subr.mxu0 0.0
    %3002 = vmatpush1.msra.mxu0 0.0
    %3003 = vmatprep.subr.mxu0 0.0
    %3004 = vmatpush1.msra.mxu0 0.0
    %3005 = vmatprep.subr.mxu0 0.0
    %3006 = vmatpush1.msra.mxu0 0.0
    %3007 = vmatprep.subr.mxu0 0.0
    %3008 = vmatpush1.msra.mxu0 0.0
    %3009 = vmatprep.subr.mxu0 0.0
    %3010 = vmatpush1.msra.mxu0 0.0
    %3011 = vmatprep.subr.mxu0 0.0
    %3012 = vmatpush1.msra.mxu0 0.0
    %3013 = vmatprep.subr.mxu0 0.0
    %3014 = vmatpush1.msra.mxu0 0.0
    %3015 = vmatprep.subr.mxu0 0.0
    %3016 = vmatpush1.msra.mxu0 0.0
    %3017 = vmatprep.subr.mxu0 0.0
    %3018 = vmatpush1.msra.mxu0 0.0
    %3019 = vmatprep.subr.mxu0 0.0
    %3020 = vmatpush1.msra.mxu0 0.0
    %3021 = vmatprep.subr.mxu0 0.0
    %3022 = vmatpush1.msra.mxu0 0.0
    %3023 = vmatprep.subr.mxu0 0.0
    %3024 = vmatpush1.msra.mxu0 0.0
    %3025 = vmatprep.subr.mxu0 0.0
    %3026 = vmatpush1.msra.mxu0 0.0
    %3027 = vmatprep.subr.mxu0 0.0
    %3028 = vmatpush1.msra.mxu0 0.0
    %3029 = vmatprep.subr.mxu0 0.0
    %3030 = vmatpush1.msra.mxu0 0.0
    %3031 = vmatprep.subr.mxu0 0.0
    %3032 = vmatpush1.msra.mxu0 0.0
    %3033 = vmatprep.subr.mxu0 0.0
    %3034 = vmatpush1.msra.mxu0 0.0
    %3035 = vmatprep.subr.mxu0 0.0
    %3036 = vmatpush1.msra.mxu0 0.0
    %3037 = vmatprep.subr.mxu0 0.0
    %3038 = vmatpush1.msra.mxu0 0.0
    %3039 = vmatprep.subr.mxu0 0.0
    %3040 = vmatpush1.msra.mxu0 0.0
    %3041 = vmatprep.subr.mxu0 0.0
    %3042 = vmatpush1.msra.mxu0 0.0
    %3043 = vmatprep.subr.mxu0 0.0
    %3044 = vmatpush1.msra.mxu0 0.0
    %3045 = vmatprep.mubr.f32.mxu0 0.0
    %3046 = vmatmul.mubr.f32.gmra.mrb[0].mxu0 %v2934
    %v3047 = vpop.f32.mrb[0].mxu0
    %v3048 = vadd.f32 0.0, %v3047
    %v3049 = vpop.f32.mrb[0].mxu0
    %3050 = vmatprep.mubr.f32.mxu0 0.0
    %3051 = vmatmul.mubr.f32.gmra.mrb[0].mxu0 %v2937
    %v3052 = vpop.f32.mrb[0].mxu0
    %v3053 = vadd.f32 0.0, %v3052
    %v3054 = vpop.f32.mrb[0].mxu0
    %3055 = vmatprep.mubr.f32.mxu0 0.0
    %3056 = vmatmul.mubr.f32.gmra.mrb[0].mxu0 %v2940
    %v3057 = vpop.f32.mrb[0].mxu0
    %v3058 = vadd.f32 0.0, %v3057
    %v3059 = vpop.f32.mrb[0].mxu0
    %3060 = vmatprep.mubr.f32.mxu0 0.0
    %3061 = vmatmul.mubr.f32.gmra.mrb[0].mxu0 %v2943
    %v3062 = vpop.f32.mrb[0].mxu0
    %v3063 = vadd.f32 0.0, %v3062
    %v3064 = vpop.f32.mrb[0].mxu0
    %3065 = vmatprep.mubr.f32.mxu0 0.0
    %3066 = vmatmul.mubr.f32.gmra.mrb[0].mxu0 %v2946
    %v3067 = vpop.f32.mrb[0].mxu0
    %v3068 = vadd.f32 0.0, %v3067
    %v3069 = vpop.f32.mrb[0].mxu0
    %3070 = vmatprep.mubr.f32.mxu0 0.0
    %3071 = vmatmul.mubr.f32.gmra.mrb[0].mxu0 %v2949
    %v3072 = vpop.f32.mrb[0].mxu0
    %v3073 = vadd.f32 0.0, %v3072
    %v3074 = vpop.f32.mrb[0].mxu0
    %3075 = vmatprep.mubr.f32.mxu0 0.0
    %3076 = vmatmul.mubr.f32.gmra.mrb[0].mxu0 %v2952
    %v3077 = vpop.f32.mrb[0].mxu0
    %v3078 = vadd.f32 0.0, %v3077
    %v3079 = vpop.f32.mrb[0].mxu0
    %3080 = vmatprep.mubr.f32.mxu0 0.0
    %3081 = vmatmul.mubr.f32.gmra.mrb[0].mxu0 %v2955
    %v3082 = vpop.f32.mrb[0].mxu0
    %v3083 = vadd.f32 0.0, %v3082
    %v3084 = vpop.f32.mrb[0].mxu0
    %3085 = vmatprep.mubr.f32.mxu0 0.0
    %3086 = vmatmul.mubr.f32.gmra.mrb[0].mxu0 %v2958
    %v3087 = vpop.f32.mrb[0].mxu0
    %v3088 = vadd.f32 0.0, %v3087
    %v3089 = vpop.f32.mrb[0].mxu0
    %3090 = vmatprep.mubr.f32.mxu0 0.0
    %3091 = vmatmul.mubr.f32.gmra.mrb[0].mxu0 %v2961
    %v3092 = vpop.f32.mrb[0].mxu0
    %v3093 = vadd.f32 0.0, %v3092
    %v3094 = vpop.f32.mrb[0].mxu0
    %3095 = vmatprep.mubr.f32.mxu0 0.0
    %3096 = vmatmul.mubr.f32.gmra.mrb[0].mxu0 %v2964
    %v3097 = vpop.f32.mrb[0].mxu0
    %v3098 = vadd.f32 0.0, %v3097
    %v3099 = vpop.f32.mrb[0].mxu0
    %3100 = vmatprep.mubr.f32.mxu0 0.0
    %3101 = vmatmul.mubr.f32.gmra.mrb[0].mxu0 %v2967
    %v3102 = vpop.f32.mrb[0].mxu0
    %v3103 = vadd.f32 0.0, %v3102
    %v3104 = vpop.f32.mrb[0].mxu0
    %3105 = vmatprep.mubr.f32.mxu0 0.0
    %3106 = vmatmul.mubr.f32.gmra.mrb[0].mxu0 %v2970
    %v3107 = vpop.f32.mrb[0].mxu0
    %v3108 = vadd.f32 0.0, %v3107
    %v3109 = vpop.f32.mrb[0].mxu0
    %3110 = vmatprep.mubr.f32.mxu0 0.0
    %3111 = vmatmul.mubr.f32.gmra.mrb[0].mxu0 %v2973
    %v3112 = vpop.f32.mrb[0].mxu0
    %v3113 = vadd.f32 0.0, %v3112
    %v3114 = vpop.f32.mrb[0].mxu0
    %3115 = vmatprep.mubr.f32.mxu0 0.0
    %3116 = vmatmul.mubr.f32.gmra.mrb[0].mxu0 %v2976
    %v3117 = vpop.f32.mrb[0].mxu0
    %v3118 = vadd.f32 0.0, %v3117
    %v3119 = vpop.f32.mrb[0].mxu0
    %3120 = vmatprep.mubr.f32.mxu0 0.0
    %3121 = vmatmul.mubr.f32.gmra.mrb[0].mxu0 %v2979
    %v3122 = vpop.f32.mrb[0].mxu0
    %v3123 = vadd.f32 0.0, %v3122
    %v3124 = vpop.f32.mrb[0].mxu0
    %3125 = vdwg.mxu0
    %v3126 = vadd.f32 %v2855, %v3048
    %v3127 = vadd.f32 %v2860, %v3053
    %v3128 = vadd.f32 %v2865, %v3058
    %v3129 = vadd.f32 %v2870, %v3063
    %v3130 = vadd.f32 %v2875, %v3068
    %v3131 = vadd.f32 %v2880, %v3073
    %v3132 = vadd.f32 %v2885, %v3078
    %v3133 = vadd.f32 %v2890, %v3083
    %v3134 = vadd.f32 %v2895, %v3088
    %v3135 = vadd.f32 %v2900, %v3093
    %v3136 = vadd.f32 %v2905, %v3098
    %v3137 = vadd.f32 %v2910, %v3103
    %v3138 = vadd.f32 %v2915, %v3108
    %v3139 = vadd.f32 %v2920, %v3113
    %v3140 = vadd.f32 %v2925, %v3118
    %v3141 = vadd.f32 %v2930, %v3123
    %v3142 = vld [vmem:[%s10] sm:$0xff]
    %v3143 = vld [vmem:[%s10 + $0x8] sm:$0xff]
    %v3144 = vld [vmem:[%s10 + $0x10] sm:$0xff]
    %v3145 = vld [vmem:[%s10 + $0x18] sm:$0xff]
    %v3146 = vld [vmem:[%s10 + $0x20] sm:$0xff]
    %v3147 = vld [vmem:[%s10 + $0x28] sm:$0xff]
    %v3148 = vld [vmem:[%s10 + $0x30] sm:$0xff]
    %v3149 = vld [vmem:[%s10 + $0x38] sm:$0xff]
    %v3150 = vld [vmem:[%s10 + $0x40] sm:$0xff]
    %v3151 = vld [vmem:[%s10 + $0x48] sm:$0xff]
    %v3152 = vld [vmem:[%s10 + $0x50] sm:$0xff]
    %v3153 = vld [vmem:[%s10 + $0x58] sm:$0xff]
    %v3154 = vld [vmem:[%s10 + $0x60] sm:$0xff]
    %v3155 = vld [vmem:[%s10 + $0x68] sm:$0xff]
    %v3156 = vld [vmem:[%s10 + $0x70] sm:$0xff]
    %v3157 = vld [vmem:[%s10 + $0x78] sm:$0xff]
    %3159 = vset.pattern.permute.xlu0 0
    %3160 = vperm.xlu0 %3159, %v3142
    %v3161 = vpop.permute.xlu0 %3160
    %3164 = vset.pattern.permute.xlu0 0
    %3165 = vperm.xlu0 %3164, %v3143
    %v3166 = vpop.permute.xlu0 %3165
    %3169 = vset.pattern.permute.xlu0 0
    %3170 = vperm.xlu0 %3169, %v3144
    %v3171 = vpop.permute.xlu0 %3170
    %3174 = vset.pattern.permute.xlu0 0
    %3175 = vperm.xlu0 %3174, %v3145
    %v3176 = vpop.permute.xlu0 %3175
    %3179 = vset.pattern.permute.xlu0 0
    %3180 = vperm.xlu0 %3179, %v3146
    %v3181 = vpop.permute.xlu0 %3180
    %3184 = vset.pattern.permute.xlu0 0
    %3185 = vperm.xlu0 %3184, %v3147
    %v3186 = vpop.permute.xlu0 %3185
    %3189 = vset.pattern.permute.xlu0 0
    %3190 = vperm.xlu0 %3189, %v3148
    %v3191 = vpop.permute.xlu0 %3190
    %3194 = vset.pattern.permute.xlu0 0
    %3195 = vperm.xlu0 %3194, %v3149
    %v3196 = vpop.permute.xlu0 %3195
    %3199 = vset.pattern.permute.xlu0 0
    %3200 = vperm.xlu0 %3199, %v3150
    %v3201 = vpop.permute.xlu0 %3200
    %3204 = vset.pattern.permute.xlu0 0
    %3205 = vperm.xlu0 %3204, %v3151
    %v3206 = vpop.permute.xlu0 %3205
    %3209 = vset.pattern.permute.xlu0 0
    %3210 = vperm.xlu0 %3209, %v3152
    %v3211 = vpop.permute.xlu0 %3210
    %3214 = vset.pattern.permute.xlu0 0
    %3215 = vperm.xlu0 %3214, %v3153
    %v3216 = vpop.permute.xlu0 %3215
    %3219 = vset.pattern.permute.xlu0 0
    %3220 = vperm.xlu0 %3219, %v3154
    %v3221 = vpop.permute.xlu0 %3220
    %3224 = vset.pattern.permute.xlu0 0
    %3225 = vperm.xlu0 %3224, %v3155
    %v3226 = vpop.permute.xlu0 %3225
    %3229 = vset.pattern.permute.xlu0 0
    %3230 = vperm.xlu0 %3229, %v3156
    %v3231 = vpop.permute.xlu0 %3230
    %3234 = vset.pattern.permute.xlu0 0
    %3235 = vperm.xlu0 %3234, %v3157
    %v3236 = vpop.permute.xlu0 %3235
    %v3238 = vadd.f32 %v3126, %v3161
    %v3239 = vadd.f32 %v3127, %v3166
    %v3240 = vadd.f32 %v3128, %v3171
    %v3241 = vadd.f32 %v3129, %v3176
    %v3242 = vadd.f32 %v3130, %v3181
    %v3243 = vadd.f32 %v3131, %v3186
    %v3244 = vadd.f32 %v3132, %v3191
    %v3245 = vadd.f32 %v3133, %v3196
    %v3246 = vadd.f32 %v3134, %v3201
    %v3247 = vadd.f32 %v3135, %v3206
    %v3248 = vadd.f32 %v3136, %v3211
    %v3249 = vadd.f32 %v3137, %v3216
    %v3250 = vadd.f32 %v3138, %v3221
    %v3251 = vadd.f32 %v3139, %v3226
    %v3252 = vadd.f32 %v3140, %v3231
    %v3253 = vadd.f32 %v3141, %v3236
    %v3254 = vmax.f32 %v3238, 0.0
    %v3255 = vmax.f32 %v3239, 0.0
    %v3256 = vmax.f32 %v3240, 0.0
    %v3257 = vmax.f32 %v3241, 0.0
    %v3258 = vmax.f32 %v3242, 0.0
    %v3259 = vmax.f32 %v3243, 0.0
    %v3260 = vmax.f32 %v3244, 0.0
    %v3261 = vmax.f32 %v3245, 0.0
    %v3262 = vmax.f32 %v3246, 0.0
    %v3263 = vmax.f32 %v3247, 0.0
    %v3264 = vmax.f32 %v3248, 0.0
    %v3265 = vmax.f32 %v3249, 0.0
    %v3266 = vmax.f32 %v3250, 0.0
    %v3267 = vmax.f32 %v3251, 0.0
    %v3268 = vmax.f32 %v3252, 0.0
    %v3269 = vmax.f32 %v3253, 0.0
    %v3270 = vadd.f32 %v2026, %v2042
    %v3271 = vadd.f32 %v2027, %v2043
    %v3272 = vadd.f32 %v2028, %v2044
    %v3273 = vadd.f32 %v2029, %v2045
    %v3275 = vsel %vm1014, %v1972, 0
    %v3278 = vsel %vm1014, %v1977, 0
    %v3281 = vsel %vm1014, %v1982, 0
    %v3284 = vsel %vm1014, %v1987, 0
    %v3287 = vsel %vm1014, %v1992, 0
    %v3290 = vsel %vm1014, %v1997, 0
    %v3293 = vsel %vm1014, %v2002, 0
    %v3296 = vsel %vm1014, %v2007, 0
    %v3299 = vsel %vm1014, %v1871, 0
    %v3302 = vsel %vm1014, %v1872, 0
    %v3305 = vsel %vm1014, %v1873, 0
    %v3308 = vsel %vm1014, %v1874, 0
    %v3311 = vsel %vm1014, %v1875, 0
    %v3314 = vsel %vm1014, %v1876, 0
    %v3317 = vsel %vm1014, %v1877, 0
    %v3320 = vsel %vm1014, %v1878, 0
    %3322 = vmatprep.subr.mxu0 0.0
    %3323 = vmatpush1.msra.mxu0 %v881
    %3324 = vmatprep.subr.mxu0 0.0
    %3325 = vmatpush1.msra.mxu0 %v882
    %3326 = vmatprep.subr.mxu0 0.0
    %3327 = vmatpush1.msra.mxu0 %v1879
    %3328 = vmatprep.subr.mxu0 0.0
    %3329 = vmatpush1.msra.mxu0 %v1880
    %3330 = vmatprep.subr.mxu0 0.0
    %3331 = vmatpush1.msra.mxu0 %v3270
    %3332 = vmatprep.subr.mxu0 0.0
    %3333 = vmatpush1.msra.mxu0 %v3271
    %3334 = vmatprep.subr.mxu0 0.0
    %3335 = vmatpush1.msra.mxu0 %v3272
    %3336 = vmatprep.subr.mxu0 0.0
    %3337 = vmatpush1.msra.mxu0 %v3273
    %3338 = vmatprep.subr.mxu0 0.0
    %3339 = vmatpush1.msra.mxu0 0.0
    %3340 = vmatprep.subr.mxu0 0.0
    %3341 = vmatpush1.msra.mxu0 0.0
    %3342 = vmatprep.subr.mxu0 0.0
    %3343 = vmatpush1.msra.mxu0 0.0
    %3344 = vmatprep.subr.mxu0 0.0
    %3345 = vmatpush1.msra.mxu0 0.0
    %3346 = vmatprep.subr.mxu0 0.0
    %3347 = vmatpush1.msra.mxu0 0.0
    %3348 = vmatprep.subr.mxu0 0.0
    %3349 = vmatpush1.msra.mxu0 0.0
    %3350 = vmatprep.subr.mxu0 0.0
    %3351 = vmatpush1.msra.mxu0 0.0
    %3352 = vmatprep.subr.mxu0 0.0
    %3353 = vmatpush1.msra.mxu0 0.0
    %3354 = vmatprep.subr.mxu0 0.0
    %3355 = vmatpush1.msra.mxu0 0.0
    %3356 = vmatprep.subr.mxu0 0.0
    %3357 = vmatpush1.msra.mxu0 0.0
    %3358 = vmatprep.subr.mxu0 0.0
    %3359 = vmatpush1.msra.mxu0 0.0
    %3360 = vmatprep.subr.mxu0 0.0
    %3361 = vmatpush1.msra.mxu0 0.0
    %3362 = vmatprep.subr.mxu0 0.0
    %3363 = vmatpush1.msra.mxu0 0.0
    %3364 = vmatprep.subr.mxu0 0.0
    %3365 = vmatpush1.msra.mxu0 0.0
    %3366 = vmatprep.subr.mxu0 0.0
    %3367 = vmatpush1.msra.mxu0 0.0
    %3368 = vmatprep.subr.mxu0 0.0
    %3369 = vmatpush1.msra.mxu0 0.0
    %3370 = vmatprep.subr.mxu0 0.0
    %3371 = vmatpush1.msra.mxu0 0.0
    %3372 = vmatprep.subr.mxu0 0.0
    %3373 = vmatpush1.msra.mxu0 0.0
    %3374 = vmatprep.subr.mxu0 0.0
    %3375 = vmatpush1.msra.mxu0 0.0
    %3376 = vmatprep.subr.mxu0 0.0
    %3377 = vmatpush1.msra.mxu0 0.0
    %3378 = vmatprep.subr.mxu0 0.0
    %3379 = vmatpush1.msra.mxu0 0.0
    %3380 = vmatprep.subr.mxu0 0.0
    %3381 = vmatpush1.msra.mxu0 0.0
    %3382 = vmatprep.subr.mxu0 0.0
    %3383 = vmatpush1.msra.mxu0 0.0
    %3384 = vmatprep.subr.mxu0 0.0
    %3385 = vmatpush1.msra.mxu0 0.0
    %3386 = vmatprep.mubr.f32.mxu0 0.0
    %3387 = vmatmul.mubr.f32.gmra.mrb[0].mxu0 %v3275
    %v3388 = vpop.f32.mrb[0].mxu0
    %v3389 = vadd.f32 0.0, %v3388
    %v3390 = vpop.f32.mrb[0].mxu0
    %3391 = vmatprep.mubr.f32.mxu0 0.0
    %3392 = vmatmul.mubr.f32.gmra.mrb[0].mxu0 %v3278
    %v3393 = vpop.f32.mrb[0].mxu0
    %v3394 = vadd.f32 0.0, %v3393
    %v3395 = vpop.f32.mrb[0].mxu0
    %3396 = vmatprep.mubr.f32.mxu0 0.0
    %3397 = vmatmul.mubr.f32.gmra.mrb[0].mxu0 %v3281
    %v3398 = vpop.f32.mrb[0].mxu0
    %v3399 = vadd.f32 0.0, %v3398
    %v3400 = vpop.f32.mrb[0].mxu0
    %3401 = vmatprep.mubr.f32.mxu0 0.0
    %3402 = vmatmul.mubr.f32.gmra.mrb[0].mxu0 %v3284
    %v3403 = vpop.f32.mrb[0].mxu0
    %v3404 = vadd.f32 0.0, %v3403
    %v3405 = vpop.f32.mrb[0].mxu0
    %3406 = vmatprep.mubr.f32.mxu0 0.0
    %3407 = vmatmul.mubr.f32.gmra.mrb[0].mxu0 %v3287
    %v3408 = vpop.f32.mrb[0].mxu0
    %v3409 = vadd.f32 0.0, %v3408
    %v3410 = vpop.f32.mrb[0].mxu0
    %3411 = vmatprep.mubr.f32.mxu0 0.0
    %3412 = vmatmul.mubr.f32.gmra.mrb[0].mxu0 %v3290
    %v3413 = vpop.f32.mrb[0].mxu0
    %v3414 = vadd.f32 0.0, %v3413
    %v3415 = vpop.f32.mrb[0].mxu0
    %3416 = vmatprep.mubr.f32.mxu0 0.0
    %3417 = vmatmul.mubr.f32.gmra.mrb[0].mxu0 %v3293
    %v3418 = vpop.f32.mrb[0].mxu0
    %v3419 = vadd.f32 0.0, %v3418
    %v3420 = vpop.f32.mrb[0].mxu0
    %3421 = vmatprep.mubr.f32.mxu0 0.0
    %3422 = vmatmul.mubr.f32.gmra.mrb[0].mxu0 %v3296
    %v3423 = vpop.f32.mrb[0].mxu0
    %v3424 = vadd.f32 0.0, %v3423
    %v3425 = vpop.f32.mrb[0].mxu0
    %3426 = vmatprep.mubr.f32.mxu0 0.0
    %3427 = vmatmul.mubr.f32.gmra.mrb[0].mxu0 %v3299
    %v3428 = vpop.f32.mrb[0].mxu0
    %v3429 = vadd.f32 0.0, %v3428
    %v3430 = vpop.f32.mrb[0].mxu0
    %3431 = vmatprep.mubr.f32.mxu0 0.0
    %3432 = vmatmul.mubr.f32.gmra.mrb[0].mxu0 %v3302
    %v3433 = vpop.f32.mrb[0].mxu0
    %v3434 = vadd.f32 0.0, %v3433
    %v3435 = vpop.f32.mrb[0].mxu0
    %3436 = vmatprep.mubr.f32.mxu0 0.0
    %3437 = vmatmul.mubr.f32.gmra.mrb[0].mxu0 %v3305
    %v3438 = vpop.f32.mrb[0].mxu0
    %v3439 = vadd.f32 0.0, %v3438
    %v3440 = vpop.f32.mrb[0].mxu0
    %3441 = vmatprep.mubr.f32.mxu0 0.0
    %3442 = vmatmul.mubr.f32.gmra.mrb[0].mxu0 %v3308
    %v3443 = vpop.f32.mrb[0].mxu0
    %v3444 = vadd.f32 0.0, %v3443
    %v3445 = vpop.f32.mrb[0].mxu0
    %3446 = vmatprep.mubr.f32.mxu0 0.0
    %3447 = vmatmul.mubr.f32.gmra.mrb[0].mxu0 %v3311
    %v3448 = vpop.f32.mrb[0].mxu0
    %v3449 = vadd.f32 0.0, %v3448
    %v3450 = vpop.f32.mrb[0].mxu0
    %3451 = vmatprep.mubr.f32.mxu0 0.0
    %3452 = vmatmul.mubr.f32.gmra.mrb[0].mxu0 %v3314
    %v3453 = vpop.f32.mrb[0].mxu0
    %v3454 = vadd.f32 0.0, %v3453
    %v3455 = vpop.f32.mrb[0].mxu0
    %3456 = vmatprep.mubr.f32.mxu0 0.0
    %3457 = vmatmul.mubr.f32.gmra.mrb[0].mxu0 %v3317
    %v3458 = vpop.f32.mrb[0].mxu0
    %v3459 = vadd.f32 0.0, %v3458
    %v3460 = vpop.f32.mrb[0].mxu0
    %3461 = vmatprep.mubr.f32.mxu0 0.0
    %3462 = vmatmul.mubr.f32.gmra.mrb[0].mxu0 %v3320
    %v3463 = vpop.f32.mrb[0].mxu0
    %v3464 = vadd.f32 0.0, %v3463
    %v3465 = vpop.f32.mrb[0].mxu0
    %3466 = vdwg.mxu0
    %v3467 = vld [vmem:[%s11] sm:$0xff]
    %v3468 = vld [vmem:[%s11 + $0x8] sm:$0xff]
    %v3469 = vld [vmem:[#allocation2] sm:$0x1]
    %v3471 = vlaneseq
    %v3472 = vshrl.u32 %v3471, 7
    %v3473 = vsub.s32 0, %v3472
    %v3474 = vrot.slane %v3469, %v3473
    %3475 = vset.pattern.permute.xlu0 0
    %3476 = vperm.xlu0 %3475, %v3474
    %v3477 = vpop.permute.xlu0 %3476
    %3479 = vmatprep.subr.mxu0 0.0
    %3480 = vmatpush1.msra.mxu0 %v3389
    %3481 = vmatprep.subr.mxu0 0.0
    %3482 = vmatpush1.msra.mxu0 %v3394
    %3483 = vmatprep.subr.mxu0 0.0
    %3484 = vmatpush1.msra.mxu0 %v3399
    %3485 = vmatprep.subr.mxu0 0.0
    %3486 = vmatpush1.msra.mxu0 %v3404
    %3487 = vmatprep.subr.mxu0 0.0
    %3488 = vmatpush1.msra.mxu0 %v3409
    %3489 = vmatprep.subr.mxu0 0.0
    %3490 = vmatpush1.msra.mxu0 %v3414
    %3491 = vmatprep.subr.mxu0 0.0
    %3492 = vmatpush1.msra.mxu0 %v3419
    %3493 = vmatprep.subr.mxu0 0.0
    %3494 = vmatpush1.msra.mxu0 %v3424
    %3495 = vmatprep.subr.mxu0 0.0
    %3496 = vmatpush1.msra.mxu0 %v3429
    %3497 = vmatprep.subr.mxu0 0.0
    %3498 = vmatpush1.msra.mxu0 %v3434
    %3499 = vmatprep.subr.mxu0 0.0
    %3500 = vmatpush1.msra.mxu0 %v3439
    %3501 = vmatprep.subr.mxu0 0.0
    %3502 = vmatpush1.msra.mxu0 %v3444
    %3503 = vmatprep.subr.mxu0 0.0
    %3504 = vmatpush1.msra.mxu0 %v3449
    %3505 = vmatprep.subr.mxu0 0.0
    %3506 = vmatpush1.msra.mxu0 %v3454
    %3507 = vmatprep.subr.mxu0 0.0
    %3508 = vmatpush1.msra.mxu0 %v3459
    %3509 = vmatprep.subr.mxu0 0.0
    %3510 = vmatpush1.msra.mxu0 %v3464
    %3511 = vmatprep.subr.mxu0 0.0
    %3512 = vmatpush1.msra.mxu0 %v3254
    %3513 = vmatprep.subr.mxu0 0.0
    %3514 = vmatpush1.msra.mxu0 %v3255
    %3515 = vmatprep.subr.mxu0 0.0
    %3516 = vmatpush1.msra.mxu0 %v3256
    %3517 = vmatprep.subr.mxu0 0.0
    %3518 = vmatpush1.msra.mxu0 %v3257
    %3519 = vmatprep.subr.mxu0 0.0
    %3520 = vmatpush1.msra.mxu0 %v3258
    %3521 = vmatprep.subr.mxu0 0.0
    %3522 = vmatpush1.msra.mxu0 %v3259
    %3523 = vmatprep.subr.mxu0 0.0
    %3524 = vmatpush1.msra.mxu0 %v3260
    %3525 = vmatprep.subr.mxu0 0.0
    %3526 = vmatpush1.msra.mxu0 %v3261
    %3527 = vmatprep.subr.mxu0 0.0
    %3528 = vmatpush1.msra.mxu0 %v3262
    %3529 = vmatprep.subr.mxu0 0.0
    %3530 = vmatpush1.msra.mxu0 %v3263
    %3531 = vmatprep.subr.mxu0 0.0
    %3532 = vmatpush1.msra.mxu0 %v3264
    %3533 = vmatprep.subr.mxu0 0.0
    %3534 = vmatpush1.msra.mxu0 %v3265
    %3535 = vmatprep.subr.mxu0 0.0
    %3536 = vmatpush1.msra.mxu0 %v3266
    %3537 = vmatprep.subr.mxu0 0.0
    %3538 = vmatpush1.msra.mxu0 %v3267
    %3539 = vmatprep.subr.mxu0 0.0
    %3540 = vmatpush1.msra.mxu0 %v3268
    %3541 = vmatprep.subr.mxu0 0.0
    %3542 = vmatpush1.msra.mxu0 %v3269
    %3543 = vmatprep.mubr.f32.mxu0 %v3468
    %3544 = vmatmul.mubr.f32.gmra.mrb[0].mxu0 %v3467
    %v3545 = vpop.f32.mrb[0].mxu0
    %v3546 = vadd.f32 %v3477, %v3545
    %v3547 = vpop.f32.mrb[0].mxu0
    %3548 = vdwg.mxu0
    %v3549 = vsub.f32 0.0, %v3546
    %v3550 = vmul.f32 %v3549, 1.442695
    %v3551 = vpow.pop %v3550
    %v3552 = vadd.f32 %v3551, 1.0
    %v3553 = vrcp.pop %v3552
    %v3554 = vmul.f32 1.0, %v3553
    %3555 = vst [vmem:[#allocation6] sm:$0xff] %v3554
    // Predicated region
    $region58: #{tpu_custom_call.1} parent=1 // pred_check
      _
    $region59: #{tpu_custom_call.1} parent=1 // pred_check_branch
      %3557 = sbr.rel (0) target = $region61
    $region60: #{tpu_custom_call.1} parent=1 // pred_region
      %s3559 = ssub.s32 128, 128
      %3560 = vsyncadd [#allocation5], %s3559
      %s3562 = sshll.u32 [#allocation6], 4
      %s3563 = int_to_ptr.vmem [resolvable:$true] %s3562
      %3565 = dma.vmem_to_hbm [thread:$0]  %s3563, 128, %s13, [#allocation5]
    $region61: #{tpu_custom_call.1} parent=1 // pred_fallthru
      _
    // Predicated region
    $region62: #{tpu_custom_call.1} parent=1 // pred_check
      _
    $region63: #{tpu_custom_call.1} parent=1 // pred_check_branch
      %3567 = sbr.rel (0) target = $region65
    $region64: #{tpu_custom_call.1} parent=1 // pred_region
      %3568 = dma.done [#allocation5], 128
    $region65: #{tpu_custom_call.1} parent=1 // pred_fallthru
      _
    %3569 = vsyncpa [#allocation4], 1
    %3570 = vsyncpa [#allocation5], 1

</llo_original>
